<compile_context>
chip_gen: v7x
topology: tpu7x:2x2x1
jax: 0.10.0
libtpu: 0.0.40
codegen_flags: <defaults>
</compile_context>

<pallas_src>
import functools

import jax
import jax.numpy as jnp
from jax.experimental import pallas as pl
from jax.experimental.pallas import tpu as pltpu

LEAKY_SLOPE = 0.01  # torch.nn.LeakyReLU default negative_slope


def _leaky(x):
    return jnp.where(x >= 0, x, LEAKY_SLOPE * x)


# ----------------- Pallas kernel 1: matmul + bias + LeakyReLU ----------------
def _matmul_bias_leaky_kernel(x_ref, w_ref, b_ref, o_ref):
    acc = jnp.dot(x_ref[...], w_ref[...], preferred_element_type=jnp.float32)
    acc = _leaky(acc + b_ref[...])          # bias (1, N) broadcast over rows
    o_ref[...] = acc.astype(o_ref.dtype)


def matmul_bias_leaky(x, w, b, *, tile_m=256, out_dtype=jnp.bfloat16):
    """y = LeakyReLU(x @ w + b).  x:(M,K), w:(K,N) bf16, b:(1,N) f32."""
    M, K = x.shape
    K2, N = w.shape
    assert K == K2
    x = x.astype(jnp.bfloat16)
    tm = M if M <= tile_m else tile_m
    assert M % tm == 0, (M, tm)
    return pl.pallas_call(
        _matmul_bias_leaky_kernel,
        out_shape=jax.ShapeDtypeStruct((M, N), out_dtype),
        grid=(M // tm,),
        in_specs=[
            pl.BlockSpec((tm, K), lambda i: (i, 0)),
            pl.BlockSpec((K, N), lambda i: (0, 0)),
            pl.BlockSpec((1, N), lambda i: (0, 0)),
        ],
        out_specs=pl.BlockSpec((tm, N), lambda i: (i, 0)),
        compiler_params=pltpu.CompilerParams(
            dimension_semantics=("parallel",)),
    )(x, w, b)


# ----------- Pallas kernel 2: fused linear1 + LeakyReLU + linear2 ------------
def _fused_mlp_kernel(x_ref, w3_ref, b3_ref, w4_ref, b4_ref, o_ref, acc_ref):
    t = pl.program_id(0)

    @pl.when(t == 0)
    def _():
        acc_ref[...] = jnp.zeros_like(acc_ref)

    # hidden tile: (M, tile_h) in f32
    h = jnp.dot(x_ref[...], w3_ref[...], preferred_element_type=jnp.float32)
    h = _leaky(h + b3_ref[...])
    # accumulate this hidden tile's contribution to the (M, 128) output
    acc_ref[...] += jnp.dot(h.astype(w4_ref.dtype), w4_ref[...],
                            preferred_element_type=jnp.float32)

    @pl.when(t == pl.num_programs(0) - 1)
    def _():
        o_ref[...] = (acc_ref[...] + b4_ref[...]).astype(o_ref.dtype)


def fused_mlp(x, w3t, b3, w4t, b4, *, tile_h=256):
    """(LeakyReLU(x @ w3t + b3)) @ w4t + b4, hidden axis streamed in tiles."""
    M, F = x.shape
    F2, Hd = w3t.shape
    assert F == F2
    Hd2, Np = w4t.shape
    assert Hd == Hd2 and Hd % tile_h == 0 and Np % 128 == 0
    x = x.astype(jnp.bfloat16)
    return pl.pallas_call(
        _fused_mlp_kernel,
        out_shape=jax.ShapeDtypeStruct((M, Np), jnp.float32),
        grid=(Hd // tile_h,),
        in_specs=[
            pl.BlockSpec((M, F), lambda t: (0, 0)),         # x (tiny, resident)
            pl.BlockSpec((F, tile_h), lambda t: (0, t)),    # w3 column tile
            pl.BlockSpec((1, tile_h), lambda t: (0, t)),    # b3 tile
            pl.BlockSpec((tile_h, Np), lambda t: (t, 0)),   # w4 row tile
            pl.BlockSpec((1, Np), lambda t: (0, 0)),        # b4
        ],
        out_specs=pl.BlockSpec((M, Np), lambda t: (0, 0)),
        scratch_shapes=[pltpu.VMEM((M, Np), jnp.float32)],
        compiler_params=pltpu.CompilerParams(
            dimension_semantics=("arbitrary",)),
    )(x, w3t, b3, w4t, b4)


# ------------------------------- JAX glue ------------------------------------
def im2col_nhwc(x, k, stride, pad):
    """x: (N,H,W,C) -> (N*Ho*Wo, k*k*C); feature order (di, dj, c)."""
    N, H, W, C = x.shape
    xp = jnp.pad(x, ((0, 0), (pad, pad), (pad, pad), (0, 0)))
    Ho = (H + 2 * pad - k) // stride + 1
    Wo = (W + 2 * pad - k) // stride + 1
    taps = []
    for di in range(k):
        for dj in range(k):
            taps.append(
                xp[:, di:di + stride * (Ho - 1) + 1:stride,
                      dj:dj + stride * (Wo - 1) + 1:stride, :])   # (N,Ho,Wo,C)
    cols = jnp.concatenate(taps, axis=-1)                         # (N,Ho,Wo,k*k*C)
    return cols.reshape(N * Ho * Wo, k * k * C), Ho, Wo


def encoder_forward(x, kp, *, latent_dim):
    """x: (N, C, H, W) NCHW, like the PyTorch module."""
    N = x.shape[0]
    x = jnp.transpose(x, (0, 2, 3, 1)).astype(jnp.bfloat16)       # NHWC once
    # conv1 (4x4, s2, p1) + LeakyReLU
    cols, Ho, Wo = im2col_nhwc(x, 4, 2, 1)
    y = matmul_bias_leaky(cols, kp["w1m"], kp["b1"])              # (N*Ho*Wo, 64)
    y = y.reshape(N, Ho, Wo, -1)
    # conv2 (4x4, s2, p1) + LeakyReLU
    cols, Ho2, Wo2 = im2col_nhwc(y, 4, 2, 1)
    y = matmul_bias_leaky(cols, kp["w2m"], kp["b2"])              # (N*Ho2*Wo2, 128)
    # flatten in NHWC order (w3 columns were permuted to match at prep time)
    h = y.reshape(N, -1)
    # fused linear1 + LeakyReLU + linear2 (latent padded to 128 lanes)
    out = fused_mlp(h, kp["w3t"], kp["b3"], kp["w4t"], kp["b4"])  # (N, 128) f32
    return out[:, :latent_dim]


# ----------------------- parameter init / re-layout --------------------------
def init_params(key, img_size, latent_dim):
    """Parameters in the PyTorch layouts of the reference module."""
    C, H, W = img_size
    flat = 128 * (H // 4) * (H // 4)   # matches the module (uses height twice)
    ks = jax.random.split(key, 8)
    scale = 0.05
    return {
        "w1": scale * jax.random.normal(ks[0], (64, C, 4, 4), jnp.float32),
        "b1": scale * jax.random.normal(ks[1], (64,), jnp.float32),
        "w2": scale * jax.random.normal(ks[2], (128, 64, 4, 4), jnp.float32),
        "b2": scale * jax.random.normal(ks[3], (128,), jnp.float32),
        "w3": scale * jax.random.normal(ks[4], (1024, flat), jnp.float32),
        "b3": scale * jax.random.normal(ks[5], (1024,), jnp.float32),
        "w4": scale * jax.random.normal(ks[6], (latent_dim, 1024), jnp.float32),
        "b4": scale * jax.random.normal(ks[7], (latent_dim,), jnp.float32),
    }


def prepare_params(p, img_size):
    """One-time re-layout of torch-layout params into kernel layouts (NHWC /
    column-permuted / bf16 / lane-padded).  Done outside the jitted forward."""
    C, H, W = img_size
    assert H % 4 == 0 and W % 4 == 0 and H == W, \
        "reference module's Linear sizing requires square, /4-divisible images"
    H4, W4 = H // 4, W // 4

    def conv_w(w):  # (Cout, Cin, kH, kW) -> (kH*kW*Cin, Cout), tap-major cols
        return w.transpose(2, 3, 1, 0).reshape(-1, w.shape[0]).astype(jnp.bfloat16)

    # permute w3 columns from NCHW-flatten order (c,h,w) to NHWC order (h,w,c)
    w3 = p["w3"]
    w3_nhwc = (w3.reshape(w3.shape[0], 128, H4, W4)
                 .transpose(0, 2, 3, 1)
                 .reshape(w3.shape[0], -1))
    # pad latent output channels up to a full 128-lane width
    w4 = p["w4"]
    latent = w4.shape[0]
    pad_n = 128 * ((latent + 127) // 128)
    w4t = jnp.zeros((w4.shape[1], pad_n), jnp.bfloat16)
    w4t = w4t.at[:, :latent].set(w4.T.astype(jnp.bfloat16))
    b4 = jnp.zeros((1, pad_n), jnp.float32).at[:, :latent].set(p["b4"])

    return {
        "w1m": conv_w(p["w1"]),
        "b1": p["b1"].reshape(1, -1).astype(jnp.float32),
        "w2m": conv_w(p["w2"]),
        "b2": p["b2"].reshape(1, -1).astype(jnp.float32),
        "w3t": w3_nhwc.T.astype(jnp.bfloat16),          # (flat, 1024)
        "b3": p["b3"].reshape(1, -1).astype(jnp.float32),
        "w4t": w4t,                                     # (1024, 128)
        "b4": b4,                                       # (1, 128)
    }


if __name__ == "__main__":
    key = jax.random.PRNGKey(0)
    img_size = (4, 16, 16)      # (channels, height, width)
    latent_dim = 10
    batch = 2

    kx, kp = jax.random.split(key)
    x = jax.random.normal(kx, (batch,) + img_size, jnp.float32)   # NCHW
    torch_params = init_params(kp, img_size, latent_dim)
    kparams = prepare_params(torch_params, img_size)              # one-time re-layout

    fwd = jax.jit(functools.partial(encoder_forward, latent_dim=latent_dim))
    z = fwd(x, kparams)
    jax.block_until_ready(z)
    assert z.shape == (batch, latent_dim), z.shape
    print("KERNEL_OK")
</pallas_src>

<mosaic_0001>
module attributes {stable_mosaic.version = 11 : i64} {
  func.func @_matmul_bias_leaky_kernel(%arg0: i32, %arg1: memref<128x64xbf16, #tpu.memory_space<vmem>>, %arg2: memref<64x64xbf16, #tpu.memory_space<vmem>>, %arg3: memref<1x64xf32, #tpu.memory_space<vmem>>, %arg4: memref<128x64xbf16, #tpu.memory_space<vmem>>) attributes {dimension_semantics = [#tpu.dimension_semantics<parallel>], iteration_bounds = array<i64: 1>, scalar_prefetch = 0 : i64, scratch_operands = 0 : i64, tpu.core_type = #tpu.core_type<tc>, window_params = [{transform_indices = @transform_0, window_bounds = array<i64: 128, 64>}, {pipeline_mode = #tpu.pipeline_mode<synchronous>, transform_indices = @transform_1, window_bounds = array<i64: 64, 64>}, {pipeline_mode = #tpu.pipeline_mode<synchronous>, transform_indices = @transform_2, window_bounds = array<i64: 1, 64>}, {transform_indices = @transform_3, window_bounds = array<i64: 128, 64>}]} {
    %c0 = arith.constant 0 : index
    %c0_0 = arith.constant 0 : index
    %0 = vector.load %arg1[%c0, %c0_0] : memref<128x64xbf16, #tpu.memory_space<vmem>>, vector<128x64xbf16>
    %c0_1 = arith.constant 0 : index
    %c0_2 = arith.constant 0 : index
    %1 = vector.load %arg2[%c0_1, %c0_2] : memref<64x64xbf16, #tpu.memory_space<vmem>>, vector<64x64xbf16>
    %cst = arith.constant dense<0.000000e+00> : vector<128x64xf32>
    %2 = tpu.matmul %0, %1, %cst {dimension_numbers = #tpu.dot_dimension_numbers<[1], [0], [0], [1], [0, 0, 1, 1], [], []>} : vector<128x64xbf16>, vector<64x64xbf16>, vector<128x64xf32> -> vector<128x64xf32>
    %c0_3 = arith.constant 0 : index
    %c0_4 = arith.constant 0 : index
    %3 = vector.load %arg3[%c0_3, %c0_4] : memref<1x64xf32, #tpu.memory_space<vmem>>, vector<1x64xf32>
    %4 = vector.broadcast %3 : vector<1x64xf32> to vector<128x64xf32>
    %5 = arith.addf %2, %4 : vector<128x64xf32>
    %cst_5 = arith.constant 0.000000e+00 : f32
    %6 = vector.broadcast %cst_5 : f32 to vector<128x64xf32>
    %7 = arith.cmpf oge, %5, %6 : vector<128x64xf32>
    %cst_6 = arith.constant 0.00999999977 : f32
    %8 = vector.broadcast %cst_6 : f32 to vector<128x64xf32>
    %9 = arith.mulf %8, %5 : vector<128x64xf32>
    %10 = arith.select %7, %5, %9 : vector<128x64xi1>, vector<128x64xf32>
    %11 = arith.truncf %10 : vector<128x64xf32> to vector<128x64xbf16>
    %c0_7 = arith.constant 0 : index
    %c0_8 = arith.constant 0 : index
    %12 = vector.load %arg4[%c0_7, %c0_8] : memref<128x64xbf16, #tpu.memory_space<vmem>>, vector<128x64xbf16>
    tpu.vector_store %arg4[%c0_7, %c0_8], %11 {strides = array<i32>} : memref<128x64xbf16, #tpu.memory_space<vmem>>, vector<128x64xbf16>,
    return
  }
  func.func @transform_0(%arg0: i32) -> (i32, i32) {
    %c0_i32 = arith.constant 0 : i32
    %c0_i32_0 = arith.constant 0 : i32
    return %arg0, %c0_i32 : i32, i32
  }
  func.func @transform_1(%arg0: i32) -> (i32, i32) {
    %c0_i32 = arith.constant 0 : i32
    %c0_i32_0 = arith.constant 0 : i32
    %c0_i32_1 = arith.constant 0 : i32
    return %c0_i32, %c0_i32_0 : i32, i32
  }
  func.func @transform_2(%arg0: i32) -> (i32, i32) {
    %c0_i32 = arith.constant 0 : i32
    %c0_i32_0 = arith.constant 0 : i32
    %c0_i32_1 = arith.constant 0 : i32
    return %c0_i32, %c0_i32_0 : i32, i32
  }
  func.func @transform_3(%arg0: i32) -> (i32, i32) {
    %c0_i32 = arith.constant 0 : i32
    %c0_i32_0 = arith.constant 0 : i32
    return %arg0, %c0_i32 : i32, i32
  }
}

module attributes {stable_mosaic.version = 11 : i64} {
  func.func @_matmul_bias_leaky_kernel(%arg0: i32, %arg1: memref<32x1024xbf16, #tpu.memory_space<vmem>>, %arg2: memref<1024x128xbf16, #tpu.memory_space<vmem>>, %arg3: memref<1x128xf32, #tpu.memory_space<vmem>>, %arg4: memref<32x128xbf16, #tpu.memory_space<vmem>>) attributes {dimension_semantics = [#tpu.dimension_semantics<parallel>], iteration_bounds = array<i64: 1>, scalar_prefetch = 0 : i64, scratch_operands = 0 : i64, tpu.core_type = #tpu.core_type<tc>, window_params = [{transform_indices = @transform_0, window_bounds = array<i64: 32, 1024>}, {pipeline_mode = #tpu.pipeline_mode<synchronous>, transform_indices = @transform_1, window_bounds = array<i64: 1024, 128>}, {pipeline_mode = #tpu.pipeline_mode<synchronous>, transform_indices = @transform_2, window_bounds = array<i64: 1, 128>}, {transform_indices = @transform_3, window_bounds = array<i64: 32, 128>}]} {
    %c0 = arith.constant 0 : index
    %c0_0 = arith.constant 0 : index
    %0 = vector.load %arg1[%c0, %c0_0] : memref<32x1024xbf16, #tpu.memory_space<vmem>>, vector<32x1024xbf16>
    %c0_1 = arith.constant 0 : index
    %c0_2 = arith.constant 0 : index
    %1 = vector.load %arg2[%c0_1, %c0_2] : memref<1024x128xbf16, #tpu.memory_space<vmem>>, vector<1024x128xbf16>
    %cst = arith.constant dense<0.000000e+00> : vector<32x128xf32>
    %2 = tpu.matmul %0, %1, %cst {dimension_numbers = #tpu.dot_dimension_numbers<[1], [0], [0], [1], [0, 0, 1, 1], [], []>} : vector<32x1024xbf16>, vector<1024x128xbf16>, vector<32x128xf32> -> vector<32x128xf32>
    %c0_3 = arith.constant 0 : index
    %c0_4 = arith.constant 0 : index
    %3 = vector.load %arg3[%c0_3, %c0_4] : memref<1x128xf32, #tpu.memory_space<vmem>>, vector<1x128xf32>
    %4 = vector.broadcast %3 : vector<1x128xf32> to vector<32x128xf32>
    %5 = arith.addf %2, %4 : vector<32x128xf32>
    %cst_5 = arith.constant 0.000000e+00 : f32
    %6 = vector.broadcast %cst_5 : f32 to vector<32x128xf32>
    %7 = arith.cmpf oge, %5, %6 : vector<32x128xf32>
    %cst_6 = arith.constant 0.00999999977 : f32
    %8 = vector.broadcast %cst_6 : f32 to vector<32x128xf32>
    %9 = arith.mulf %8, %5 : vector<32x128xf32>
    %10 = arith.select %7, %5, %9 : vector<32x128xi1>, vector<32x128xf32>
    %11 = arith.truncf %10 : vector<32x128xf32> to vector<32x128xbf16>
    %c0_7 = arith.constant 0 : index
    %c0_8 = arith.constant 0 : index
    %12 = vector.load %arg4[%c0_7, %c0_8] : memref<32x128xbf16, #tpu.memory_space<vmem>>, vector<32x128xbf16>
    tpu.vector_store %arg4[%c0_7, %c0_8], %11 {strides = array<i32>} : memref<32x128xbf16, #tpu.memory_space<vmem>>, vector<32x128xbf16>,
    return
  }
  func.func @transform_0(%arg0: i32) -> (i32, i32) {
    %c0_i32 = arith.constant 0 : i32
    %c0_i32_0 = arith.constant 0 : i32
    return %arg0, %c0_i32 : i32, i32
  }
  func.func @transform_1(%arg0: i32) -> (i32, i32) {
    %c0_i32 = arith.constant 0 : i32
    %c0_i32_0 = arith.constant 0 : i32
    %c0_i32_1 = arith.constant 0 : i32
    return %c0_i32, %c0_i32_0 : i32, i32
  }
  func.func @transform_2(%arg0: i32) -> (i32, i32) {
    %c0_i32 = arith.constant 0 : i32
    %c0_i32_0 = arith.constant 0 : i32
    %c0_i32_1 = arith.constant 0 : i32
    return %c0_i32, %c0_i32_0 : i32, i32
  }
  func.func @transform_3(%arg0: i32) -> (i32, i32) {
    %c0_i32 = arith.constant 0 : i32
    %c0_i32_0 = arith.constant 0 : i32
    return %arg0, %c0_i32 : i32, i32
  }
}

module attributes {stable_mosaic.version = 11 : i64} {
  func.func @_fused_mlp_kernel(%arg0: i32, %arg1: memref<2x2048xbf16, #tpu.memory_space<vmem>>, %arg2: memref<2048x256xbf16, #tpu.memory_space<vmem>>, %arg3: memref<1x256xf32, #tpu.memory_space<vmem>>, %arg4: memref<256x128xbf16, #tpu.memory_space<vmem>>, %arg5: memref<1x128xf32, #tpu.memory_space<vmem>>, %arg6: memref<2x128xf32, #tpu.memory_space<vmem>>, %arg7: memref<2x128xf32, #tpu.memory_space<vmem>>) attributes {dimension_semantics = [#tpu.dimension_semantics<arbitrary>], iteration_bounds = array<i64: 4>, scalar_prefetch = 0 : i64, scratch_operands = 1 : i64, tpu.core_type = #tpu.core_type<tc>, window_params = [{pipeline_mode = #tpu.pipeline_mode<synchronous>, transform_indices = @transform_0, window_bounds = array<i64: 2, 2048>}, {transform_indices = @transform_1, window_bounds = array<i64: 2048, 256>}, {transform_indices = @transform_2, window_bounds = array<i64: 1, 256>}, {transform_indices = @transform_3, window_bounds = array<i64: 256, 128>}, {pipeline_mode = #tpu.pipeline_mode<synchronous>, transform_indices = @transform_4, window_bounds = array<i64: 1, 128>}, {pipeline_mode = #tpu.pipeline_mode<synchronous>, transform_indices = @transform_5, window_bounds = array<i64: 2, 128>}]} {
    %c0_i32 = arith.constant 0 : i32
    %0 = arith.cmpi eq, %arg0, %c0_i32 : i32
    %1 = arith.extui %0 : i1 to i32
    %c0_i32_0 = arith.constant 0 : i32
    %2 = arith.cmpi ne, %1, %c0_i32_0 : i32
    scf.if %2 {
      %cst_16 = arith.constant 0.000000e+00 : f32
      %23 = vector.broadcast %cst_16 : f32 to vector<2x128xf32>
      %c0_17 = arith.constant 0 : index
      %c0_18 = arith.constant 0 : index
      %24 = vector.load %arg7[%c0_17, %c0_18] : memref<2x128xf32, #tpu.memory_space<vmem>>, vector<2x128xf32>
      tpu.vector_store %arg7[%c0_17, %c0_18], %23 {strides = array<i32>} : memref<2x128xf32, #tpu.memory_space<vmem>>, vector<2x128xf32>,
    } else {
    }
    %c0 = arith.constant 0 : index
    %c0_1 = arith.constant 0 : index
    %3 = vector.load %arg1[%c0, %c0_1] : memref<2x2048xbf16, #tpu.memory_space<vmem>>, vector<2x2048xbf16>
    %c0_2 = arith.constant 0 : index
    %c0_3 = arith.constant 0 : index
    %4 = vector.load %arg2[%c0_2, %c0_3] : memref<2048x256xbf16, #tpu.memory_space<vmem>>, vector<2048x256xbf16>
    %cst = arith.constant dense<0.000000e+00> : vector<2x256xf32>
    %5 = tpu.matmul %3, %4, %cst {dimension_numbers = #tpu.dot_dimension_numbers<[1], [0], [0], [1], [0, 0, 1, 1], [], []>} : vector<2x2048xbf16>, vector<2048x256xbf16>, vector<2x256xf32> -> vector<2x256xf32>
    %c0_4 = arith.constant 0 : index
    %c0_5 = arith.constant 0 : index
    %6 = vector.load %arg3[%c0_4, %c0_5] : memref<1x256xf32, #tpu.memory_space<vmem>>, vector<1x256xf32>
    %7 = vector.broadcast %6 : vector<1x256xf32> to vector<2x256xf32>
    %8 = arith.addf %5, %7 : vector<2x256xf32>
    %cst_6 = arith.constant 0.000000e+00 : f32
    %9 = vector.broadcast %cst_6 : f32 to vector<2x256xf32>
    %10 = arith.cmpf oge, %8, %9 : vector<2x256xf32>
    %cst_7 = arith.constant 0.00999999977 : f32
    %11 = vector.broadcast %cst_7 : f32 to vector<2x256xf32>
    %12 = arith.mulf %11, %8 : vector<2x256xf32>
    %13 = arith.select %10, %8, %12 : vector<2x256xi1>, vector<2x256xf32>
    %c0_8 = arith.constant 0 : index
    %c0_9 = arith.constant 0 : index
    %14 = vector.load %arg7[%c0_8, %c0_9] : memref<2x128xf32, #tpu.memory_space<vmem>>, vector<2x128xf32>
    %15 = arith.truncf %13 : vector<2x256xf32> to vector<2x256xbf16>
    %c0_10 = arith.constant 0 : index
    %c0_11 = arith.constant 0 : index
    %16 = vector.load %arg4[%c0_10, %c0_11] : memref<256x128xbf16, #tpu.memory_space<vmem>>, vector<256x128xbf16>
    %cst_12 = arith.constant dense<0.000000e+00> : vector<2x128xf32>
    %17 = tpu.matmul %15, %16, %cst_12 {dimension_numbers = #tpu.dot_dimension_numbers<[1], [0], [0], [1], [0, 0, 1, 1], [], []>} : vector<2x256xbf16>, vector<256x128xbf16>, vector<2x128xf32> -> vector<2x128xf32>
    %18 = arith.addf %14, %17 : vector<2x128xf32>
    %c0_13 = arith.constant 0 : index
    %c0_14 = arith.constant 0 : index
    %19 = vector.load %arg7[%c0_13, %c0_14] : memref<2x128xf32, #tpu.memory_space<vmem>>, vector<2x128xf32>
    tpu.vector_store %arg7[%c0_13, %c0_14], %18 {strides = array<i32>} : memref<2x128xf32, #tpu.memory_space<vmem>>, vector<2x128xf32>,
    %c3_i32 = arith.constant 3 : i32
    %20 = arith.cmpi eq, %arg0, %c3_i32 : i32
    %21 = arith.extui %20 : i1 to i32
    %c0_i32_15 = arith.constant 0 : i32
    %22 = arith.cmpi ne, %21, %c0_i32_15 : i32
    scf.if %22 {
      %c0_16 = arith.constant 0 : index
      %c0_17 = arith.constant 0 : index
      %23 = vector.load %arg7[%c0_16, %c0_17] : memref<2x128xf32, #tpu.memory_space<vmem>>, vector<2x128xf32>
      %c0_18 = arith.constant 0 : index
      %c0_19 = arith.constant 0 : index
      %24 = vector.load %arg5[%c0_18, %c0_19] : memref<1x128xf32, #tpu.memory_space<vmem>>, vector<1x128xf32>
      %25 = vector.broadcast %24 : vector<1x128xf32> to vector<2x128xf32>
      %26 = arith.addf %23, %25 : vector<2x128xf32>
      %c0_20 = arith.constant 0 : index
      %c0_21 = arith.constant 0 : index
      %27 = vector.load %arg6[%c0_20, %c0_21] : memref<2x128xf32, #tpu.memory_space<vmem>>, vector<2x128xf32>
      tpu.vector_store %arg6[%c0_20, %c0_21], %26 {strides = array<i32>} : memref<2x128xf32, #tpu.memory_space<vmem>>, vector<2x128xf32>,
    } else {
    }
    return
  }
  func.func @transform_0(%arg0: i32) -> (i32, i32) {
    %c0_i32 = arith.constant 0 : i32
    %c0_i32_0 = arith.constant 0 : i32
    %c0_i32_1 = arith.constant 0 : i32
    return %c0_i32, %c0_i32_0 : i32, i32
  }
  func.func @transform_1(%arg0: i32) -> (i32, i32) {
    %c0_i32 = arith.constant 0 : i32
    %c0_i32_0 = arith.constant 0 : i32
    return %c0_i32, %arg0 : i32, i32
  }
  func.func @transform_2(%arg0: i32) -> (i32, i32) {
    %c0_i32 = arith.constant 0 : i32
    %c0_i32_0 = arith.constant 0 : i32
    return %c0_i32, %arg0 : i32, i32
  }
  func.func @transform_3(%arg0: i32) -> (i32, i32) {
    %c0_i32 = arith.constant 0 : i32
    %c0_i32_0 = arith.constant 0 : i32
    return %arg0, %c0_i32 : i32, i32
  }
  func.func @transform_4(%arg0: i32) -> (i32, i32) {
    %c0_i32 = arith.constant 0 : i32
    %c0_i32_0 = arith.constant 0 : i32
    %c0_i32_1 = arith.constant 0 : i32
    return %c0_i32, %c0_i32_0 : i32, i32
  }
  func.func @transform_5(%arg0: i32) -> (i32, i32) {
    %c0_i32 = arith.constant 0 : i32
    %c0_i32_0 = arith.constant 0 : i32
    %c0_i32_1 = arith.constant 0 : i32
    return %c0_i32, %c0_i32_0 : i32, i32
  }
}

</mosaic_0001>

<llo_original>
// kernel: encoder_forward.3
$region0: #{encoder_forward.3}
  #allocation0 [shape = 'u32[]', space=smem, size = 0x4, offset = 0x4, fixed_abs, tag = 'smem constant byte address 0x4 - core index']
  #allocation1 [shape = 'u32[144,128]{1,0:T(1,128)}', space=vmem, size = 0x12000, scoped, tag = 'internal scratch']
  %s0 = inlined_call_operand.vmem [shape: bf16[128,64], index: 0, kind: input, shape index: {}]
  %s1 = inlined_call_operand.hbm [shape: bf16[64,64], index: 1, kind: input, shape index: {}]
  %s2 = inlined_call_operand.hbm [shape: f32[1,64], index: 2, kind: input, shape index: {}]
  %s3 = inlined_call_operand.vmem [shape: bf16[128,64], index: 3, kind: output, shape index: {}]
  %s4 = sld [smem:[#allocation0]]
  $region30: #{encoder_forward.3} parent=0
    _
  %s6 = ssub.s32 1, %s4
  %s7 = scalar_select 0, %s6, %s4
  $region1: #{encoder_forward.3} parent=0
    #allocation2 [shape = 'u8[16384]{0}', space=vmem, size = 0x4000, scoped, tag = 'input window, operand 1, single buffered']
    #allocation3 [shape = 's32[1]{0}', space=sflag, size = 0x4, scoped, tag = 'scoped memory for encoder_forward.3']
    #allocation4 [shape = 'u8[512]{0}', space=vmem, size = 0x400, scoped, tag = 'input window, operand 2, single buffered']
    #allocation5 [shape = 's32[1]{0}', space=sflag, size = 0x4, scoped, tag = 'scoped memory for encoder_forward.3']
    %8 = vsyncpa [#allocation3], 0
    %9 = vsyncpa [#allocation5], 0
    // Predicated region
    $region2: #{encoder_forward.3} parent=1 // pred_check
      _
    $region3: #{encoder_forward.3} parent=1 // pred_check_branch
      %11 = sbr.rel (0) target = $region5
    $region4: #{encoder_forward.3} parent=1 // pred_region
      _
    $region5: #{encoder_forward.3} parent=1 // pred_fallthru
      _
    // Predicated region
    $region6: #{encoder_forward.3} parent=1 // pred_check
      _
    $region7: #{encoder_forward.3} parent=1 // pred_check_branch
      %13 = sbr.rel (0) target = $region9
    $region8: #{encoder_forward.3} parent=1 // pred_region
      %s15 = ssub.s32 512, 512
      %16 = vsyncadd [#allocation3], %s15
      %s17 = sshll.u32 [#allocation2], 4
      %s18 = int_to_ptr.vmem [resolvable:$true] %s17
      %23 = dma.hbm_to_vmem [thread:$0]  %s1, 512, %s18, [#allocation3], 64, 64, 4
    $region9: #{encoder_forward.3} parent=1 // pred_fallthru
      _
    // Predicated region
    $region10: #{encoder_forward.3} parent=1 // pred_check
      _
    $region11: #{encoder_forward.3} parent=1 // pred_check_branch
      %25 = sbr.rel (0) target = $region13
    $region12: #{encoder_forward.3} parent=1 // pred_region
      %s27 = ssub.s32 16, 16
      %28 = vsyncadd [#allocation5], %s27
      %s30 = sshll.u32 [#allocation4], 4
      %s31 = int_to_ptr.vmem [resolvable:$true] %s30
      %33 = dma.hbm_to_vmem [thread:$0]  %s2, 16, %s31, [#allocation5]
    $region13: #{encoder_forward.3} parent=1 // pred_fallthru
      _
    // Predicated region
    $region14: #{encoder_forward.3} parent=1 // pred_check
      _
    $region15: #{encoder_forward.3} parent=1 // pred_check_branch
      %35 = sbr.rel (0) target = $region17
    $region16: #{encoder_forward.3} parent=1 // pred_region
      %36 = dma.done [#allocation3], 512
    $region17: #{encoder_forward.3} parent=1 // pred_fallthru
      _
    // Predicated region
    $region18: #{encoder_forward.3} parent=1 // pred_check
      _
    $region19: #{encoder_forward.3} parent=1 // pred_check_branch
      %38 = sbr.rel (0) target = $region21
    $region20: #{encoder_forward.3} parent=1 // pred_region
      %39 = dma.done [#allocation5], 16
    $region21: #{encoder_forward.3} parent=1 // pred_fallthru
      _
    %v41 = vld [vmem:[%s0] sm:$0xf]
    %v42 = vld [vmem:[%s0 + $0x4] sm:$0xf]
    %v43 = vld [vmem:[%s0 + $0x8] sm:$0xf]
    %v44 = vld [vmem:[%s0 + $0xc] sm:$0xf]
    %v45 = vld [vmem:[%s0 + $0x10] sm:$0xf]
    %v46 = vld [vmem:[%s0 + $0x14] sm:$0xf]
    %v47 = vld [vmem:[%s0 + $0x18] sm:$0xf]
    %v48 = vld [vmem:[%s0 + $0x1c] sm:$0xf]
    %v49 = vld [vmem:[%s0 + $0x20] sm:$0xf]
    %v50 = vld [vmem:[%s0 + $0x24] sm:$0xf]
    %v51 = vld [vmem:[%s0 + $0x28] sm:$0xf]
    %v52 = vld [vmem:[%s0 + $0x2c] sm:$0xf]
    %v53 = vld [vmem:[%s0 + $0x30] sm:$0xf]
    %v54 = vld [vmem:[%s0 + $0x34] sm:$0xf]
    %v55 = vld [vmem:[%s0 + $0x38] sm:$0xf]
    %v56 = vld [vmem:[%s0 + $0x3c] sm:$0xf]
    %v57 = vld [vmem:[#allocation2] sm:$0xf]
    %v58 = vld [vmem:[#allocation2 + $0x4] sm:$0xf]
    %v59 = vld [vmem:[#allocation2 + $0x8] sm:$0xf]
    %v60 = vld [vmem:[#allocation2 + $0xc] sm:$0xf]
    %v61 = vld [vmem:[#allocation2 + $0x10] sm:$0xf]
    %v62 = vld [vmem:[#allocation2 + $0x14] sm:$0xf]
    %v63 = vld [vmem:[#allocation2 + $0x18] sm:$0xf]
    %v64 = vld [vmem:[#allocation2 + $0x1c] sm:$0xf]
    %v65 = vld [vmem:[#allocation4] sm:$0x1]
    %v67 = vlaneseq
    %v68 = vshrl.u32 %v67, 7
    %v69 = vsub.s32 0, %v68
    %v70 = vrot.slane %v65, %v69
    %v88 = vunpack.c.l.b16 %v41
    %v89 = vunpack.c.l.b16 %v42
    %v90 = vunpack.c.l.b16 %v43
    %v91 = vunpack.c.l.b16 %v44
    %v92 = vunpack.c.l.b16 %v45
    %v93 = vunpack.c.l.b16 %v46
    %v94 = vunpack.c.l.b16 %v47
    %v95 = vunpack.c.l.b16 %v48
    %v96 = vunpack.c.l.b16 %v49
    %v97 = vunpack.c.l.b16 %v50
    %v98 = vunpack.c.l.b16 %v51
    %v99 = vunpack.c.l.b16 %v52
    %v100 = vunpack.c.l.b16 %v53
    %v101 = vunpack.c.l.b16 %v54
    %v102 = vunpack.c.l.b16 %v55
    %v103 = vunpack.c.l.b16 %v56
    %v104 = vpack.c.b16 %v89, %v88
    %v105 = vpack.c.b16 %v91, %v90
    %v106 = vpack.c.b16 %v93, %v92
    %v107 = vpack.c.b16 %v95, %v94
    %v108 = vpack.c.b16 %v97, %v96
    %v109 = vpack.c.b16 %v99, %v98
    %v110 = vpack.c.b16 %v101, %v100
    %v111 = vpack.c.b16 %v103, %v102
    %v120 = vunpack.c.l.b16 %v57
    %v121 = vunpack.c.l.b16 %v58
    %v122 = vunpack.c.l.b16 %v59
    %v123 = vunpack.c.l.b16 %v60
    %v124 = vunpack.c.l.b16 %v61
    %v125 = vunpack.c.l.b16 %v62
    %v126 = vunpack.c.l.b16 %v63
    %v127 = vunpack.c.l.b16 %v64
    %v128 = vpack.c.b16 %v121, %v120
    %v129 = vpack.c.b16 %v123, %v122
    %v130 = vpack.c.b16 %v125, %v124
    %v131 = vpack.c.b16 %v127, %v126
    %vm136 = vcmask 523264
    %v138 = vsel %vm136, %v104, 0
    %v141 = vsel %vm136, %v105, 0
    %v144 = vsel %vm136, %v106, 0
    %v147 = vsel %vm136, %v107, 0
    %v150 = vsel %vm136, %v108, 0
    %v153 = vsel %vm136, %v109, 0
    %v156 = vsel %vm136, %v110, 0
    %v159 = vsel %vm136, %v111, 0
    %161 = vmatprep.subr.bf16.mxu0 0
    %162 = vmatpush1.bf16.msra.mxu0 %v128
    %163 = vmatprep.subr.bf16.mxu0 0
    %164 = vmatpush1.bf16.msra.mxu0 %v129
    %165 = vmatprep.subr.bf16.mxu0 0
    %166 = vmatpush1.bf16.msra.mxu0 %v130
    %167 = vmatprep.subr.bf16.mxu0 0
    %168 = vmatpush1.bf16.msra.mxu0 %v131
    %169 = vmatprep.subr.bf16.mxu0 0
    %170 = vmatpush1.bf16.msra.mxu0 0
    %171 = vmatprep.subr.bf16.mxu0 0
    %172 = vmatpush1.bf16.msra.mxu0 0
    %173 = vmatprep.subr.bf16.mxu0 0
    %174 = vmatpush1.bf16.msra.mxu0 0
    %175 = vmatprep.subr.bf16.mxu0 0
    %176 = vmatpush1.bf16.msra.mxu0 0
    %177 = vmatprep.subr.bf16.mxu0 0
    %178 = vmatpush1.bf16.msra.mxu0 0
    %179 = vmatprep.subr.bf16.mxu0 0
    %180 = vmatpush1.bf16.msra.mxu0 0
    %181 = vmatprep.subr.bf16.mxu0 0
    %182 = vmatpush1.bf16.msra.mxu0 0
    %183 = vmatprep.subr.bf16.mxu0 0
    %184 = vmatpush1.bf16.msra.mxu0 0
    %185 = vmatprep.subr.bf16.mxu0 0
    %186 = vmatpush1.bf16.msra.mxu0 0
    %187 = vmatprep.subr.bf16.mxu0 0
    %188 = vmatpush1.bf16.msra.mxu0 0
    %189 = vmatprep.subr.bf16.mxu0 0
    %190 = vmatpush1.bf16.msra.mxu0 0
    %191 = vmatprep.subr.bf16.mxu0 0
    %192 = vmatpush1.bf16.msra.mxu0 0
    %193 = vmatprep.mubr.bf16.mxu0 0
    %194 = vmatmul.mubr.bf16.gmra.mrb[0].mxu0 %v138
    %v195 = vpop.f32.mrb[0].mxu0
    %v196 = vadd.f32 %v70, %v195
    %v197 = vpop.f32.mrb[0].mxu0
    %v198 = vpop.f32.mrb[0].mxu0
    %v199 = vadd.f32 %v70, %v198
    %v200 = vpop.f32.mrb[0].mxu0
    %201 = vmatprep.mubr.bf16.mxu0 0
    %202 = vmatmul.mubr.bf16.gmra.mrb[0].mxu0 %v141
    %v203 = vpop.f32.mrb[0].mxu0
    %v204 = vadd.f32 %v70, %v203
    %v205 = vpop.f32.mrb[0].mxu0
    %v206 = vpop.f32.mrb[0].mxu0
    %v207 = vadd.f32 %v70, %v206
    %v208 = vpop.f32.mrb[0].mxu0
    %209 = vmatprep.mubr.bf16.mxu0 0
    %210 = vmatmul.mubr.bf16.gmra.mrb[0].mxu0 %v144
    %v211 = vpop.f32.mrb[0].mxu0
    %v212 = vadd.f32 %v70, %v211
    %v213 = vpop.f32.mrb[0].mxu0
    %v214 = vpop.f32.mrb[0].mxu0
    %v215 = vadd.f32 %v70, %v214
    %v216 = vpop.f32.mrb[0].mxu0
    %217 = vmatprep.mubr.bf16.mxu0 0
    %218 = vmatmul.mubr.bf16.gmra.mrb[0].mxu0 %v147
    %v219 = vpop.f32.mrb[0].mxu0
    %v220 = vadd.f32 %v70, %v219
    %v221 = vpop.f32.mrb[0].mxu0
    %v222 = vpop.f32.mrb[0].mxu0
    %v223 = vadd.f32 %v70, %v222
    %v224 = vpop.f32.mrb[0].mxu0
    %225 = vmatprep.mubr.bf16.mxu0 0
    %226 = vmatmul.mubr.bf16.gmra.mrb[0].mxu0 %v150
    %v227 = vpop.f32.mrb[0].mxu0
    %v228 = vadd.f32 %v70, %v227
    %v229 = vpop.f32.mrb[0].mxu0
    %v230 = vpop.f32.mrb[0].mxu0
    %v231 = vadd.f32 %v70, %v230
    %v232 = vpop.f32.mrb[0].mxu0
    %233 = vmatprep.mubr.bf16.mxu0 0
    %234 = vmatmul.mubr.bf16.gmra.mrb[0].mxu0 %v153
    %v235 = vpop.f32.mrb[0].mxu0
    %v236 = vadd.f32 %v70, %v235
    %v237 = vpop.f32.mrb[0].mxu0
    %v238 = vpop.f32.mrb[0].mxu0
    %v239 = vadd.f32 %v70, %v238
    %v240 = vpop.f32.mrb[0].mxu0
    %241 = vmatprep.mubr.bf16.mxu0 0
    %242 = vmatmul.mubr.bf16.gmra.mrb[0].mxu0 %v156
    %v243 = vpop.f32.mrb[0].mxu0
    %v244 = vadd.f32 %v70, %v243
    %v245 = vpop.f32.mrb[0].mxu0
    %v246 = vpop.f32.mrb[0].mxu0
    %v247 = vadd.f32 %v70, %v246
    %v248 = vpop.f32.mrb[0].mxu0
    %249 = vmatprep.mubr.bf16.mxu0 0
    %250 = vmatmul.mubr.bf16.gmra.mrb[0].mxu0 %v159
    %v251 = vpop.f32.mrb[0].mxu0
    %v252 = vadd.f32 %v70, %v251
    %v253 = vpop.f32.mrb[0].mxu0
    %v254 = vpop.f32.mrb[0].mxu0
    %v255 = vadd.f32 %v70, %v254
    %v256 = vpop.f32.mrb[0].mxu0
    %257 = vdwg.mxu0
    %vm258 = vcmp.ge.f32.partialorder %v196, 0.0
    %vm259 = vcmp.ge.f32.partialorder %v199, 0.0
    %vm260 = vcmp.ge.f32.partialorder %v204, 0.0
    %vm261 = vcmp.ge.f32.partialorder %v207, 0.0
    %vm262 = vcmp.ge.f32.partialorder %v212, 0.0
    %vm263 = vcmp.ge.f32.partialorder %v215, 0.0
    %vm264 = vcmp.ge.f32.partialorder %v220, 0.0
    %vm265 = vcmp.ge.f32.partialorder %v223, 0.0
    %vm266 = vcmp.ge.f32.partialorder %v228, 0.0
    %vm267 = vcmp.ge.f32.partialorder %v231, 0.0
    %vm268 = vcmp.ge.f32.partialorder %v236, 0.0
    %vm269 = vcmp.ge.f32.partialorder %v239, 0.0
    %vm270 = vcmp.ge.f32.partialorder %v244, 0.0
    %vm271 = vcmp.ge.f32.partialorder %v247, 0.0
    %vm272 = vcmp.ge.f32.partialorder %v252, 0.0
    %vm273 = vcmp.ge.f32.partialorder %v255, 0.0
    %v274 = vmul.f32 %v196, 0.01
    %v275 = vmul.f32 %v199, 0.01
    %v276 = vmul.f32 %v204, 0.01
    %v277 = vmul.f32 %v207, 0.01
    %v278 = vmul.f32 %v212, 0.01
    %v279 = vmul.f32 %v215, 0.01
    %v280 = vmul.f32 %v220, 0.01
    %v281 = vmul.f32 %v223, 0.01
    %v282 = vmul.f32 %v228, 0.01
    %v283 = vmul.f32 %v231, 0.01
    %v284 = vmul.f32 %v236, 0.01
    %v285 = vmul.f32 %v239, 0.01
    %v286 = vmul.f32 %v244, 0.01
    %v287 = vmul.f32 %v247, 0.01
    %v288 = vmul.f32 %v252, 0.01
    %v289 = vmul.f32 %v255, 0.01
    %v290 = vsel %vm258, %v196, %v274
    %v291 = vsel %vm259, %v199, %v275
    %v292 = vsel %vm260, %v204, %v276
    %v293 = vsel %vm261, %v207, %v277
    %v294 = vsel %vm262, %v212, %v278
    %v295 = vsel %vm263, %v215, %v279
    %v296 = vsel %vm264, %v220, %v280
    %v297 = vsel %vm265, %v223, %v281
    %v298 = vsel %vm266, %v228, %v282
    %v299 = vsel %vm267, %v231, %v283
    %v300 = vsel %vm268, %v236, %v284
    %v301 = vsel %vm269, %v239, %v285
    %v302 = vsel %vm270, %v244, %v286
    %v303 = vsel %vm271, %v247, %v287
    %v304 = vsel %vm272, %v252, %v288
    %v305 = vsel %vm273, %v255, %v289
    %v306 = vpack.c.bf16 %v291, %v290
    %v307 = vpack.c.bf16 %v293, %v292
    %v308 = vpack.c.bf16 %v295, %v294
    %v309 = vpack.c.bf16 %v297, %v296
    %v310 = vpack.c.bf16 %v299, %v298
    %v311 = vpack.c.bf16 %v301, %v300
    %v312 = vpack.c.bf16 %v303, %v302
    %v313 = vpack.c.bf16 %v305, %v304
    %v322 = vunpack.c.l.b16 %v306
    %v323 = vunpack.c.h.b16 %v306
    %v324 = vunpack.c.l.b16 %v307
    %v325 = vunpack.c.h.b16 %v307
    %v326 = vunpack.c.l.b16 %v308
    %v327 = vunpack.c.h.b16 %v308
    %v328 = vunpack.c.l.b16 %v309
    %v329 = vunpack.c.h.b16 %v309
    %v330 = vunpack.c.l.b16 %v310
    %v331 = vunpack.c.h.b16 %v310
    %v332 = vunpack.c.l.b16 %v311
    %v333 = vunpack.c.h.b16 %v311
    %v334 = vunpack.c.l.b16 %v312
    %v335 = vunpack.c.h.b16 %v312
    %v336 = vunpack.c.l.b16 %v313
    %v337 = vunpack.c.h.b16 %v313
    %v338 = vpack.c.b16 %v322, %v322
    %v339 = vpack.c.b16 %v323, %v323
    %v340 = vpack.c.b16 %v324, %v324
    %v341 = vpack.c.b16 %v325, %v325
    %v342 = vpack.c.b16 %v326, %v326
    %v343 = vpack.c.b16 %v327, %v327
    %v344 = vpack.c.b16 %v328, %v328
    %v345 = vpack.c.b16 %v329, %v329
    %v346 = vpack.c.b16 %v330, %v330
    %v347 = vpack.c.b16 %v331, %v331
    %v348 = vpack.c.b16 %v332, %v332
    %v349 = vpack.c.b16 %v333, %v333
    %v350 = vpack.c.b16 %v334, %v334
    %v351 = vpack.c.b16 %v335, %v335
    %v352 = vpack.c.b16 %v336, %v336
    %v353 = vpack.c.b16 %v337, %v337
    %vm370 = vcmask 519168
    %371 = vst.msk [vmem:[%s3] sm:$0xf] %vm370, %v338
    %372 = vst.msk [vmem:[%s3 + $0x4] sm:$0xf] %vm370, %v339
    %373 = vst.msk [vmem:[%s3 + $0x8] sm:$0xf] %vm370, %v340
    %374 = vst.msk [vmem:[%s3 + $0xc] sm:$0xf] %vm370, %v341
    %375 = vst.msk [vmem:[%s3 + $0x10] sm:$0xf] %vm370, %v342
    %376 = vst.msk [vmem:[%s3 + $0x14] sm:$0xf] %vm370, %v343
    %377 = vst.msk [vmem:[%s3 + $0x18] sm:$0xf] %vm370, %v344
    %378 = vst.msk [vmem:[%s3 + $0x1c] sm:$0xf] %vm370, %v345
    %379 = vst.msk [vmem:[%s3 + $0x20] sm:$0xf] %vm370, %v346
    %380 = vst.msk [vmem:[%s3 + $0x24] sm:$0xf] %vm370, %v347
    %381 = vst.msk [vmem:[%s3 + $0x28] sm:$0xf] %vm370, %v348
    %382 = vst.msk [vmem:[%s3 + $0x2c] sm:$0xf] %vm370, %v349
    %383 = vst.msk [vmem:[%s3 + $0x30] sm:$0xf] %vm370, %v350
    %384 = vst.msk [vmem:[%s3 + $0x34] sm:$0xf] %vm370, %v351
    %385 = vst.msk [vmem:[%s3 + $0x38] sm:$0xf] %vm370, %v352
    %386 = vst.msk [vmem:[%s3 + $0x3c] sm:$0xf] %vm370, %v353
    // Predicated region
    $region22: #{encoder_forward.3} parent=1 // pred_check
      _
    $region23: #{encoder_forward.3} parent=1 // pred_check_branch
      %388 = sbr.rel (0) target = $region25
    $region24: #{encoder_forward.3} parent=1 // pred_region
      _
    $region25: #{encoder_forward.3} parent=1 // pred_fallthru
      _
    // Predicated region
    $region26: #{encoder_forward.3} parent=1 // pred_check
      _
    $region27: #{encoder_forward.3} parent=1 // pred_check_branch
      %390 = sbr.rel (0) target = $region29
    $region28: #{encoder_forward.3} parent=1 // pred_region
      _
    $region29: #{encoder_forward.3} parent=1 // pred_fallthru
      _
    %391 = vsyncpa [#allocation3], 1
    %392 = vsyncpa [#allocation5], 1

// kernel: encoder_forward.4
$region0: #{encoder_forward.4}
  #allocation0 [shape = 'u32[]', space=smem, size = 0x4, offset = 0x4, fixed_abs, tag = 'smem constant byte address 0x4 - core index']
  #allocation1 [shape = 'u32[144,128]{1,0:T(1,128)}', space=vmem, size = 0x12000, scoped, tag = 'internal scratch']
  %s0 = inlined_call_operand.vmem [shape: bf16[32,1024], index: 0, kind: input, shape index: {}]
  %s1 = inlined_call_operand.hbm [shape: bf16[1024,128], index: 1, kind: input, shape index: {}]
  %s2 = inlined_call_operand.hbm [shape: f32[1,128], index: 2, kind: input, shape index: {}]
  %s3 = inlined_call_operand.vmem [shape: bf16[32,128], index: 3, kind: output, shape index: {}]
  %s4 = sld [smem:[#allocation0]]
  $region30: #{encoder_forward.4} parent=0
    _
  %s6 = ssub.s32 1, %s4
  %s7 = scalar_select 0, %s6, %s4
  $region1: #{encoder_forward.4} parent=0
    #allocation2 [shape = 'u8[262144]{0}', space=vmem, size = 0x40000, scoped, tag = 'input window, operand 1, single buffered']
    #allocation3 [shape = 's32[1]{0}', space=sflag, size = 0x4, scoped, tag = 'scoped memory for encoder_forward.4']
    #allocation4 [shape = 'u8[512]{0}', space=vmem, size = 0x400, scoped, tag = 'input window, operand 2, single buffered']
    #allocation5 [shape = 's32[1]{0}', space=sflag, size = 0x4, scoped, tag = 'scoped memory for encoder_forward.4']
    %8 = vsyncpa [#allocation3], 0
    %9 = vsyncpa [#allocation5], 0
    // Predicated region
    $region2: #{encoder_forward.4} parent=1 // pred_check
      _
    $region3: #{encoder_forward.4} parent=1 // pred_check_branch
      %11 = sbr.rel (0) target = $region5
    $region4: #{encoder_forward.4} parent=1 // pred_region
      _
    $region5: #{encoder_forward.4} parent=1 // pred_fallthru
      _
    // Predicated region
    $region6: #{encoder_forward.4} parent=1 // pred_check
      _
    $region7: #{encoder_forward.4} parent=1 // pred_check_branch
      %13 = sbr.rel (0) target = $region9
    $region8: #{encoder_forward.4} parent=1 // pred_region
      %s15 = ssub.s32 8192, 8192
      %16 = vsyncadd [#allocation3], %s15
      %s17 = sshll.u32 [#allocation2], 4
      %s18 = int_to_ptr.vmem [resolvable:$true] %s17
      %23 = dma.hbm_to_vmem [thread:$0]  %s1, 8192, %s18, [#allocation3], 64, 64, 4
    $region9: #{encoder_forward.4} parent=1 // pred_fallthru
      _
    // Predicated region
    $region10: #{encoder_forward.4} parent=1 // pred_check
      _
    $region11: #{encoder_forward.4} parent=1 // pred_check_branch
      %25 = sbr.rel (0) target = $region13
    $region12: #{encoder_forward.4} parent=1 // pred_region
      %s27 = ssub.s32 16, 16
      %28 = vsyncadd [#allocation5], %s27
      %s30 = sshll.u32 [#allocation4], 4
      %s31 = int_to_ptr.vmem [resolvable:$true] %s30
      %33 = dma.hbm_to_vmem [thread:$0]  %s2, 16, %s31, [#allocation5]
    $region13: #{encoder_forward.4} parent=1 // pred_fallthru
      _
    // Predicated region
    $region14: #{encoder_forward.4} parent=1 // pred_check
      _
    $region15: #{encoder_forward.4} parent=1 // pred_check_branch
      %35 = sbr.rel (0) target = $region17
    $region16: #{encoder_forward.4} parent=1 // pred_region
      %36 = dma.done [#allocation3], 8192
    $region17: #{encoder_forward.4} parent=1 // pred_fallthru
      _
    // Predicated region
    $region18: #{encoder_forward.4} parent=1 // pred_check
      _
    $region19: #{encoder_forward.4} parent=1 // pred_check_branch
      %38 = sbr.rel (0) target = $region21
    $region20: #{encoder_forward.4} parent=1 // pred_region
      %39 = dma.done [#allocation5], 16
    $region21: #{encoder_forward.4} parent=1 // pred_fallthru
      _
    %v41 = vld [vmem:[%s0] sm:$0xff]
    %v42 = vld [vmem:[%s0 + $0x8] sm:$0xff]
    %v43 = vld [vmem:[%s0 + $0x10] sm:$0xff]
    %v44 = vld [vmem:[%s0 + $0x18] sm:$0xff]
    %v45 = vld [vmem:[%s0 + $0x20] sm:$0xff]
    %v46 = vld [vmem:[%s0 + $0x28] sm:$0xff]
    %v47 = vld [vmem:[%s0 + $0x30] sm:$0xff]
    %v48 = vld [vmem:[%s0 + $0x38] sm:$0xff]
    %v49 = vld [vmem:[%s0 + $0x40] sm:$0xff]
    %v50 = vld [vmem:[%s0 + $0x48] sm:$0xff]
    %v51 = vld [vmem:[%s0 + $0x50] sm:$0xff]
    %v52 = vld [vmem:[%s0 + $0x58] sm:$0xff]
    %v53 = vld [vmem:[%s0 + $0x60] sm:$0xff]
    %v54 = vld [vmem:[%s0 + $0x68] sm:$0xff]
    %v55 = vld [vmem:[%s0 + $0x70] sm:$0xff]
    %v56 = vld [vmem:[%s0 + $0x78] sm:$0xff]
    %v57 = vld [vmem:[#allocation2] sm:$0xf]
    %v58 = vld [vmem:[#allocation2 + $0x4] sm:$0xf]
    %v59 = vld [vmem:[#allocation2 + $0x8] sm:$0xf]
    %v60 = vld [vmem:[#allocation2 + $0xc] sm:$0xf]
    %v61 = vld [vmem:[#allocation2 + $0x10] sm:$0xf]
    %v62 = vld [vmem:[#allocation2 + $0x14] sm:$0xf]
    %v63 = vld [vmem:[#allocation2 + $0x18] sm:$0xf]
    %v64 = vld [vmem:[#allocation2 + $0x1c] sm:$0xf]
    %v65 = vld [vmem:[#allocation2 + $0x20] sm:$0xf]
    %v66 = vld [vmem:[#allocation2 + $0x24] sm:$0xf]
    %v67 = vld [vmem:[#allocation2 + $0x28] sm:$0xf]
    %v68 = vld [vmem:[#allocation2 + $0x2c] sm:$0xf]
    %v69 = vld [vmem:[#allocation2 + $0x30] sm:$0xf]
    %v70 = vld [vmem:[#allocation2 + $0x34] sm:$0xf]
    %v71 = vld [vmem:[#allocation2 + $0x38] sm:$0xf]
    %v72 = vld [vmem:[#allocation2 + $0x3c] sm:$0xf]
    %v73 = vld [vmem:[#allocation2 + $0x40] sm:$0xf]
    %v74 = vld [vmem:[#allocation2 + $0x44] sm:$0xf]
    %v75 = vld [vmem:[#allocation2 + $0x48] sm:$0xf]
    %v76 = vld [vmem:[#allocation2 + $0x4c] sm:$0xf]
    %v77 = vld [vmem:[#allocation2 + $0x50] sm:$0xf]
    %v78 = vld [vmem:[#allocation2 + $0x54] sm:$0xf]
    %v79 = vld [vmem:[#allocation2 + $0x58] sm:$0xf]
    %v80 = vld [vmem:[#allocation2 + $0x5c] sm:$0xf]
    %v81 = vld [vmem:[#allocation2 + $0x60] sm:$0xf]
    %v82 = vld [vmem:[#allocation2 + $0x64] sm:$0xf]
    %v83 = vld [vmem:[#allocation2 + $0x68] sm:$0xf]
    %v84 = vld [vmem:[#allocation2 + $0x6c] sm:$0xf]
    %v85 = vld [vmem:[#allocation2 + $0x70] sm:$0xf]
    %v86 = vld [vmem:[#allocation2 + $0x74] sm:$0xf]
    %v87 = vld [vmem:[#allocation2 + $0x78] sm:$0xf]
    %v88 = vld [vmem:[#allocation2 + $0x7c] sm:$0xf]
    %v89 = vld [vmem:[#allocation2 + $0x80] sm:$0xf]
    %v90 = vld [vmem:[#allocation2 + $0x84] sm:$0xf]
    %v91 = vld [vmem:[#allocation2 + $0x88] sm:$0xf]
    %v92 = vld [vmem:[#allocation2 + $0x8c] sm:$0xf]
    %v93 = vld [vmem:[#allocation2 + $0x90] sm:$0xf]
    %v94 = vld [vmem:[#allocation2 + $0x94] sm:$0xf]
    %v95 = vld [vmem:[#allocation2 + $0x98] sm:$0xf]
    %v96 = vld [vmem:[#allocation2 + $0x9c] sm:$0xf]
    %v97 = vld [vmem:[#allocation2 + $0xa0] sm:$0xf]
    %v98 = vld [vmem:[#allocation2 + $0xa4] sm:$0xf]
    %v99 = vld [vmem:[#allocation2 + $0xa8] sm:$0xf]
    %v100 = vld [vmem:[#allocation2 + $0xac] sm:$0xf]
    %v101 = vld [vmem:[#allocation2 + $0xb0] sm:$0xf]
    %v102 = vld [vmem:[#allocation2 + $0xb4] sm:$0xf]
    %v103 = vld [vmem:[#allocation2 + $0xb8] sm:$0xf]
    %v104 = vld [vmem:[#allocation2 + $0xbc] sm:$0xf]
    %v105 = vld [vmem:[#allocation2 + $0xc0] sm:$0xf]
    %v106 = vld [vmem:[#allocation2 + $0xc4] sm:$0xf]
    %v107 = vld [vmem:[#allocation2 + $0xc8] sm:$0xf]
    %v108 = vld [vmem:[#allocation2 + $0xcc] sm:$0xf]
    %v109 = vld [vmem:[#allocation2 + $0xd0] sm:$0xf]
    %v110 = vld [vmem:[#allocation2 + $0xd4] sm:$0xf]
    %v111 = vld [vmem:[#allocation2 + $0xd8] sm:$0xf]
    %v112 = vld [vmem:[#allocation2 + $0xdc] sm:$0xf]
    %v113 = vld [vmem:[#allocation2 + $0xe0] sm:$0xf]
    %v114 = vld [vmem:[#allocation2 + $0xe4] sm:$0xf]
    %v115 = vld [vmem:[#allocation2 + $0xe8] sm:$0xf]
    %v116 = vld [vmem:[#allocation2 + $0xec] sm:$0xf]
    %v117 = vld [vmem:[#allocation2 + $0xf0] sm:$0xf]
    %v118 = vld [vmem:[#allocation2 + $0xf4] sm:$0xf]
    %v119 = vld [vmem:[#allocation2 + $0xf8] sm:$0xf]
    %v120 = vld [vmem:[#allocation2 + $0xfc] sm:$0xf]
    %v121 = vld [vmem:[#allocation2 + $0x100] sm:$0xf]
    %v122 = vld [vmem:[#allocation2 + $0x104] sm:$0xf]
    %v123 = vld [vmem:[#allocation2 + $0x108] sm:$0xf]
    %v124 = vld [vmem:[#allocation2 + $0x10c] sm:$0xf]
    %v125 = vld [vmem:[#allocation2 + $0x110] sm:$0xf]
    %v126 = vld [vmem:[#allocation2 + $0x114] sm:$0xf]
    %v127 = vld [vmem:[#allocation2 + $0x118] sm:$0xf]
    %v128 = vld [vmem:[#allocation2 + $0x11c] sm:$0xf]
    %v129 = vld [vmem:[#allocation2 + $0x120] sm:$0xf]
    %v130 = vld [vmem:[#allocation2 + $0x124] sm:$0xf]
    %v131 = vld [vmem:[#allocation2 + $0x128] sm:$0xf]
    %v132 = vld [vmem:[#allocation2 + $0x12c] sm:$0xf]
    %v133 = vld [vmem:[#allocation2 + $0x130] sm:$0xf]
    %v134 = vld [vmem:[#allocation2 + $0x134] sm:$0xf]
    %v135 = vld [vmem:[#allocation2 + $0x138] sm:$0xf]
    %v136 = vld [vmem:[#allocation2 + $0x13c] sm:$0xf]
    %v137 = vld [vmem:[#allocation2 + $0x140] sm:$0xf]
    %v138 = vld [vmem:[#allocation2 + $0x144] sm:$0xf]
    %v139 = vld [vmem:[#allocation2 + $0x148] sm:$0xf]
    %v140 = vld [vmem:[#allocation2 + $0x14c] sm:$0xf]
    %v141 = vld [vmem:[#allocation2 + $0x150] sm:$0xf]
    %v142 = vld [vmem:[#allocation2 + $0x154] sm:$0xf]
    %v143 = vld [vmem:[#allocation2 + $0x158] sm:$0xf]
    %v144 = vld [vmem:[#allocation2 + $0x15c] sm:$0xf]
    %v145 = vld [vmem:[#allocation2 + $0x160] sm:$0xf]
    %v146 = vld [vmem:[#allocation2 + $0x164] sm:$0xf]
    %v147 = vld [vmem:[#allocation2 + $0x168] sm:$0xf]
    %v148 = vld [vmem:[#allocation2 + $0x16c] sm:$0xf]
    %v149 = vld [vmem:[#allocation2 + $0x170] sm:$0xf]
    %v150 = vld [vmem:[#allocation2 + $0x174] sm:$0xf]
    %v151 = vld [vmem:[#allocation2 + $0x178] sm:$0xf]
    %v152 = vld [vmem:[#allocation2 + $0x17c] sm:$0xf]
    %v153 = vld [vmem:[#allocation2 + $0x180] sm:$0xf]
    %v154 = vld [vmem:[#allocation2 + $0x184] sm:$0xf]
    %v155 = vld [vmem:[#allocation2 + $0x188] sm:$0xf]
    %v156 = vld [vmem:[#allocation2 + $0x18c] sm:$0xf]
    %v157 = vld [vmem:[#allocation2 + $0x190] sm:$0xf]
    %v158 = vld [vmem:[#allocation2 + $0x194] sm:$0xf]
    %v159 = vld [vmem:[#allocation2 + $0x198] sm:$0xf]
    %v160 = vld [vmem:[#allocation2 + $0x19c] sm:$0xf]
    %v161 = vld [vmem:[#allocation2 + $0x1a0] sm:$0xf]
    %v162 = vld [vmem:[#allocation2 + $0x1a4] sm:$0xf]
    %v163 = vld [vmem:[#allocation2 + $0x1a8] sm:$0xf]
    %v164 = vld [vmem:[#allocation2 + $0x1ac] sm:$0xf]
    %v165 = vld [vmem:[#allocation2 + $0x1b0] sm:$0xf]
    %v166 = vld [vmem:[#allocation2 + $0x1b4] sm:$0xf]
    %v167 = vld [vmem:[#allocation2 + $0x1b8] sm:$0xf]
    %v168 = vld [vmem:[#allocation2 + $0x1bc] sm:$0xf]
    %v169 = vld [vmem:[#allocation2 + $0x1c0] sm:$0xf]
    %v170 = vld [vmem:[#allocation2 + $0x1c4] sm:$0xf]
    %v171 = vld [vmem:[#allocation2 + $0x1c8] sm:$0xf]
    %v172 = vld [vmem:[#allocation2 + $0x1cc] sm:$0xf]
    %v173 = vld [vmem:[#allocation2 + $0x1d0] sm:$0xf]
    %v174 = vld [vmem:[#allocation2 + $0x1d4] sm:$0xf]
    %v175 = vld [vmem:[#allocation2 + $0x1d8] sm:$0xf]
    %v176 = vld [vmem:[#allocation2 + $0x1dc] sm:$0xf]
    %v177 = vld [vmem:[#allocation2 + $0x1e0] sm:$0xf]
    %v178 = vld [vmem:[#allocation2 + $0x1e4] sm:$0xf]
    %v179 = vld [vmem:[#allocation2 + $0x1e8] sm:$0xf]
    %v180 = vld [vmem:[#allocation2 + $0x1ec] sm:$0xf]
    %v181 = vld [vmem:[#allocation2 + $0x1f0] sm:$0xf]
    %v182 = vld [vmem:[#allocation2 + $0x1f4] sm:$0xf]
    %v183 = vld [vmem:[#allocation2 + $0x1f8] sm:$0xf]
    %v184 = vld [vmem:[#allocation2 + $0x1fc] sm:$0xf]
    %v185 = vld [vmem:[#allocation4] sm:$0x1]
    %v187 = vlaneseq
    %v188 = vshrl.u32 %v187, 7
    %v189 = vsub.s32 0, %v188
    %v190 = vrot.slane %v185, %v189
    %v208 = vunpack.c.l.b16 %v41
    %v209 = vunpack.c.h.b16 %v41
    %v210 = vunpack.c.l.b16 %v42
    %v211 = vunpack.c.h.b16 %v42
    %v212 = vunpack.c.l.b16 %v43
    %v213 = vunpack.c.h.b16 %v43
    %v214 = vunpack.c.l.b16 %v44
    %v215 = vunpack.c.h.b16 %v44
    %v216 = vunpack.c.l.b16 %v45
    %v217 = vunpack.c.h.b16 %v45
    %v218 = vunpack.c.l.b16 %v46
    %v219 = vunpack.c.h.b16 %v46
    %v220 = vunpack.c.l.b16 %v47
    %v221 = vunpack.c.h.b16 %v47
    %v222 = vunpack.c.l.b16 %v48
    %v223 = vunpack.c.h.b16 %v48
    %v224 = vunpack.c.l.b16 %v49
    %v225 = vunpack.c.h.b16 %v49
    %v226 = vunpack.c.l.b16 %v50
    %v227 = vunpack.c.h.b16 %v50
    %v228 = vunpack.c.l.b16 %v51
    %v229 = vunpack.c.h.b16 %v51
    %v230 = vunpack.c.l.b16 %v52
    %v231 = vunpack.c.h.b16 %v52
    %v232 = vunpack.c.l.b16 %v53
    %v233 = vunpack.c.h.b16 %v53
    %v234 = vunpack.c.l.b16 %v54
    %v235 = vunpack.c.h.b16 %v54
    %v236 = vunpack.c.l.b16 %v55
    %v237 = vunpack.c.h.b16 %v55
    %v238 = vunpack.c.l.b16 %v56
    %v239 = vunpack.c.h.b16 %v56
    %v240 = vpack.c.b16 %v216, %v208
    %v241 = vpack.c.b16 %v217, %v209
    %v242 = vpack.c.b16 %v218, %v210
    %v243 = vpack.c.b16 %v219, %v211
    %v244 = vpack.c.b16 %v220, %v212
    %v245 = vpack.c.b16 %v221, %v213
    %v246 = vpack.c.b16 %v222, %v214
    %v247 = vpack.c.b16 %v223, %v215
    %v248 = vpack.c.b16 %v232, %v224
    %v249 = vpack.c.b16 %v233, %v225
    %v250 = vpack.c.b16 %v234, %v226
    %v251 = vpack.c.b16 %v235, %v227
    %v252 = vpack.c.b16 %v236, %v228
    %v253 = vpack.c.b16 %v237, %v229
    %v254 = vpack.c.b16 %v238, %v230
    %v255 = vpack.c.b16 %v239, %v231
    %v400 = vunpack.c.l.b16 %v57
    %v401 = vunpack.c.l.b16 %v58
    %v402 = vunpack.c.l.b16 %v59
    %v403 = vunpack.c.l.b16 %v60
    %v404 = vunpack.c.l.b16 %v61
    %v405 = vunpack.c.l.b16 %v62
    %v406 = vunpack.c.l.b16 %v63
    %v407 = vunpack.c.l.b16 %v64
    %v408 = vunpack.c.l.b16 %v65
    %v409 = vunpack.c.l.b16 %v66
    %v410 = vunpack.c.l.b16 %v67
    %v411 = vunpack.c.l.b16 %v68
    %v412 = vunpack.c.l.b16 %v69
    %v413 = vunpack.c.l.b16 %v70
    %v414 = vunpack.c.l.b16 %v71
    %v415 = vunpack.c.l.b16 %v72
    %v416 = vunpack.c.l.b16 %v73
    %v417 = vunpack.c.l.b16 %v74
    %v418 = vunpack.c.l.b16 %v75
    %v419 = vunpack.c.l.b16 %v76
    %v420 = vunpack.c.l.b16 %v77
    %v421 = vunpack.c.l.b16 %v78
    %v422 = vunpack.c.l.b16 %v79
    %v423 = vunpack.c.l.b16 %v80
    %v424 = vunpack.c.l.b16 %v81
    %v425 = vunpack.c.l.b16 %v82
    %v426 = vunpack.c.l.b16 %v83
    %v427 = vunpack.c.l.b16 %v84
    %v428 = vunpack.c.l.b16 %v85
    %v429 = vunpack.c.l.b16 %v86
    %v430 = vunpack.c.l.b16 %v87
    %v431 = vunpack.c.l.b16 %v88
    %v432 = vunpack.c.l.b16 %v89
    %v433 = vunpack.c.l.b16 %v90
    %v434 = vunpack.c.l.b16 %v91
    %v435 = vunpack.c.l.b16 %v92
    %v436 = vunpack.c.l.b16 %v93
    %v437 = vunpack.c.l.b16 %v94
    %v438 = vunpack.c.l.b16 %v95
    %v439 = vunpack.c.l.b16 %v96
    %v440 = vunpack.c.l.b16 %v97
    %v441 = vunpack.c.l.b16 %v98
    %v442 = vunpack.c.l.b16 %v99
    %v443 = vunpack.c.l.b16 %v100
    %v444 = vunpack.c.l.b16 %v101
    %v445 = vunpack.c.l.b16 %v102
    %v446 = vunpack.c.l.b16 %v103
    %v447 = vunpack.c.l.b16 %v104
    %v448 = vunpack.c.l.b16 %v105
    %v449 = vunpack.c.l.b16 %v106
    %v450 = vunpack.c.l.b16 %v107
    %v451 = vunpack.c.l.b16 %v108
    %v452 = vunpack.c.l.b16 %v109
    %v453 = vunpack.c.l.b16 %v110
    %v454 = vunpack.c.l.b16 %v111
    %v455 = vunpack.c.l.b16 %v112
    %v456 = vunpack.c.l.b16 %v113
    %v457 = vunpack.c.l.b16 %v114
    %v458 = vunpack.c.l.b16 %v115
    %v459 = vunpack.c.l.b16 %v116
    %v460 = vunpack.c.l.b16 %v117
    %v461 = vunpack.c.l.b16 %v118
    %v462 = vunpack.c.l.b16 %v119
    %v463 = vunpack.c.l.b16 %v120
    %v464 = vunpack.c.l.b16 %v121
    %v465 = vunpack.c.l.b16 %v122
    %v466 = vunpack.c.l.b16 %v123
    %v467 = vunpack.c.l.b16 %v124
    %v468 = vunpack.c.l.b16 %v125
    %v469 = vunpack.c.l.b16 %v126
    %v470 = vunpack.c.l.b16 %v127
    %v471 = vunpack.c.l.b16 %v128
    %v472 = vunpack.c.l.b16 %v129
    %v473 = vunpack.c.l.b16 %v130
    %v474 = vunpack.c.l.b16 %v131
    %v475 = vunpack.c.l.b16 %v132
    %v476 = vunpack.c.l.b16 %v133
    %v477 = vunpack.c.l.b16 %v134
    %v478 = vunpack.c.l.b16 %v135
    %v479 = vunpack.c.l.b16 %v136
    %v480 = vunpack.c.l.b16 %v137
    %v481 = vunpack.c.l.b16 %v138
    %v482 = vunpack.c.l.b16 %v139
    %v483 = vunpack.c.l.b16 %v140
    %v484 = vunpack.c.l.b16 %v141
    %v485 = vunpack.c.l.b16 %v142
    %v486 = vunpack.c.l.b16 %v143
    %v487 = vunpack.c.l.b16 %v144
    %v488 = vunpack.c.l.b16 %v145
    %v489 = vunpack.c.l.b16 %v146
    %v490 = vunpack.c.l.b16 %v147
    %v491 = vunpack.c.l.b16 %v148
    %v492 = vunpack.c.l.b16 %v149
    %v493 = vunpack.c.l.b16 %v150
    %v494 = vunpack.c.l.b16 %v151
    %v495 = vunpack.c.l.b16 %v152
    %v496 = vunpack.c.l.b16 %v153
    %v497 = vunpack.c.l.b16 %v154
    %v498 = vunpack.c.l.b16 %v155
    %v499 = vunpack.c.l.b16 %v156
    %v500 = vunpack.c.l.b16 %v157
    %v501 = vunpack.c.l.b16 %v158
    %v502 = vunpack.c.l.b16 %v159
    %v503 = vunpack.c.l.b16 %v160
    %v504 = vunpack.c.l.b16 %v161
    %v505 = vunpack.c.l.b16 %v162
    %v506 = vunpack.c.l.b16 %v163
    %v507 = vunpack.c.l.b16 %v164
    %v508 = vunpack.c.l.b16 %v165
    %v509 = vunpack.c.l.b16 %v166
    %v510 = vunpack.c.l.b16 %v167
    %v511 = vunpack.c.l.b16 %v168
    %v512 = vunpack.c.l.b16 %v169
    %v513 = vunpack.c.l.b16 %v170
    %v514 = vunpack.c.l.b16 %v171
    %v515 = vunpack.c.l.b16 %v172
    %v516 = vunpack.c.l.b16 %v173
    %v517 = vunpack.c.l.b16 %v174
    %v518 = vunpack.c.l.b16 %v175
    %v519 = vunpack.c.l.b16 %v176
    %v520 = vunpack.c.l.b16 %v177
    %v521 = vunpack.c.l.b16 %v178
    %v522 = vunpack.c.l.b16 %v179
    %v523 = vunpack.c.l.b16 %v180
    %v524 = vunpack.c.l.b16 %v181
    %v525 = vunpack.c.l.b16 %v182
    %v526 = vunpack.c.l.b16 %v183
    %v527 = vunpack.c.l.b16 %v184
    %v528 = vpack.c.b16 %v401, %v400
    %v529 = vpack.c.b16 %v403, %v402
    %v530 = vpack.c.b16 %v405, %v404
    %v531 = vpack.c.b16 %v407, %v406
    %v532 = vpack.c.b16 %v409, %v408
    %v533 = vpack.c.b16 %v411, %v410
    %v534 = vpack.c.b16 %v413, %v412
    %v535 = vpack.c.b16 %v415, %v414
    %v536 = vpack.c.b16 %v417, %v416
    %v537 = vpack.c.b16 %v419, %v418
    %v538 = vpack.c.b16 %v421, %v420
    %v539 = vpack.c.b16 %v423, %v422
    %v540 = vpack.c.b16 %v425, %v424
    %v541 = vpack.c.b16 %v427, %v426
    %v542 = vpack.c.b16 %v429, %v428
    %v543 = vpack.c.b16 %v431, %v430
    %v544 = vpack.c.b16 %v433, %v432
    %v545 = vpack.c.b16 %v435, %v434
    %v546 = vpack.c.b16 %v437, %v436
    %v547 = vpack.c.b16 %v439, %v438
    %v548 = vpack.c.b16 %v441, %v440
    %v549 = vpack.c.b16 %v443, %v442
    %v550 = vpack.c.b16 %v445, %v444
    %v551 = vpack.c.b16 %v447, %v446
    %v552 = vpack.c.b16 %v449, %v448
    %v553 = vpack.c.b16 %v451, %v450
    %v554 = vpack.c.b16 %v453, %v452
    %v555 = vpack.c.b16 %v455, %v454
    %v556 = vpack.c.b16 %v457, %v456
    %v557 = vpack.c.b16 %v459, %v458
    %v558 = vpack.c.b16 %v461, %v460
    %v559 = vpack.c.b16 %v463, %v462
    %v560 = vpack.c.b16 %v465, %v464
    %v561 = vpack.c.b16 %v467, %v466
    %v562 = vpack.c.b16 %v469, %v468
    %v563 = vpack.c.b16 %v471, %v470
    %v564 = vpack.c.b16 %v473, %v472
    %v565 = vpack.c.b16 %v475, %v474
    %v566 = vpack.c.b16 %v477, %v476
    %v567 = vpack.c.b16 %v479, %v478
    %v568 = vpack.c.b16 %v481, %v480
    %v569 = vpack.c.b16 %v483, %v482
    %v570 = vpack.c.b16 %v485, %v484
    %v571 = vpack.c.b16 %v487, %v486
    %v572 = vpack.c.b16 %v489, %v488
    %v573 = vpack.c.b16 %v491, %v490
    %v574 = vpack.c.b16 %v493, %v492
    %v575 = vpack.c.b16 %v495, %v494
    %v576 = vpack.c.b16 %v497, %v496
    %v577 = vpack.c.b16 %v499, %v498
    %v578 = vpack.c.b16 %v501, %v500
    %v579 = vpack.c.b16 %v503, %v502
    %v580 = vpack.c.b16 %v505, %v504
    %v581 = vpack.c.b16 %v507, %v506
    %v582 = vpack.c.b16 %v509, %v508
    %v583 = vpack.c.b16 %v511, %v510
    %v584 = vpack.c.b16 %v513, %v512
    %v585 = vpack.c.b16 %v515, %v514
    %v586 = vpack.c.b16 %v517, %v516
    %v587 = vpack.c.b16 %v519, %v518
    %v588 = vpack.c.b16 %v521, %v520
    %v589 = vpack.c.b16 %v523, %v522
    %v590 = vpack.c.b16 %v525, %v524
    %v591 = vpack.c.b16 %v527, %v526
    %656 = vmatprep.subr.bf16.mxu0 0
    %657 = vmatpush1.bf16.msra.mxu0 %v528
    %658 = vmatprep.subr.bf16.mxu0 0
    %659 = vmatpush1.bf16.msra.mxu0 %v529
    %660 = vmatprep.subr.bf16.mxu0 0
    %661 = vmatpush1.bf16.msra.mxu0 %v530
    %662 = vmatprep.subr.bf16.mxu0 0
    %663 = vmatpush1.bf16.msra.mxu0 %v531
    %664 = vmatprep.subr.bf16.mxu0 0
    %665 = vmatpush1.bf16.msra.mxu0 %v532
    %666 = vmatprep.subr.bf16.mxu0 0
    %667 = vmatpush1.bf16.msra.mxu0 %v533
    %668 = vmatprep.subr.bf16.mxu0 0
    %669 = vmatpush1.bf16.msra.mxu0 %v534
    %670 = vmatprep.subr.bf16.mxu0 0
    %671 = vmatpush1.bf16.msra.mxu0 %v535
    %672 = vmatprep.subr.bf16.mxu0 0
    %673 = vmatpush1.bf16.msra.mxu0 %v536
    %674 = vmatprep.subr.bf16.mxu0 0
    %675 = vmatpush1.bf16.msra.mxu0 %v537
    %676 = vmatprep.subr.bf16.mxu0 0
    %677 = vmatpush1.bf16.msra.mxu0 %v538
    %678 = vmatprep.subr.bf16.mxu0 0
    %679 = vmatpush1.bf16.msra.mxu0 %v539
    %680 = vmatprep.subr.bf16.mxu0 0
    %681 = vmatpush1.bf16.msra.mxu0 %v540
    %682 = vmatprep.subr.bf16.mxu0 0
    %683 = vmatpush1.bf16.msra.mxu0 %v541
    %684 = vmatprep.subr.bf16.mxu0 0
    %685 = vmatpush1.bf16.msra.mxu0 %v542
    %686 = vmatprep.subr.bf16.mxu0 0
    %687 = vmatpush1.bf16.msra.mxu0 %v543
    %688 = vmatprep.mubr.bf16.mxu0 %v241
    %689 = vmatmul.mubr.bf16.gmra.mrb[0].mxu0 %v240
    %v690 = vpop.f32.mrb[0].mxu0
    %v691 = vadd.f32 %v190, %v690
    %v692 = vpop.f32.mrb[0].mxu0
    %v693 = vpop.f32.mrb[0].mxu0
    %v694 = vadd.f32 %v190, %v693
    %v695 = vpop.f32.mrb[0].mxu0
    %696 = vmatprep.mubr.bf16.mxu0 %v249
    %697 = vmatmul.mubr.bf16.gmra.mrb[0].mxu0 %v248
    %v698 = vpop.f32.mrb[0].mxu0
    %v699 = vadd.f32 %v190, %v698
    %v700 = vpop.f32.mrb[0].mxu0
    %v701 = vpop.f32.mrb[0].mxu0
    %v702 = vadd.f32 %v190, %v701
    %v703 = vpop.f32.mrb[0].mxu0
    %704 = vdwg.mxu0
    %705 = vmatprep.subr.bf16.mxu0 0
    %706 = vmatpush1.bf16.msra.mxu0 %v544
    %707 = vmatprep.subr.bf16.mxu0 0
    %708 = vmatpush1.bf16.msra.mxu0 %v545
    %709 = vmatprep.subr.bf16.mxu0 0
    %710 = vmatpush1.bf16.msra.mxu0 %v546
    %711 = vmatprep.subr.bf16.mxu0 0
    %712 = vmatpush1.bf16.msra.mxu0 %v547
    %713 = vmatprep.subr.bf16.mxu0 0
    %714 = vmatpush1.bf16.msra.mxu0 %v548
    %715 = vmatprep.subr.bf16.mxu0 0
    %716 = vmatpush1.bf16.msra.mxu0 %v549
    %717 = vmatprep.subr.bf16.mxu0 0
    %718 = vmatpush1.bf16.msra.mxu0 %v550
    %719 = vmatprep.subr.bf16.mxu0 0
    %720 = vmatpush1.bf16.msra.mxu0 %v551
    %721 = vmatprep.subr.bf16.mxu0 0
    %722 = vmatpush1.bf16.msra.mxu0 %v552
    %723 = vmatprep.subr.bf16.mxu0 0
    %724 = vmatpush1.bf16.msra.mxu0 %v553
    %725 = vmatprep.subr.bf16.mxu0 0
    %726 = vmatpush1.bf16.msra.mxu0 %v554
    %727 = vmatprep.subr.bf16.mxu0 0
    %728 = vmatpush1.bf16.msra.mxu0 %v555
    %729 = vmatprep.subr.bf16.mxu0 0
    %730 = vmatpush1.bf16.msra.mxu0 %v556
    %731 = vmatprep.subr.bf16.mxu0 0
    %732 = vmatpush1.bf16.msra.mxu0 %v557
    %733 = vmatprep.subr.bf16.mxu0 0
    %734 = vmatpush1.bf16.msra.mxu0 %v558
    %735 = vmatprep.subr.bf16.mxu0 0
    %736 = vmatpush1.bf16.msra.mxu0 %v559
    %737 = vmatprep.mubr.bf16.mxu0 %v243
    %738 = vmatmul.mubr.bf16.gmra.mrb[0].mxu0 %v242
    %v739 = vpop.f32.mrb[0].mxu0
    %v740 = vadd.f32 %v691, %v739
    %v741 = vpop.f32.mrb[0].mxu0
    %v742 = vpop.f32.mrb[0].mxu0
    %v743 = vadd.f32 %v694, %v742
    %v744 = vpop.f32.mrb[0].mxu0
    %745 = vmatprep.mubr.bf16.mxu0 %v251
    %746 = vmatmul.mubr.bf16.gmra.mrb[0].mxu0 %v250
    %v747 = vpop.f32.mrb[0].mxu0
    %v748 = vadd.f32 %v699, %v747
    %v749 = vpop.f32.mrb[0].mxu0
    %v750 = vpop.f32.mrb[0].mxu0
    %v751 = vadd.f32 %v702, %v750
    %v752 = vpop.f32.mrb[0].mxu0
    %753 = vdwg.mxu0
    %754 = vmatprep.subr.bf16.mxu0 0
    %755 = vmatpush1.bf16.msra.mxu0 %v560
    %756 = vmatprep.subr.bf16.mxu0 0
    %757 = vmatpush1.bf16.msra.mxu0 %v561
    %758 = vmatprep.subr.bf16.mxu0 0
    %759 = vmatpush1.bf16.msra.mxu0 %v562
    %760 = vmatprep.subr.bf16.mxu0 0
    %761 = vmatpush1.bf16.msra.mxu0 %v563
    %762 = vmatprep.subr.bf16.mxu0 0
    %763 = vmatpush1.bf16.msra.mxu0 %v564
    %764 = vmatprep.subr.bf16.mxu0 0
    %765 = vmatpush1.bf16.msra.mxu0 %v565
    %766 = vmatprep.subr.bf16.mxu0 0
    %767 = vmatpush1.bf16.msra.mxu0 %v566
    %768 = vmatprep.subr.bf16.mxu0 0
    %769 = vmatpush1.bf16.msra.mxu0 %v567
    %770 = vmatprep.subr.bf16.mxu0 0
    %771 = vmatpush1.bf16.msra.mxu0 %v568
    %772 = vmatprep.subr.bf16.mxu0 0
    %773 = vmatpush1.bf16.msra.mxu0 %v569
    %774 = vmatprep.subr.bf16.mxu0 0
    %775 = vmatpush1.bf16.msra.mxu0 %v570
    %776 = vmatprep.subr.bf16.mxu0 0
    %777 = vmatpush1.bf16.msra.mxu0 %v571
    %778 = vmatprep.subr.bf16.mxu0 0
    %779 = vmatpush1.bf16.msra.mxu0 %v572
    %780 = vmatprep.subr.bf16.mxu0 0
    %781 = vmatpush1.bf16.msra.mxu0 %v573
    %782 = vmatprep.subr.bf16.mxu0 0
    %783 = vmatpush1.bf16.msra.mxu0 %v574
    %784 = vmatprep.subr.bf16.mxu0 0
    %785 = vmatpush1.bf16.msra.mxu0 %v575
    %786 = vmatprep.mubr.bf16.mxu0 %v245
    %787 = vmatmul.mubr.bf16.gmra.mrb[0].mxu0 %v244
    %v788 = vpop.f32.mrb[0].mxu0
    %v789 = vadd.f32 %v740, %v788
    %v790 = vpop.f32.mrb[0].mxu0
    %v791 = vpop.f32.mrb[0].mxu0
    %v792 = vadd.f32 %v743, %v791
    %v793 = vpop.f32.mrb[0].mxu0
    %794 = vmatprep.mubr.bf16.mxu0 %v253
    %795 = vmatmul.mubr.bf16.gmra.mrb[0].mxu0 %v252
    %v796 = vpop.f32.mrb[0].mxu0
    %v797 = vadd.f32 %v748, %v796
    %v798 = vpop.f32.mrb[0].mxu0
    %v799 = vpop.f32.mrb[0].mxu0
    %v800 = vadd.f32 %v751, %v799
    %v801 = vpop.f32.mrb[0].mxu0
    %802 = vdwg.mxu0
    %803 = vmatprep.subr.bf16.mxu0 0
    %804 = vmatpush1.bf16.msra.mxu0 %v576
    %805 = vmatprep.subr.bf16.mxu0 0
    %806 = vmatpush1.bf16.msra.mxu0 %v577
    %807 = vmatprep.subr.bf16.mxu0 0
    %808 = vmatpush1.bf16.msra.mxu0 %v578
    %809 = vmatprep.subr.bf16.mxu0 0
    %810 = vmatpush1.bf16.msra.mxu0 %v579
    %811 = vmatprep.subr.bf16.mxu0 0
    %812 = vmatpush1.bf16.msra.mxu0 %v580
    %813 = vmatprep.subr.bf16.mxu0 0
    %814 = vmatpush1.bf16.msra.mxu0 %v581
    %815 = vmatprep.subr.bf16.mxu0 0
    %816 = vmatpush1.bf16.msra.mxu0 %v582
    %817 = vmatprep.subr.bf16.mxu0 0
    %818 = vmatpush1.bf16.msra.mxu0 %v583
    %819 = vmatprep.subr.bf16.mxu0 0
    %820 = vmatpush1.bf16.msra.mxu0 %v584
    %821 = vmatprep.subr.bf16.mxu0 0
    %822 = vmatpush1.bf16.msra.mxu0 %v585
    %823 = vmatprep.subr.bf16.mxu0 0
    %824 = vmatpush1.bf16.msra.mxu0 %v586
    %825 = vmatprep.subr.bf16.mxu0 0
    %826 = vmatpush1.bf16.msra.mxu0 %v587
    %827 = vmatprep.subr.bf16.mxu0 0
    %828 = vmatpush1.bf16.msra.mxu0 %v588
    %829 = vmatprep.subr.bf16.mxu0 0
    %830 = vmatpush1.bf16.msra.mxu0 %v589
    %831 = vmatprep.subr.bf16.mxu0 0
    %832 = vmatpush1.bf16.msra.mxu0 %v590
    %833 = vmatprep.subr.bf16.mxu0 0
    %834 = vmatpush1.bf16.msra.mxu0 %v591
    %835 = vmatprep.mubr.bf16.mxu0 %v247
    %836 = vmatmul.mubr.bf16.gmra.mrb[0].mxu0 %v246
    %v837 = vpop.f32.mrb[0].mxu0
    %v838 = vadd.f32 %v789, %v837
    %v839 = vpop.f32.mrb[0].mxu0
    %v840 = vpop.f32.mrb[0].mxu0
    %v841 = vadd.f32 %v792, %v840
    %v842 = vpop.f32.mrb[0].mxu0
    %843 = vmatprep.mubr.bf16.mxu0 %v255
    %844 = vmatmul.mubr.bf16.gmra.mrb[0].mxu0 %v254
    %v845 = vpop.f32.mrb[0].mxu0
    %v846 = vadd.f32 %v797, %v845
    %v847 = vpop.f32.mrb[0].mxu0
    %v848 = vpop.f32.mrb[0].mxu0
    %v849 = vadd.f32 %v800, %v848
    %v850 = vpop.f32.mrb[0].mxu0
    %851 = vdwg.mxu0
    %vm852 = vcmp.ge.f32.partialorder %v838, 0.0
    %vm853 = vcmp.ge.f32.partialorder %v841, 0.0
    %vm854 = vcmp.ge.f32.partialorder %v846, 0.0
    %vm855 = vcmp.ge.f32.partialorder %v849, 0.0
    %v856 = vmul.f32 %v838, 0.01
    %v857 = vmul.f32 %v841, 0.01
    %v858 = vmul.f32 %v846, 0.01
    %v859 = vmul.f32 %v849, 0.01
    %v860 = vsel %vm852, %v838, %v856
    %v861 = vsel %vm853, %v841, %v857
    %v862 = vsel %vm854, %v846, %v858
    %v863 = vsel %vm855, %v849, %v859
    %v864 = vpack.c.bf16 %v861, %v860
    %v865 = vpack.c.bf16 %v863, %v862
    %v868 = vunpack.c.l.b16 %v864
    %v869 = vunpack.c.h.b16 %v864
    %v870 = vunpack.c.l.b16 %v865
    %v871 = vunpack.c.h.b16 %v865
    %v872 = vpack.c.b16 %v868, %v868
    %v873 = vpack.c.b16 %v869, %v869
    %v874 = vpack.c.b16 %v870, %v870
    %v875 = vpack.c.b16 %v871, %v871
    %880 = vst [vmem:[%s3] sm:$0xf] %v872
    %881 = vst [vmem:[%s3 + $0x4] sm:$0xf] %v873
    %882 = vst [vmem:[%s3 + $0x8] sm:$0xf] %v874
    %883 = vst [vmem:[%s3 + $0xc] sm:$0xf] %v875
    // Predicated region
    $region22: #{encoder_forward.4} parent=1 // pred_check
      _
    $region23: #{encoder_forward.4} parent=1 // pred_check_branch
      %885 = sbr.rel (0) target = $region25
    $region24: #{encoder_forward.4} parent=1 // pred_region
      _
    $region25: #{encoder_forward.4} parent=1 // pred_fallthru
      _
    // Predicated region
    $region26: #{encoder_forward.4} parent=1 // pred_check
      _
    $region27: #{encoder_forward.4} parent=1 // pred_check_branch
      %887 = sbr.rel (0) target = $region29
    $region28: #{encoder_forward.4} parent=1 // pred_region
      _
    $region29: #{encoder_forward.4} parent=1 // pred_fallthru
      _
    %888 = vsyncpa [#allocation3], 1
    %889 = vsyncpa [#allocation5], 1

// kernel: encoder_forward.5
$region0: #{encoder_forward.5}
  #allocation0 [shape = 'u32[]', space=smem, size = 0x4, offset = 0x4, fixed_abs, tag = 'smem constant byte address 0x4 - core index']
  #allocation1 [shape = 'u32[144,128]{1,0:T(1,128)}', space=vmem, size = 0x12000, scoped, tag = 'internal scratch']
  #allocation2 [shape = 'f32[2,128]{1,0:T(2,128)}', space=vmem, size = 0x400, scoped, tag = 'scratch operand']
  %s0 = inlined_call_operand.vmem [shape: bf16[2,2048], index: 0, kind: input, shape index: {}]
  %s1 = inlined_call_operand.hbm [shape: bf16[2048,1024], index: 1, kind: input, shape index: {}]
  %s2 = inlined_call_operand.hbm [shape: f32[1,1024], index: 2, kind: input, shape index: {}]
  %s3 = inlined_call_operand.hbm [shape: bf16[1024,128], index: 3, kind: input, shape index: {}]
  %s4 = inlined_call_operand.hbm [shape: f32[1,128], index: 4, kind: input, shape index: {}]
  %s5 = inlined_call_operand.hbm [shape: f32[2,128], index: 5, kind: output, shape index: {}]
  %s6 = sld [smem:[#allocation0]]
  $region77: #{encoder_forward.5} parent=0
    _
  %s8 = ssub.s32 1, %s6
  %s9 = scalar_select 0, %s8, %s6
  $region1: #{encoder_forward.5} parent=0
    #allocation3 [shape = 'u8[2097152]{0}', space=vmem, size = 0x200000, scoped, tag = 'input window, operand 1']
    #allocation4 [shape = 's32[2]{0}', space=sflag, size = 0x8, scoped, tag = 'scoped memory for encoder_forward.5']
    #allocation5 [shape = 's32[2]{0}', space=sflag, size = 0x8, scoped, tag = 'scoped memory for encoder_forward.5']
    #allocation6 [shape = 'u8[2048]{0}', space=vmem, size = 0x800, scoped, tag = 'input window, operand 2']
    #allocation7 [shape = 's32[2]{0}', space=sflag, size = 0x8, scoped, tag = 'scoped memory for encoder_forward.5']
    #allocation8 [shape = 'u8[131072]{0}', space=vmem, size = 0x20000, scoped, tag = 'input window, operand 3']
    #allocation9 [shape = 'u8[512]{0}', space=vmem, size = 0x400, scoped, tag = 'input window, operand 4, single buffered']
    #allocation10 [shape = 's32[1]{0}', space=sflag, size = 0x4, scoped, tag = 'scoped memory for encoder_forward.5']
    #allocation11 [shape = 'u8[1024]{0}', space=vmem, size = 0x400, scoped, tag = 'output window, operand 0, single buffered']
    %10 = vsyncpa [#allocation4], 0
    %s11 = scalar_lea.sflag [#allocation4], 1
    %12 = vsyncpa %s11, 0
    %13 = vsyncpa [#allocation7], 0
    %s14 = scalar_lea.sflag [#allocation7], 1
    %15 = vsyncpa %s14, 0
    %16 = vsyncpa [#allocation10], 0
    %17 = vsyncpa [#allocation5], 0
    loop: start=0, step=1, limit=6
    $region2: #{encoder_forward.5} parent=1 // loop_pre_header
      _
    $region3: #{encoder_forward.5} parent=1 // loop_header
      %s19 = sphi 0, %s23
      %p20 = scmp.ge.s32.totalorder %s19, 6
      %s27 = sphi 0, %s27
      %s29 = sphi 0, %s27
      %s30 = sphi 0, %s29
      %s44 = sphi 0, %s30
      %s50 = sphi 0, %s52
      %s53 = sphi 0, %s50
      %s54 = sphi 0, %s53
      %s70 = sphi 0, %s54
      %s76 = sphi 0, %s78
      %s79 = sphi 0, %s76
      %s80 = sphi 0, %s79
      %s96 = sphi 0, %s80
      %s102 = sphi 0, %s104
      %s105 = sphi 0, %s102
      %s106 = sphi 0, %s105
      %s122 = sphi 0, %s106
      %s126 = sphi 0, %s126
      %s128 = sphi 0, %s126
      %s129 = sphi 0, %s128
      %s143 = sphi 0, %s129
      %s147 = sphi 0, %s147
      %s149 = sphi 0, %s147
      %s150 = sphi 0, %s149
      %s164 = sphi 0, %s150
    $region4: #{encoder_forward.5} parent=1 // loop_header_branch
      %22 = sbr.rel (%p20) target = $region8
    $region5: #{encoder_forward.5} parent=1 // loop_body
      %s24 = ssub.s32 %s19, 1
      %s25 = ssub.s32 %s19, 2
      %s26 = sadd.s32 %s19, 1
      %s28 = sadd.s32 %s27, 1
      %p31 = scmp.eq.s32.totalorder %s19, 3
      %p32 = scmp.ne.s32.totalorder %s27, %s29
      %p33 = scmp.eq.s32.totalorder %s19, 0
      %p34 = por %p32, %p33
      %p35 = scmp.ne.s32.totalorder %s27, %s29
      %p36 = scmp.eq.s32.totalorder %s24, 3
      %p37 = por %p35, %p36
      %p38 = scmp.ne.s32.totalorder %s29, %s30
      %p39 = scmp.eq.s32.totalorder %s24, 0
      %p40 = por %p38, %p39
      %p41 = scmp.ne.s32.totalorder %s29, %s30
      %p42 = scmp.eq.s32.totalorder %s25, 3
      %p43 = por %p41, %p42
      %p45 = scmp.ne.s32.totalorder %s30, %s44
      %p46 = scmp.eq.s32.totalorder %s25, 0
      %p47 = por %p45, %p46
      %s48 = ssub.s32 %s19, %s26
      %p49 = scmp.eq.s32.totalorder %s48, 0
      %s51 = sadd.s32 %s50, 1
      %s52 = scalar_select %p49, %s50, %s51
      %p55 = pneg %p49
      %p56 = scmp.eq.s32.totalorder %s19, 3
      %p57 = por %p55, %p56
      %p58 = scmp.ne.s32.totalorder %s50, %s53
      %p59 = scmp.eq.s32.totalorder %s19, 0
      %p60 = por %p58, %p59
      %p61 = scmp.ne.s32.totalorder %s50, %s53
      %p62 = scmp.eq.s32.totalorder %s24, 3
      %p63 = por %p61, %p62
      %p64 = scmp.ne.s32.totalorder %s53, %s54
      %p65 = scmp.eq.s32.totalorder %s24, 0
      %p66 = por %p64, %p65
      %p67 = scmp.ne.s32.totalorder %s53, %s54
      %p68 = scmp.eq.s32.totalorder %s25, 3
      %p69 = por %p67, %p68
      %p71 = scmp.ne.s32.totalorder %s54, %s70
      %p72 = scmp.eq.s32.totalorder %s25, 0
      %p73 = por %p71, %p72
      %s74 = ssub.s32 %s19, %s26
      %p75 = scmp.eq.s32.totalorder %s74, 0
      %s77 = sadd.s32 %s76, 1
      %s78 = scalar_select %p75, %s76, %s77
      %p81 = pneg %p75
      %p82 = scmp.eq.s32.totalorder %s19, 3
      %p83 = por %p81, %p82
      %p84 = scmp.ne.s32.totalorder %s76, %s79
      %p85 = scmp.eq.s32.totalorder %s19, 0
      %p86 = por %p84, %p85
      %p87 = scmp.ne.s32.totalorder %s76, %s79
      %p88 = scmp.eq.s32.totalorder %s24, 3
      %p89 = por %p87, %p88
      %p90 = scmp.ne.s32.totalorder %s79, %s80
      %p91 = scmp.eq.s32.totalorder %s24, 0
      %p92 = por %p90, %p91
      %p93 = scmp.ne.s32.totalorder %s79, %s80
      %p94 = scmp.eq.s32.totalorder %s25, 3
      %p95 = por %p93, %p94
      %p97 = scmp.ne.s32.totalorder %s80, %s96
      %p98 = scmp.eq.s32.totalorder %s25, 0
      %p99 = por %p97, %p98
      %s100 = ssub.s32 %s19, %s26
      %p101 = scmp.eq.s32.totalorder %s100, 0
      %s103 = sadd.s32 %s102, 1
      %s104 = scalar_select %p101, %s102, %s103
      %p107 = pneg %p101
      %p108 = scmp.eq.s32.totalorder %s19, 3
      %p109 = por %p107, %p108
      %p110 = scmp.ne.s32.totalorder %s102, %s105
      %p111 = scmp.eq.s32.totalorder %s19, 0
      %p112 = por %p110, %p111
      %p113 = scmp.ne.s32.totalorder %s102, %s105
      %p114 = scmp.eq.s32.totalorder %s24, 3
      %p115 = por %p113, %p114
      %p116 = scmp.ne.s32.totalorder %s105, %s106
      %p117 = scmp.eq.s32.totalorder %s24, 0
      %p118 = por %p116, %p117
      %p119 = scmp.ne.s32.totalorder %s105, %s106
      %p120 = scmp.eq.s32.totalorder %s25, 3
      %p121 = por %p119, %p120
      %p123 = scmp.ne.s32.totalorder %s106, %s122
      %p124 = scmp.eq.s32.totalorder %s25, 0
      %p125 = por %p123, %p124
      %s127 = sadd.s32 %s126, 1
      %p130 = scmp.eq.s32.totalorder %s19, 3
      %p131 = scmp.ne.s32.totalorder %s126, %s128
      %p132 = scmp.eq.s32.totalorder %s19, 0
      %p133 = por %p131, %p132
      %p134 = scmp.ne.s32.totalorder %s126, %s128
      %p135 = scmp.eq.s32.totalorder %s24, 3
      %p136 = por %p134, %p135
      %p137 = scmp.ne.s32.totalorder %s128, %s129
      %p138 = scmp.eq.s32.totalorder %s24, 0
      %p139 = por %p137, %p138
      %p140 = scmp.ne.s32.totalorder %s128, %s129
      %p141 = scmp.eq.s32.totalorder %s25, 3
      %p142 = por %p140, %p141
      %p144 = scmp.ne.s32.totalorder %s129, %s143
      %p145 = scmp.eq.s32.totalorder %s25, 0
      %p146 = por %p144, %p145
      %s148 = sadd.s32 %s147, 1
      %p151 = scmp.eq.s32.totalorder %s19, 3
      %p152 = scmp.ne.s32.totalorder %s147, %s149
      %p153 = scmp.eq.s32.totalorder %s19, 0
      %p154 = por %p152, %p153
      %p155 = scmp.ne.s32.totalorder %s147, %s149
      %p156 = scmp.eq.s32.totalorder %s24, 3
      %p157 = por %p155, %p156
      %p158 = scmp.ne.s32.totalorder %s149, %s150
      %p159 = scmp.eq.s32.totalorder %s24, 0
      %p160 = por %p158, %p159
      %p161 = scmp.ne.s32.totalorder %s149, %s150
      %p162 = scmp.eq.s32.totalorder %s25, 3
      %p163 = por %p161, %p162
      %p165 = scmp.ne.s32.totalorder %s150, %s164
      %p166 = scmp.eq.s32.totalorder %s25, 0
      %p167 = por %p165, %p166
      %p168 = scmp.le.s32.totalorder 1, %s19
      %p169 = scmp.lt.s32.totalorder %s19, 5
      %p170 = pnand %p168, %p169
      %p171 = pneg %p170
      // Predicated region
      $region9: #{encoder_forward.5} parent=5 // pred_check
        _
      $region10: #{encoder_forward.5} parent=5 // pred_check_branch
        %173 = sbr.rel (%p170) target = $region12
      $region11: #{encoder_forward.5} parent=5 // pred_region
        %s174 = ssub.s32 %s19, 1
        // Predicated region
        $region13: #{encoder_forward.5} parent=11 // pred_check
          %p175 = pneg %p40
        $region14: #{encoder_forward.5} parent=11 // pred_check_branch
          %177 = sbr.rel (%p175) target = $region16
        $region15: #{encoder_forward.5} parent=11 // pred_region
          _
        $region16: #{encoder_forward.5} parent=11 // pred_fallthru
          _
        // Predicated region
        $region17: #{encoder_forward.5} parent=11 // pred_check
          %p178 = pneg %p139
        $region18: #{encoder_forward.5} parent=11 // pred_check_branch
          %180 = sbr.rel (%p178) target = $region20
        $region19: #{encoder_forward.5} parent=11 // pred_region
          %s182 = ssub.s32 16, 16
          %183 = vsyncadd [#allocation10], %s182
          %s185 = sshll.u32 [#allocation9], 4
          %s186 = int_to_ptr.vmem [resolvable:$true] %s185
          %188 = dma.hbm_to_vmem [thread:$0]  %s4, 16, %s186, [#allocation10]
        $region20: #{encoder_forward.5} parent=11 // pred_fallthru
          _
      $region12: #{encoder_forward.5} parent=5 // pred_fallthru
        _
      %p189 = scmp.lt.s32.totalorder %s19, 4
      // Predicated region
      $region21: #{encoder_forward.5} parent=5 // pred_check
        %p190 = pneg %p189
      $region22: #{encoder_forward.5} parent=5 // pred_check_branch
        %192 = sbr.rel (%p190) target = $region24
      $region23: #{encoder_forward.5} parent=5 // pred_region
        // Predicated region
        $region25: #{encoder_forward.5} parent=23 // pred_check
          %p193 = pneg %p60
        $region26: #{encoder_forward.5} parent=23 // pred_check_branch
          %195 = sbr.rel (%p193) target = $region28
        $region27: #{encoder_forward.5} parent=23 // pred_region
          %s196 = sand.u32 %s50, 1
          %s197 = scalar_lea.sflag [#allocation4], %s196
          %s198 = sand.u32 %s50, 1
          %s199 = smul.addr %s198, 2048
          %s200 = scalar_lea.vmem [#allocation3], %s199
          %s201 = smul.u32 2, %s19
          %s203 = ssub.s32 32768, 32768
          %204 = vsyncadd %s197, %s203
          %s205 = smul.addr %s201, 64
          %s206 = scalar_lea.hbm %s1, %s205
          %s207 = sshll.u32 %s200, 4
          %s208 = int_to_ptr.vmem [resolvable:$true] %s207
          %213 = dma.hbm_to_vmem [thread:$0]  %s206, 32768, %s208, %s197, 512, 128, 8
        $region28: #{encoder_forward.5} parent=23 // pred_fallthru
          _
        // Predicated region
        $region29: #{encoder_forward.5} parent=23 // pred_check
          %p214 = pneg %p86
        $region30: #{encoder_forward.5} parent=23 // pred_check_branch
          %216 = sbr.rel (%p214) target = $region32
        $region31: #{encoder_forward.5} parent=23 // pred_region
          %s217 = sand.u32 %s19, 1
          %s218 = scalar_lea.sflag [#allocation7], %s217
          %s219 = sand.u32 %s76, 1
          %s220 = smul.addr %s219, 2
          %s221 = scalar_lea.vmem [#allocation6], %s220
          %s222 = smul.u32 2, %s19
          %s224 = ssub.s32 32, 32
          %225 = vsyncadd %s218, %s224
          %s226 = smul.addr %s222, 16
          %s227 = scalar_lea.hbm %s2, %s226
          %s229 = sshll.u32 %s221, 4
          %s230 = int_to_ptr.vmem [resolvable:$true] %s229
          %232 = dma.hbm_to_vmem [thread:$0]  %s227, 32, %s230, %s218
        $region32: #{encoder_forward.5} parent=23 // pred_fallthru
          _
        // Predicated region
        $region33: #{encoder_forward.5} parent=23 // pred_check
          %p233 = pneg %p112
        $region34: #{encoder_forward.5} parent=23 // pred_check_branch
          %235 = sbr.rel (%p233) target = $region36
        $region35: #{encoder_forward.5} parent=23 // pred_region
          %s236 = sand.u32 %s19, 1
          %s237 = scalar_lea.sflag [#allocation7], %s236
          %s238 = sand.u32 %s102, 1
          %s239 = smul.addr %s238, 128
          %s240 = scalar_lea.vmem [#allocation8], %s239
          %s241 = smul.u32 32, %s19
          %s243 = ssub.s32 2048, 2048
          %244 = vsyncadd %s237, %s243
          %s245 = smul.addr %s241, 64
          %s246 = scalar_lea.hbm %s3, %s245
          %s247 = sshll.u32 %s240, 4
          %s248 = int_to_ptr.vmem [resolvable:$true] %s247
          %253 = dma.hbm_to_vmem [thread:$0]  %s246, 2048, %s248, %s237, 64, 64, 4
        $region36: #{encoder_forward.5} parent=23 // pred_fallthru
          _
      $region24: #{encoder_forward.5} parent=5 // pred_fallthru
        _
      %p254 = scmp.le.s32.totalorder 1, %s19
      %p255 = scmp.lt.s32.totalorder %s19, 5
      %p256 = pnand %p254, %p255
      %p257 = pneg %p256
      // Predicated region
      $region37: #{encoder_forward.5} parent=5 // pred_check
        _
      $region38: #{encoder_forward.5} parent=5 // pred_check_branch
        %259 = sbr.rel (%p256) target = $region40
      $region39: #{encoder_forward.5} parent=5 // pred_region
        %s260 = ssub.s32 %s19, 1
        %s261 = sand.u32 %s53, 1
        %s262 = scalar_lea.sflag [#allocation4], %s261
        %s263 = sand.u32 %s53, 1
        %s264 = smul.addr %s263, 2048
        %s265 = scalar_lea.vmem [#allocation3], %s264
        // Predicated region
        $region41: #{encoder_forward.5} parent=39 // pred_check
          %p266 = pneg %p66
        $region42: #{encoder_forward.5} parent=39 // pred_check_branch
          %268 = sbr.rel (%p266) target = $region44
        $region43: #{encoder_forward.5} parent=39 // pred_region
          %269 = dma.done %s262, 32768
        $region44: #{encoder_forward.5} parent=39 // pred_fallthru
          _
        %s270 = sand.u32 %s24, 1
        %s271 = scalar_lea.sflag [#allocation7], %s270
        %s272 = sand.u32 %s79, 1
        %s273 = smul.addr %s272, 2
        %s274 = scalar_lea.vmem [#allocation6], %s273
        // Predicated region
        $region45: #{encoder_forward.5} parent=39 // pred_check
          %p275 = pneg %p92
        $region46: #{encoder_forward.5} parent=39 // pred_check_branch
          %277 = sbr.rel (%p275) target = $region48
        $region47: #{encoder_forward.5} parent=39 // pred_region
          %278 = dma.done %s271, 32
        $region48: #{encoder_forward.5} parent=39 // pred_fallthru
          _
        %s279 = sand.u32 %s24, 1
        %s280 = scalar_lea.sflag [#allocation7], %s279
        %s281 = sand.u32 %s105, 1
        %s282 = smul.addr %s281, 128
        %s283 = scalar_lea.vmem [#allocation8], %s282
        // Predicated region
        $region49: #{encoder_forward.5} parent=39 // pred_check
          %p284 = pneg %p118
        $region50: #{encoder_forward.5} parent=39 // pred_check_branch
          %286 = sbr.rel (%p284) target = $region52
        $region51: #{encoder_forward.5} parent=39 // pred_region
          %287 = dma.done %s280, 2048
        $region52: #{encoder_forward.5} parent=39 // pred_fallthru
          _
        // Predicated region
        $region53: #{encoder_forward.5} parent=39 // pred_check
          %p288 = pneg %p139
        $region54: #{encoder_forward.5} parent=39 // pred_check_branch
          %290 = sbr.rel (%p288) target = $region56
        $region55: #{encoder_forward.5} parent=39 // pred_region
          %291 = dma.done [#allocation10], 16
        $region56: #{encoder_forward.5} parent=39 // pred_fallthru
          _
        %p292 = pneg %p40
        %p293 = pneg %p37
        %s294 = sand.u32 %s53, 1
        %s295 = scalar_lea.sflag [#allocation4], %s294
        %s296 = sand.u32 %s53, 1
        %s297 = smul.addr %s296, 2048
        %s298 = scalar_lea.vmem [#allocation3], %s297
        %p299 = pneg %p66
        %p300 = pneg %p63
        %s301 = sand.u32 %s24, 1
        %s302 = scalar_lea.sflag [#allocation7], %s301
        %s303 = sand.u32 %s79, 1
        %s304 = smul.addr %s303, 2
        %s305 = scalar_lea.vmem [#allocation6], %s304
        %p306 = pneg %p92
        %p307 = pneg %p89
        %s308 = sand.u32 %s24, 1
        %s309 = scalar_lea.sflag [#allocation7], %s308
        %s310 = sand.u32 %s105, 1
        %s311 = smul.addr %s310, 128
        %s312 = scalar_lea.vmem [#allocation8], %s311
        %p313 = pneg %p118
        %p314 = pneg %p115
        %p315 = pneg %p139
        %p316 = pneg %p136
        %p317 = pneg %p160
        %p318 = pneg %p157
        %s319 = smul.u32 2, %s24
        %s320 = smul.u32 2, %s24
        %s321 = smul.u32 32, %s24
        %p323 = scmp.eq.s32.totalorder %s24, 0
        // Predicated region
        $region57: #{encoder_forward.5} parent=39 // pred_check
          %p324 = pneg %p323
        $region58: #{encoder_forward.5} parent=39 // pred_check_branch
          %326 = sbr.rel (%p324) target = $region60
        $region59: #{encoder_forward.5} parent=39 // pred_region
          %327 = vst [vmem:[#allocation2] sm:$0x3] 0.0
        $region60: #{encoder_forward.5} parent=39 // pred_fallthru
          _
        %v328 = vld [vmem:[%s0] sm:$0xff]
        %v329 = vld [vmem:[%s0 + $0x8] sm:$0xff]
        %v330 = vld [vmem:[%s265] sm:$0xff]
        %v331 = vld [vmem:[%s265 + $0x8] sm:$0xff]
        %v332 = vld [vmem:[%s265 + $0x10] sm:$0xff]
        %v333 = vld [vmem:[%s265 + $0x18] sm:$0xff]
        %v334 = vld [vmem:[%s265 + $0x20] sm:$0xff]
        %v335 = vld [vmem:[%s265 + $0x28] sm:$0xff]
        %v336 = vld [vmem:[%s265 + $0x30] sm:$0xff]
        %v337 = vld [vmem:[%s265 + $0x38] sm:$0xff]
        %v338 = vld [vmem:[%s265 + $0x40] sm:$0xff]
        %v339 = vld [vmem:[%s265 + $0x48] sm:$0xff]
        %v340 = vld [vmem:[%s265 + $0x50] sm:$0xff]
        %v341 = vld [vmem:[%s265 + $0x58] sm:$0xff]
        %v342 = vld [vmem:[%s265 + $0x60] sm:$0xff]
        %v343 = vld [vmem:[%s265 + $0x68] sm:$0xff]
        %v344 = vld [vmem:[%s265 + $0x70] sm:$0xff]
        %v345 = vld [vmem:[%s265 + $0x78] sm:$0xff]
        %v346 = vld [vmem:[%s265 + $0x80] sm:$0xff]
        %v347 = vld [vmem:[%s265 + $0x88] sm:$0xff]
        %v348 = vld [vmem:[%s265 + $0x90] sm:$0xff]
        %v349 = vld [vmem:[%s265 + $0x98] sm:$0xff]
        %v350 = vld [vmem:[%s265 + $0xa0] sm:$0xff]
        %v351 = vld [vmem:[%s265 + $0xa8] sm:$0xff]
        %v352 = vld [vmem:[%s265 + $0xb0] sm:$0xff]
        %v353 = vld [vmem:[%s265 + $0xb8] sm:$0xff]
        %v354 = vld [vmem:[%s265 + $0xc0] sm:$0xff]
        %v355 = vld [vmem:[%s265 + $0xc8] sm:$0xff]
        %v356 = vld [vmem:[%s265 + $0xd0] sm:$0xff]
        %v357 = vld [vmem:[%s265 + $0xd8] sm:$0xff]
        %v358 = vld [vmem:[%s265 + $0xe0] sm:$0xff]
        %v359 = vld [vmem:[%s265 + $0xe8] sm:$0xff]
        %v360 = vld [vmem:[%s265 + $0xf0] sm:$0xff]
        %v361 = vld [vmem:[%s265 + $0xf8] sm:$0xff]
        %v362 = vld [vmem:[%s265 + $0x100] sm:$0xff]
        %v363 = vld [vmem:[%s265 + $0x108] sm:$0xff]
        %v364 = vld [vmem:[%s265 + $0x110] sm:$0xff]
        %v365 = vld [vmem:[%s265 + $0x118] sm:$0xff]
        %v366 = vld [vmem:[%s265 + $0x120] sm:$0xff]
        %v367 = vld [vmem:[%s265 + $0x128] sm:$0xff]
        %v368 = vld [vmem:[%s265 + $0x130] sm:$0xff]
        %v369 = vld [vmem:[%s265 + $0x138] sm:$0xff]
        %v370 = vld [vmem:[%s265 + $0x140] sm:$0xff]
        %v371 = vld [vmem:[%s265 + $0x148] sm:$0xff]
        %v372 = vld [vmem:[%s265 + $0x150] sm:$0xff]
        %v373 = vld [vmem:[%s265 + $0x158] sm:$0xff]
        %v374 = vld [vmem:[%s265 + $0x160] sm:$0xff]
        %v375 = vld [vmem:[%s265 + $0x168] sm:$0xff]
        %v376 = vld [vmem:[%s265 + $0x170] sm:$0xff]
        %v377 = vld [vmem:[%s265 + $0x178] sm:$0xff]
        %v378 = vld [vmem:[%s265 + $0x180] sm:$0xff]
        %v379 = vld [vmem:[%s265 + $0x188] sm:$0xff]
        %v380 = vld [vmem:[%s265 + $0x190] sm:$0xff]
        %v381 = vld [vmem:[%s265 + $0x198] sm:$0xff]
        %v382 = vld [vmem:[%s265 + $0x1a0] sm:$0xff]
        %v383 = vld [vmem:[%s265 + $0x1a8] sm:$0xff]
        %v384 = vld [vmem:[%s265 + $0x1b0] sm:$0xff]
        %v385 = vld [vmem:[%s265 + $0x1b8] sm:$0xff]
        %v386 = vld [vmem:[%s265 + $0x1c0] sm:$0xff]
        %v387 = vld [vmem:[%s265 + $0x1c8] sm:$0xff]
        %v388 = vld [vmem:[%s265 + $0x1d0] sm:$0xff]
        %v389 = vld [vmem:[%s265 + $0x1d8] sm:$0xff]
        %v390 = vld [vmem:[%s265 + $0x1e0] sm:$0xff]
        %v391 = vld [vmem:[%s265 + $0x1e8] sm:$0xff]
        %v392 = vld [vmem:[%s265 + $0x1f0] sm:$0xff]
        %v393 = vld [vmem:[%s265 + $0x1f8] sm:$0xff]
        %v394 = vld [vmem:[%s265 + $0x200] sm:$0xff]
        %v395 = vld [vmem:[%s265 + $0x208] sm:$0xff]
        %v396 = vld [vmem:[%s265 + $0x210] sm:$0xff]
        %v397 = vld [vmem:[%s265 + $0x218] sm:$0xff]
        %v398 = vld [vmem:[%s265 + $0x220] sm:$0xff]
        %v399 = vld [vmem:[%s265 + $0x228] sm:$0xff]
        %v400 = vld [vmem:[%s265 + $0x230] sm:$0xff]
        %v401 = vld [vmem:[%s265 + $0x238] sm:$0xff]
        %v402 = vld [vmem:[%s265 + $0x240] sm:$0xff]
        %v403 = vld [vmem:[%s265 + $0x248] sm:$0xff]
        %v404 = vld [vmem:[%s265 + $0x250] sm:$0xff]
        %v405 = vld [vmem:[%s265 + $0x258] sm:$0xff]
        %v406 = vld [vmem:[%s265 + $0x260] sm:$0xff]
        %v407 = vld [vmem:[%s265 + $0x268] sm:$0xff]
        %v408 = vld [vmem:[%s265 + $0x270] sm:$0xff]
        %v409 = vld [vmem:[%s265 + $0x278] sm:$0xff]
        %v410 = vld [vmem:[%s265 + $0x280] sm:$0xff]
        %v411 = vld [vmem:[%s265 + $0x288] sm:$0xff]
        %v412 = vld [vmem:[%s265 + $0x290] sm:$0xff]
        %v413 = vld [vmem:[%s265 + $0x298] sm:$0xff]
        %v414 = vld [vmem:[%s265 + $0x2a0] sm:$0xff]
        %v415 = vld [vmem:[%s265 + $0x2a8] sm:$0xff]
        %v416 = vld [vmem:[%s265 + $0x2b0] sm:$0xff]
        %v417 = vld [vmem:[%s265 + $0x2b8] sm:$0xff]
        %v418 = vld [vmem:[%s265 + $0x2c0] sm:$0xff]
        %v419 = vld [vmem:[%s265 + $0x2c8] sm:$0xff]
        %v420 = vld [vmem:[%s265 + $0x2d0] sm:$0xff]
        %v421 = vld [vmem:[%s265 + $0x2d8] sm:$0xff]
        %v422 = vld [vmem:[%s265 + $0x2e0] sm:$0xff]
        %v423 = vld [vmem:[%s265 + $0x2e8] sm:$0xff]
        %v424 = vld [vmem:[%s265 + $0x2f0] sm:$0xff]
        %v425 = vld [vmem:[%s265 + $0x2f8] sm:$0xff]
        %v426 = vld [vmem:[%s265 + $0x300] sm:$0xff]
        %v427 = vld [vmem:[%s265 + $0x308] sm:$0xff]
        %v428 = vld [vmem:[%s265 + $0x310] sm:$0xff]
        %v429 = vld [vmem:[%s265 + $0x318] sm:$0xff]
        %v430 = vld [vmem:[%s265 + $0x320] sm:$0xff]
        %v431 = vld [vmem:[%s265 + $0x328] sm:$0xff]
        %v432 = vld [vmem:[%s265 + $0x330] sm:$0xff]
        %v433 = vld [vmem:[%s265 + $0x338] sm:$0xff]
        %v434 = vld [vmem:[%s265 + $0x340] sm:$0xff]
        %v435 = vld [vmem:[%s265 + $0x348] sm:$0xff]
        %v436 = vld [vmem:[%s265 + $0x350] sm:$0xff]
        %v437 = vld [vmem:[%s265 + $0x358] sm:$0xff]
        %v438 = vld [vmem:[%s265 + $0x360] sm:$0xff]
        %v439 = vld [vmem:[%s265 + $0x368] sm:$0xff]
        %v440 = vld [vmem:[%s265 + $0x370] sm:$0xff]
        %v441 = vld [vmem:[%s265 + $0x378] sm:$0xff]
        %v442 = vld [vmem:[%s265 + $0x380] sm:$0xff]
        %v443 = vld [vmem:[%s265 + $0x388] sm:$0xff]
        %v444 = vld [vmem:[%s265 + $0x390] sm:$0xff]
        %v445 = vld [vmem:[%s265 + $0x398] sm:$0xff]
        %v446 = vld [vmem:[%s265 + $0x3a0] sm:$0xff]
        %v447 = vld [vmem:[%s265 + $0x3a8] sm:$0xff]
        %v448 = vld [vmem:[%s265 + $0x3b0] sm:$0xff]
        %v449 = vld [vmem:[%s265 + $0x3b8] sm:$0xff]
        %v450 = vld [vmem:[%s265 + $0x3c0] sm:$0xff]
        %v451 = vld [vmem:[%s265 + $0x3c8] sm:$0xff]
        %v452 = vld [vmem:[%s265 + $0x3d0] sm:$0xff]
        %v453 = vld [vmem:[%s265 + $0x3d8] sm:$0xff]
        %v454 = vld [vmem:[%s265 + $0x3e0] sm:$0xff]
        %v455 = vld [vmem:[%s265 + $0x3e8] sm:$0xff]
        %v456 = vld [vmem:[%s265 + $0x3f0] sm:$0xff]
        %v457 = vld [vmem:[%s265 + $0x3f8] sm:$0xff]
        %v458 = vld [vmem:[%s265 + $0x400] sm:$0xff]
        %v459 = vld [vmem:[%s265 + $0x408] sm:$0xff]
        %v460 = vld [vmem:[%s265 + $0x410] sm:$0xff]
        %v461 = vld [vmem:[%s265 + $0x418] sm:$0xff]
        %v462 = vld [vmem:[%s265 + $0x420] sm:$0xff]
        %v463 = vld [vmem:[%s265 + $0x428] sm:$0xff]
        %v464 = vld [vmem:[%s265 + $0x430] sm:$0xff]
        %v465 = vld [vmem:[%s265 + $0x438] sm:$0xff]
        %v466 = vld [vmem:[%s265 + $0x440] sm:$0xff]
        %v467 = vld [vmem:[%s265 + $0x448] sm:$0xff]
        %v468 = vld [vmem:[%s265 + $0x450] sm:$0xff]
        %v469 = vld [vmem:[%s265 + $0x458] sm:$0xff]
        %v470 = vld [vmem:[%s265 + $0x460] sm:$0xff]
        %v471 = vld [vmem:[%s265 + $0x468] sm:$0xff]
        %v472 = vld [vmem:[%s265 + $0x470] sm:$0xff]
        %v473 = vld [vmem:[%s265 + $0x478] sm:$0xff]
        %v474 = vld [vmem:[%s265 + $0x480] sm:$0xff]
        %v475 = vld [vmem:[%s265 + $0x488] sm:$0xff]
        %v476 = vld [vmem:[%s265 + $0x490] sm:$0xff]
        %v477 = vld [vmem:[%s265 + $0x498] sm:$0xff]
        %v478 = vld [vmem:[%s265 + $0x4a0] sm:$0xff]
        %v479 = vld [vmem:[%s265 + $0x4a8] sm:$0xff]
        %v480 = vld [vmem:[%s265 + $0x4b0] sm:$0xff]
        %v481 = vld [vmem:[%s265 + $0x4b8] sm:$0xff]
        %v482 = vld [vmem:[%s265 + $0x4c0] sm:$0xff]
        %v483 = vld [vmem:[%s265 + $0x4c8] sm:$0xff]
        %v484 = vld [vmem:[%s265 + $0x4d0] sm:$0xff]
        %v485 = vld [vmem:[%s265 + $0x4d8] sm:$0xff]
        %v486 = vld [vmem:[%s265 + $0x4e0] sm:$0xff]
        %v487 = vld [vmem:[%s265 + $0x4e8] sm:$0xff]
        %v488 = vld [vmem:[%s265 + $0x4f0] sm:$0xff]
        %v489 = vld [vmem:[%s265 + $0x4f8] sm:$0xff]
        %v490 = vld [vmem:[%s265 + $0x500] sm:$0xff]
        %v491 = vld [vmem:[%s265 + $0x508] sm:$0xff]
        %v492 = vld [vmem:[%s265 + $0x510] sm:$0xff]
        %v493 = vld [vmem:[%s265 + $0x518] sm:$0xff]
        %v494 = vld [vmem:[%s265 + $0x520] sm:$0xff]
        %v495 = vld [vmem:[%s265 + $0x528] sm:$0xff]
        %v496 = vld [vmem:[%s265 + $0x530] sm:$0xff]
        %v497 = vld [vmem:[%s265 + $0x538] sm:$0xff]
        %v498 = vld [vmem:[%s265 + $0x540] sm:$0xff]
        %v499 = vld [vmem:[%s265 + $0x548] sm:$0xff]
        %v500 = vld [vmem:[%s265 + $0x550] sm:$0xff]
        %v501 = vld [vmem:[%s265 + $0x558] sm:$0xff]
        %v502 = vld [vmem:[%s265 + $0x560] sm:$0xff]
        %v503 = vld [vmem:[%s265 + $0x568] sm:$0xff]
        %v504 = vld [vmem:[%s265 + $0x570] sm:$0xff]
        %v505 = vld [vmem:[%s265 + $0x578] sm:$0xff]
        %v506 = vld [vmem:[%s265 + $0x580] sm:$0xff]
        %v507 = vld [vmem:[%s265 + $0x588] sm:$0xff]
        %v508 = vld [vmem:[%s265 + $0x590] sm:$0xff]
        %v509 = vld [vmem:[%s265 + $0x598] sm:$0xff]
        %v510 = vld [vmem:[%s265 + $0x5a0] sm:$0xff]
        %v511 = vld [vmem:[%s265 + $0x5a8] sm:$0xff]
        %v512 = vld [vmem:[%s265 + $0x5b0] sm:$0xff]
        %v513 = vld [vmem:[%s265 + $0x5b8] sm:$0xff]
        %v514 = vld [vmem:[%s265 + $0x5c0] sm:$0xff]
        %v515 = vld [vmem:[%s265 + $0x5c8] sm:$0xff]
        %v516 = vld [vmem:[%s265 + $0x5d0] sm:$0xff]
        %v517 = vld [vmem:[%s265 + $0x5d8] sm:$0xff]
        %v518 = vld [vmem:[%s265 + $0x5e0] sm:$0xff]
        %v519 = vld [vmem:[%s265 + $0x5e8] sm:$0xff]
        %v520 = vld [vmem:[%s265 + $0x5f0] sm:$0xff]
        %v521 = vld [vmem:[%s265 + $0x5f8] sm:$0xff]
        %v522 = vld [vmem:[%s265 + $0x600] sm:$0xff]
        %v523 = vld [vmem:[%s265 + $0x608] sm:$0xff]
        %v524 = vld [vmem:[%s265 + $0x610] sm:$0xff]
        %v525 = vld [vmem:[%s265 + $0x618] sm:$0xff]
        %v526 = vld [vmem:[%s265 + $0x620] sm:$0xff]
        %v527 = vld [vmem:[%s265 + $0x628] sm:$0xff]
        %v528 = vld [vmem:[%s265 + $0x630] sm:$0xff]
        %v529 = vld [vmem:[%s265 + $0x638] sm:$0xff]
        %v530 = vld [vmem:[%s265 + $0x640] sm:$0xff]
        %v531 = vld [vmem:[%s265 + $0x648] sm:$0xff]
        %v532 = vld [vmem:[%s265 + $0x650] sm:$0xff]
        %v533 = vld [vmem:[%s265 + $0x658] sm:$0xff]
        %v534 = vld [vmem:[%s265 + $0x660] sm:$0xff]
        %v535 = vld [vmem:[%s265 + $0x668] sm:$0xff]
        %v536 = vld [vmem:[%s265 + $0x670] sm:$0xff]
        %v537 = vld [vmem:[%s265 + $0x678] sm:$0xff]
        %v538 = vld [vmem:[%s265 + $0x680] sm:$0xff]
        %v539 = vld [vmem:[%s265 + $0x688] sm:$0xff]
        %v540 = vld [vmem:[%s265 + $0x690] sm:$0xff]
        %v541 = vld [vmem:[%s265 + $0x698] sm:$0xff]
        %v542 = vld [vmem:[%s265 + $0x6a0] sm:$0xff]
        %v543 = vld [vmem:[%s265 + $0x6a8] sm:$0xff]
        %v544 = vld [vmem:[%s265 + $0x6b0] sm:$0xff]
        %v545 = vld [vmem:[%s265 + $0x6b8] sm:$0xff]
        %v546 = vld [vmem:[%s265 + $0x6c0] sm:$0xff]
        %v547 = vld [vmem:[%s265 + $0x6c8] sm:$0xff]
        %v548 = vld [vmem:[%s265 + $0x6d0] sm:$0xff]
        %v549 = vld [vmem:[%s265 + $0x6d8] sm:$0xff]
        %v550 = vld [vmem:[%s265 + $0x6e0] sm:$0xff]
        %v551 = vld [vmem:[%s265 + $0x6e8] sm:$0xff]
        %v552 = vld [vmem:[%s265 + $0x6f0] sm:$0xff]
        %v553 = vld [vmem:[%s265 + $0x6f8] sm:$0xff]
        %v554 = vld [vmem:[%s265 + $0x700] sm:$0xff]
        %v555 = vld [vmem:[%s265 + $0x708] sm:$0xff]
        %v556 = vld [vmem:[%s265 + $0x710] sm:$0xff]
        %v557 = vld [vmem:[%s265 + $0x718] sm:$0xff]
        %v558 = vld [vmem:[%s265 + $0x720] sm:$0xff]
        %v559 = vld [vmem:[%s265 + $0x728] sm:$0xff]
        %v560 = vld [vmem:[%s265 + $0x730] sm:$0xff]
        %v561 = vld [vmem:[%s265 + $0x738] sm:$0xff]
        %v562 = vld [vmem:[%s265 + $0x740] sm:$0xff]
        %v563 = vld [vmem:[%s265 + $0x748] sm:$0xff]
        %v564 = vld [vmem:[%s265 + $0x750] sm:$0xff]
        %v565 = vld [vmem:[%s265 + $0x758] sm:$0xff]
        %v566 = vld [vmem:[%s265 + $0x760] sm:$0xff]
        %v567 = vld [vmem:[%s265 + $0x768] sm:$0xff]
        %v568 = vld [vmem:[%s265 + $0x770] sm:$0xff]
        %v569 = vld [vmem:[%s265 + $0x778] sm:$0xff]
        %v570 = vld [vmem:[%s265 + $0x780] sm:$0xff]
        %v571 = vld [vmem:[%s265 + $0x788] sm:$0xff]
        %v572 = vld [vmem:[%s265 + $0x790] sm:$0xff]
        %v573 = vld [vmem:[%s265 + $0x798] sm:$0xff]
        %v574 = vld [vmem:[%s265 + $0x7a0] sm:$0xff]
        %v575 = vld [vmem:[%s265 + $0x7a8] sm:$0xff]
        %v576 = vld [vmem:[%s265 + $0x7b0] sm:$0xff]
        %v577 = vld [vmem:[%s265 + $0x7b8] sm:$0xff]
        %v578 = vld [vmem:[%s265 + $0x7c0] sm:$0xff]
        %v579 = vld [vmem:[%s265 + $0x7c8] sm:$0xff]
        %v580 = vld [vmem:[%s265 + $0x7d0] sm:$0xff]
        %v581 = vld [vmem:[%s265 + $0x7d8] sm:$0xff]
        %v582 = vld [vmem:[%s265 + $0x7e0] sm:$0xff]
        %v583 = vld [vmem:[%s265 + $0x7e8] sm:$0xff]
        %v584 = vld [vmem:[%s265 + $0x7f0] sm:$0xff]
        %v585 = vld [vmem:[%s265 + $0x7f8] sm:$0xff]
        %v586 = vld [vmem:[%s274] sm:$0x3]
        %v588 = vlaneseq
        %v589 = vshrl.u32 %v588, 7
        %v590 = vsub.s32 0, %v589
        %v591 = vrot.slane %v586, %v590
        %v592 = vlaneseq
        %v593 = vshrl.u32 %v592, 7
        %v594 = vsub.s32 1, %v593
        %v595 = vrot.slane %v586, %v594
        %v600 = vcombine.high %v328, %v328
        %v602 = vunpack.c.l.s4 1966171168
        %v603 = vunpack.c.0.s8 %v602
        %v604 = vlaneseq
        %v605 = vshrl.u32 %v604, 7
        %v606 = vsub.s32 %v603, %v605
        %v607 = vrot.slane %v328, %v606
        %v609 = vunpack.c.l.s4 1966171168
        %v610 = vunpack.c.0.s8 %v609
        %v611 = vlaneseq
        %v612 = vshrl.u32 %v611, 7
        %v613 = vsub.s32 %v610, %v612
        %v614 = vrot.slane %v600, %v613
        %v615 = vcombine.high %v607, %v607
        %v616 = vcombine.high %v614, %v614
        %v618 = vunpack.c.l.s4 1966171168
        %v619 = vunpack.c.0.s8 %v618
        %v620 = vlaneseq
        %v621 = vshrl.u32 %v620, 7
        %v622 = vsub.s32 %v619, %v621
        %v623 = vrot.slane %v607, %v622
        %v625 = vunpack.c.l.s4 1966171168
        %v626 = vunpack.c.0.s8 %v625
        %v627 = vlaneseq
        %v628 = vshrl.u32 %v627, 7
        %v629 = vsub.s32 %v626, %v628
        %v630 = vrot.slane %v614, %v629
        %v632 = vunpack.c.l.s4 1966171168
        %v633 = vunpack.c.0.s8 %v632
        %v634 = vlaneseq
        %v635 = vshrl.u32 %v634, 7
        %v636 = vsub.s32 %v633, %v635
        %v637 = vrot.slane %v615, %v636
        %v639 = vunpack.c.l.s4 1966171168
        %v640 = vunpack.c.0.s8 %v639
        %v641 = vlaneseq
        %v642 = vshrl.u32 %v641, 7
        %v643 = vsub.s32 %v640, %v642
        %v644 = vrot.slane %v616, %v643
        %v645 = vcombine.high %v623, %v623
        %v646 = vcombine.high %v630, %v630
        %v647 = vcombine.high %v637, %v637
        %v648 = vcombine.high %v644, %v644
        %v649 = vcombine.high %v329, %v329
        %v651 = vunpack.c.l.s4 1966171168
        %v652 = vunpack.c.0.s8 %v651
        %v653 = vlaneseq
        %v654 = vshrl.u32 %v653, 7
        %v655 = vsub.s32 %v652, %v654
        %v656 = vrot.slane %v329, %v655
        %v658 = vunpack.c.l.s4 1966171168
        %v659 = vunpack.c.0.s8 %v658
        %v660 = vlaneseq
        %v661 = vshrl.u32 %v660, 7
        %v662 = vsub.s32 %v659, %v661
        %v663 = vrot.slane %v649, %v662
        %v664 = vcombine.high %v656, %v656
        %v665 = vcombine.high %v663, %v663
        %v667 = vunpack.c.l.s4 1966171168
        %v668 = vunpack.c.0.s8 %v667
        %v669 = vlaneseq
        %v670 = vshrl.u32 %v669, 7
        %v671 = vsub.s32 %v668, %v670
        %v672 = vrot.slane %v656, %v671
        %v674 = vunpack.c.l.s4 1966171168
        %v675 = vunpack.c.0.s8 %v674
        %v676 = vlaneseq
        %v677 = vshrl.u32 %v676, 7
        %v678 = vsub.s32 %v675, %v677
        %v679 = vrot.slane %v663, %v678
        %v681 = vunpack.c.l.s4 1966171168
        %v682 = vunpack.c.0.s8 %v681
        %v683 = vlaneseq
        %v684 = vshrl.u32 %v683, 7
        %v685 = vsub.s32 %v682, %v684
        %v686 = vrot.slane %v664, %v685
        %v688 = vunpack.c.l.s4 1966171168
        %v689 = vunpack.c.0.s8 %v688
        %v690 = vlaneseq
        %v691 = vshrl.u32 %v690, 7
        %v692 = vsub.s32 %v689, %v691
        %v693 = vrot.slane %v665, %v692
        %v694 = vcombine.high %v672, %v672
        %v695 = vcombine.high %v679, %v679
        %v696 = vcombine.high %v686, %v686
        %v697 = vcombine.high %v693, %v693
        %v970 = vunpack.c.l.b16 %v330
        %v971 = vunpack.c.h.b16 %v330
        %v972 = vunpack.c.l.b16 %v331
        %v973 = vunpack.c.h.b16 %v331
        %v974 = vunpack.c.l.b16 %v332
        %v975 = vunpack.c.h.b16 %v332
        %v976 = vunpack.c.l.b16 %v333
        %v977 = vunpack.c.h.b16 %v333
        %v978 = vunpack.c.l.b16 %v334
        %v979 = vunpack.c.h.b16 %v334
        %v980 = vunpack.c.l.b16 %v335
        %v981 = vunpack.c.h.b16 %v335
        %v982 = vunpack.c.l.b16 %v336
        %v983 = vunpack.c.h.b16 %v336
        %v984 = vunpack.c.l.b16 %v337
        %v985 = vunpack.c.h.b16 %v337
        %v986 = vunpack.c.l.b16 %v338
        %v987 = vunpack.c.h.b16 %v338
        %v988 = vunpack.c.l.b16 %v339
        %v989 = vunpack.c.h.b16 %v339
        %v990 = vunpack.c.l.b16 %v340
        %v991 = vunpack.c.h.b16 %v340
        %v992 = vunpack.c.l.b16 %v341
        %v993 = vunpack.c.h.b16 %v341
        %v994 = vunpack.c.l.b16 %v342
        %v995 = vunpack.c.h.b16 %v342
        %v996 = vunpack.c.l.b16 %v343
        %v997 = vunpack.c.h.b16 %v343
        %v998 = vunpack.c.l.b16 %v344
        %v999 = vunpack.c.h.b16 %v344
        %v1000 = vunpack.c.l.b16 %v345
        %v1001 = vunpack.c.h.b16 %v345
        %v1002 = vunpack.c.l.b16 %v346
        %v1003 = vunpack.c.h.b16 %v346
        %v1004 = vunpack.c.l.b16 %v347
        %v1005 = vunpack.c.h.b16 %v347
        %v1006 = vunpack.c.l.b16 %v348
        %v1007 = vunpack.c.h.b16 %v348
        %v1008 = vunpack.c.l.b16 %v349
        %v1009 = vunpack.c.h.b16 %v349
        %v1010 = vunpack.c.l.b16 %v350
        %v1011 = vunpack.c.h.b16 %v350
        %v1012 = vunpack.c.l.b16 %v351
        %v1013 = vunpack.c.h.b16 %v351
        %v1014 = vunpack.c.l.b16 %v352
        %v1015 = vunpack.c.h.b16 %v352
        %v1016 = vunpack.c.l.b16 %v353
        %v1017 = vunpack.c.h.b16 %v353
        %v1018 = vunpack.c.l.b16 %v354
        %v1019 = vunpack.c.h.b16 %v354
        %v1020 = vunpack.c.l.b16 %v355
        %v1021 = vunpack.c.h.b16 %v355
        %v1022 = vunpack.c.l.b16 %v356
        %v1023 = vunpack.c.h.b16 %v356
        %v1024 = vunpack.c.l.b16 %v357
        %v1025 = vunpack.c.h.b16 %v357
        %v1026 = vunpack.c.l.b16 %v358
        %v1027 = vunpack.c.h.b16 %v358
        %v1028 = vunpack.c.l.b16 %v359
        %v1029 = vunpack.c.h.b16 %v359
        %v1030 = vunpack.c.l.b16 %v360
        %v1031 = vunpack.c.h.b16 %v360
        %v1032 = vunpack.c.l.b16 %v361
        %v1033 = vunpack.c.h.b16 %v361
        %v1034 = vunpack.c.l.b16 %v362
        %v1035 = vunpack.c.h.b16 %v362
        %v1036 = vunpack.c.l.b16 %v363
        %v1037 = vunpack.c.h.b16 %v363
        %v1038 = vunpack.c.l.b16 %v364
        %v1039 = vunpack.c.h.b16 %v364
        %v1040 = vunpack.c.l.b16 %v365
        %v1041 = vunpack.c.h.b16 %v365
        %v1042 = vunpack.c.l.b16 %v366
        %v1043 = vunpack.c.h.b16 %v366
        %v1044 = vunpack.c.l.b16 %v367
        %v1045 = vunpack.c.h.b16 %v367
        %v1046 = vunpack.c.l.b16 %v368
        %v1047 = vunpack.c.h.b16 %v368
        %v1048 = vunpack.c.l.b16 %v369
        %v1049 = vunpack.c.h.b16 %v369
        %v1050 = vunpack.c.l.b16 %v370
        %v1051 = vunpack.c.h.b16 %v370
        %v1052 = vunpack.c.l.b16 %v371
        %v1053 = vunpack.c.h.b16 %v371
        %v1054 = vunpack.c.l.b16 %v372
        %v1055 = vunpack.c.h.b16 %v372
        %v1056 = vunpack.c.l.b16 %v373
        %v1057 = vunpack.c.h.b16 %v373
        %v1058 = vunpack.c.l.b16 %v374
        %v1059 = vunpack.c.h.b16 %v374
        %v1060 = vunpack.c.l.b16 %v375
        %v1061 = vunpack.c.h.b16 %v375
        %v1062 = vunpack.c.l.b16 %v376
        %v1063 = vunpack.c.h.b16 %v376
        %v1064 = vunpack.c.l.b16 %v377
        %v1065 = vunpack.c.h.b16 %v377
        %v1066 = vunpack.c.l.b16 %v378
        %v1067 = vunpack.c.h.b16 %v378
        %v1068 = vunpack.c.l.b16 %v379
        %v1069 = vunpack.c.h.b16 %v379
        %v1070 = vunpack.c.l.b16 %v380
        %v1071 = vunpack.c.h.b16 %v380
        %v1072 = vunpack.c.l.b16 %v381
        %v1073 = vunpack.c.h.b16 %v381
        %v1074 = vunpack.c.l.b16 %v382
        %v1075 = vunpack.c.h.b16 %v382
        %v1076 = vunpack.c.l.b16 %v383
        %v1077 = vunpack.c.h.b16 %v383
        %v1078 = vunpack.c.l.b16 %v384
        %v1079 = vunpack.c.h.b16 %v384
        %v1080 = vunpack.c.l.b16 %v385
        %v1081 = vunpack.c.h.b16 %v385
        %v1082 = vunpack.c.l.b16 %v386
        %v1083 = vunpack.c.h.b16 %v386
        %v1084 = vunpack.c.l.b16 %v387
        %v1085 = vunpack.c.h.b16 %v387
        %v1086 = vunpack.c.l.b16 %v388
        %v1087 = vunpack.c.h.b16 %v388
        %v1088 = vunpack.c.l.b16 %v389
        %v1089 = vunpack.c.h.b16 %v389
        %v1090 = vunpack.c.l.b16 %v390
        %v1091 = vunpack.c.h.b16 %v390
        %v1092 = vunpack.c.l.b16 %v391
        %v1093 = vunpack.c.h.b16 %v391
        %v1094 = vunpack.c.l.b16 %v392
        %v1095 = vunpack.c.h.b16 %v392
        %v1096 = vunpack.c.l.b16 %v393
        %v1097 = vunpack.c.h.b16 %v393
        %v1098 = vunpack.c.l.b16 %v394
        %v1099 = vunpack.c.h.b16 %v394
        %v1100 = vunpack.c.l.b16 %v395
        %v1101 = vunpack.c.h.b16 %v395
        %v1102 = vunpack.c.l.b16 %v396
        %v1103 = vunpack.c.h.b16 %v396
        %v1104 = vunpack.c.l.b16 %v397
        %v1105 = vunpack.c.h.b16 %v397
        %v1106 = vunpack.c.l.b16 %v398
        %v1107 = vunpack.c.h.b16 %v398
        %v1108 = vunpack.c.l.b16 %v399
        %v1109 = vunpack.c.h.b16 %v399
        %v1110 = vunpack.c.l.b16 %v400
        %v1111 = vunpack.c.h.b16 %v400
        %v1112 = vunpack.c.l.b16 %v401
        %v1113 = vunpack.c.h.b16 %v401
        %v1114 = vunpack.c.l.b16 %v402
        %v1115 = vunpack.c.h.b16 %v402
        %v1116 = vunpack.c.l.b16 %v403
        %v1117 = vunpack.c.h.b16 %v403
        %v1118 = vunpack.c.l.b16 %v404
        %v1119 = vunpack.c.h.b16 %v404
        %v1120 = vunpack.c.l.b16 %v405
        %v1121 = vunpack.c.h.b16 %v405
        %v1122 = vunpack.c.l.b16 %v406
        %v1123 = vunpack.c.h.b16 %v406
        %v1124 = vunpack.c.l.b16 %v407
        %v1125 = vunpack.c.h.b16 %v407
        %v1126 = vunpack.c.l.b16 %v408
        %v1127 = vunpack.c.h.b16 %v408
        %v1128 = vunpack.c.l.b16 %v409
        %v1129 = vunpack.c.h.b16 %v409
        %v1130 = vunpack.c.l.b16 %v410
        %v1131 = vunpack.c.h.b16 %v410
        %v1132 = vunpack.c.l.b16 %v411
        %v1133 = vunpack.c.h.b16 %v411
        %v1134 = vunpack.c.l.b16 %v412
        %v1135 = vunpack.c.h.b16 %v412
        %v1136 = vunpack.c.l.b16 %v413
        %v1137 = vunpack.c.h.b16 %v413
        %v1138 = vunpack.c.l.b16 %v414
        %v1139 = vunpack.c.h.b16 %v414
        %v1140 = vunpack.c.l.b16 %v415
        %v1141 = vunpack.c.h.b16 %v415
        %v1142 = vunpack.c.l.b16 %v416
        %v1143 = vunpack.c.h.b16 %v416
        %v1144 = vunpack.c.l.b16 %v417
        %v1145 = vunpack.c.h.b16 %v417
        %v1146 = vunpack.c.l.b16 %v418
        %v1147 = vunpack.c.h.b16 %v418
        %v1148 = vunpack.c.l.b16 %v419
        %v1149 = vunpack.c.h.b16 %v419
        %v1150 = vunpack.c.l.b16 %v420
        %v1151 = vunpack.c.h.b16 %v420
        %v1152 = vunpack.c.l.b16 %v421
        %v1153 = vunpack.c.h.b16 %v421
        %v1154 = vunpack.c.l.b16 %v422
        %v1155 = vunpack.c.h.b16 %v422
        %v1156 = vunpack.c.l.b16 %v423
        %v1157 = vunpack.c.h.b16 %v423
        %v1158 = vunpack.c.l.b16 %v424
        %v1159 = vunpack.c.h.b16 %v424
        %v1160 = vunpack.c.l.b16 %v425
        %v1161 = vunpack.c.h.b16 %v425
        %v1162 = vunpack.c.l.b16 %v426
        %v1163 = vunpack.c.h.b16 %v426
        %v1164 = vunpack.c.l.b16 %v427
        %v1165 = vunpack.c.h.b16 %v427
        %v1166 = vunpack.c.l.b16 %v428
        %v1167 = vunpack.c.h.b16 %v428
        %v1168 = vunpack.c.l.b16 %v429
        %v1169 = vunpack.c.h.b16 %v429
        %v1170 = vunpack.c.l.b16 %v430
        %v1171 = vunpack.c.h.b16 %v430
        %v1172 = vunpack.c.l.b16 %v431
        %v1173 = vunpack.c.h.b16 %v431
        %v1174 = vunpack.c.l.b16 %v432
        %v1175 = vunpack.c.h.b16 %v432
        %v1176 = vunpack.c.l.b16 %v433
        %v1177 = vunpack.c.h.b16 %v433
        %v1178 = vunpack.c.l.b16 %v434
        %v1179 = vunpack.c.h.b16 %v434
        %v1180 = vunpack.c.l.b16 %v435
        %v1181 = vunpack.c.h.b16 %v435
        %v1182 = vunpack.c.l.b16 %v436
        %v1183 = vunpack.c.h.b16 %v436
        %v1184 = vunpack.c.l.b16 %v437
        %v1185 = vunpack.c.h.b16 %v437
        %v1186 = vunpack.c.l.b16 %v438
        %v1187 = vunpack.c.h.b16 %v438
        %v1188 = vunpack.c.l.b16 %v439
        %v1189 = vunpack.c.h.b16 %v439
        %v1190 = vunpack.c.l.b16 %v440
        %v1191 = vunpack.c.h.b16 %v440
        %v1192 = vunpack.c.l.b16 %v441
        %v1193 = vunpack.c.h.b16 %v441
        %v1194 = vunpack.c.l.b16 %v442
        %v1195 = vunpack.c.h.b16 %v442
        %v1196 = vunpack.c.l.b16 %v443
        %v1197 = vunpack.c.h.b16 %v443
        %v1198 = vunpack.c.l.b16 %v444
        %v1199 = vunpack.c.h.b16 %v444
        %v1200 = vunpack.c.l.b16 %v445
        %v1201 = vunpack.c.h.b16 %v445
        %v1202 = vunpack.c.l.b16 %v446
        %v1203 = vunpack.c.h.b16 %v446
        %v1204 = vunpack.c.l.b16 %v447
        %v1205 = vunpack.c.h.b16 %v447
        %v1206 = vunpack.c.l.b16 %v448
        %v1207 = vunpack.c.h.b16 %v448
        %v1208 = vunpack.c.l.b16 %v449
        %v1209 = vunpack.c.h.b16 %v449
        %v1210 = vunpack.c.l.b16 %v450
        %v1211 = vunpack.c.h.b16 %v450
        %v1212 = vunpack.c.l.b16 %v451
        %v1213 = vunpack.c.h.b16 %v451
        %v1214 = vunpack.c.l.b16 %v452
        %v1215 = vunpack.c.h.b16 %v452
        %v1216 = vunpack.c.l.b16 %v453
        %v1217 = vunpack.c.h.b16 %v453
        %v1218 = vunpack.c.l.b16 %v454
        %v1219 = vunpack.c.h.b16 %v454
        %v1220 = vunpack.c.l.b16 %v455
        %v1221 = vunpack.c.h.b16 %v455
        %v1222 = vunpack.c.l.b16 %v456
        %v1223 = vunpack.c.h.b16 %v456
        %v1224 = vunpack.c.l.b16 %v457
        %v1225 = vunpack.c.h.b16 %v457
        %v1226 = vunpack.c.l.b16 %v458
        %v1227 = vunpack.c.h.b16 %v458
        %v1228 = vunpack.c.l.b16 %v459
        %v1229 = vunpack.c.h.b16 %v459
        %v1230 = vunpack.c.l.b16 %v460
        %v1231 = vunpack.c.h.b16 %v460
        %v1232 = vunpack.c.l.b16 %v461
        %v1233 = vunpack.c.h.b16 %v461
        %v1234 = vunpack.c.l.b16 %v462
        %v1235 = vunpack.c.h.b16 %v462
        %v1236 = vunpack.c.l.b16 %v463
        %v1237 = vunpack.c.h.b16 %v463
        %v1238 = vunpack.c.l.b16 %v464
        %v1239 = vunpack.c.h.b16 %v464
        %v1240 = vunpack.c.l.b16 %v465
        %v1241 = vunpack.c.h.b16 %v465
        %v1242 = vunpack.c.l.b16 %v466
        %v1243 = vunpack.c.h.b16 %v466
        %v1244 = vunpack.c.l.b16 %v467
        %v1245 = vunpack.c.h.b16 %v467
        %v1246 = vunpack.c.l.b16 %v468
        %v1247 = vunpack.c.h.b16 %v468
        %v1248 = vunpack.c.l.b16 %v469
        %v1249 = vunpack.c.h.b16 %v469
        %v1250 = vunpack.c.l.b16 %v470
        %v1251 = vunpack.c.h.b16 %v470
        %v1252 = vunpack.c.l.b16 %v471
        %v1253 = vunpack.c.h.b16 %v471
        %v1254 = vunpack.c.l.b16 %v472
        %v1255 = vunpack.c.h.b16 %v472
        %v1256 = vunpack.c.l.b16 %v473
        %v1257 = vunpack.c.h.b16 %v473
        %v1258 = vunpack.c.l.b16 %v474
        %v1259 = vunpack.c.h.b16 %v474
        %v1260 = vunpack.c.l.b16 %v475
        %v1261 = vunpack.c.h.b16 %v475
        %v1262 = vunpack.c.l.b16 %v476
        %v1263 = vunpack.c.h.b16 %v476
        %v1264 = vunpack.c.l.b16 %v477
        %v1265 = vunpack.c.h.b16 %v477
        %v1266 = vunpack.c.l.b16 %v478
        %v1267 = vunpack.c.h.b16 %v478
        %v1268 = vunpack.c.l.b16 %v479
        %v1269 = vunpack.c.h.b16 %v479
        %v1270 = vunpack.c.l.b16 %v480
        %v1271 = vunpack.c.h.b16 %v480
        %v1272 = vunpack.c.l.b16 %v481
        %v1273 = vunpack.c.h.b16 %v481
        %v1274 = vunpack.c.l.b16 %v482
        %v1275 = vunpack.c.h.b16 %v482
        %v1276 = vunpack.c.l.b16 %v483
        %v1277 = vunpack.c.h.b16 %v483
        %v1278 = vunpack.c.l.b16 %v484
        %v1279 = vunpack.c.h.b16 %v484
        %v1280 = vunpack.c.l.b16 %v485
        %v1281 = vunpack.c.h.b16 %v485
        %v1282 = vunpack.c.l.b16 %v486
        %v1283 = vunpack.c.h.b16 %v486
        %v1284 = vunpack.c.l.b16 %v487
        %v1285 = vunpack.c.h.b16 %v487
        %v1286 = vunpack.c.l.b16 %v488
        %v1287 = vunpack.c.h.b16 %v488
        %v1288 = vunpack.c.l.b16 %v489
        %v1289 = vunpack.c.h.b16 %v489
        %v1290 = vunpack.c.l.b16 %v490
        %v1291 = vunpack.c.h.b16 %v490
        %v1292 = vunpack.c.l.b16 %v491
        %v1293 = vunpack.c.h.b16 %v491
        %v1294 = vunpack.c.l.b16 %v492
        %v1295 = vunpack.c.h.b16 %v492
        %v1296 = vunpack.c.l.b16 %v493
        %v1297 = vunpack.c.h.b16 %v493
        %v1298 = vunpack.c.l.b16 %v494
        %v1299 = vunpack.c.h.b16 %v494
        %v1300 = vunpack.c.l.b16 %v495
        %v1301 = vunpack.c.h.b16 %v495
        %v1302 = vunpack.c.l.b16 %v496
        %v1303 = vunpack.c.h.b16 %v496
        %v1304 = vunpack.c.l.b16 %v497
        %v1305 = vunpack.c.h.b16 %v497
        %v1306 = vunpack.c.l.b16 %v498
        %v1307 = vunpack.c.h.b16 %v498
        %v1308 = vunpack.c.l.b16 %v499
        %v1309 = vunpack.c.h.b16 %v499
        %v1310 = vunpack.c.l.b16 %v500
        %v1311 = vunpack.c.h.b16 %v500
        %v1312 = vunpack.c.l.b16 %v501
        %v1313 = vunpack.c.h.b16 %v501
        %v1314 = vunpack.c.l.b16 %v502
        %v1315 = vunpack.c.h.b16 %v502
        %v1316 = vunpack.c.l.b16 %v503
        %v1317 = vunpack.c.h.b16 %v503
        %v1318 = vunpack.c.l.b16 %v504
        %v1319 = vunpack.c.h.b16 %v504
        %v1320 = vunpack.c.l.b16 %v505
        %v1321 = vunpack.c.h.b16 %v505
        %v1322 = vunpack.c.l.b16 %v506
        %v1323 = vunpack.c.h.b16 %v506
        %v1324 = vunpack.c.l.b16 %v507
        %v1325 = vunpack.c.h.b16 %v507
        %v1326 = vunpack.c.l.b16 %v508
        %v1327 = vunpack.c.h.b16 %v508
        %v1328 = vunpack.c.l.b16 %v509
        %v1329 = vunpack.c.h.b16 %v509
        %v1330 = vunpack.c.l.b16 %v510
        %v1331 = vunpack.c.h.b16 %v510
        %v1332 = vunpack.c.l.b16 %v511
        %v1333 = vunpack.c.h.b16 %v511
        %v1334 = vunpack.c.l.b16 %v512
        %v1335 = vunpack.c.h.b16 %v512
        %v1336 = vunpack.c.l.b16 %v513
        %v1337 = vunpack.c.h.b16 %v513
        %v1338 = vunpack.c.l.b16 %v514
        %v1339 = vunpack.c.h.b16 %v514
        %v1340 = vunpack.c.l.b16 %v515
        %v1341 = vunpack.c.h.b16 %v515
        %v1342 = vunpack.c.l.b16 %v516
        %v1343 = vunpack.c.h.b16 %v516
        %v1344 = vunpack.c.l.b16 %v517
        %v1345 = vunpack.c.h.b16 %v517
        %v1346 = vunpack.c.l.b16 %v518
        %v1347 = vunpack.c.h.b16 %v518
        %v1348 = vunpack.c.l.b16 %v519
        %v1349 = vunpack.c.h.b16 %v519
        %v1350 = vunpack.c.l.b16 %v520
        %v1351 = vunpack.c.h.b16 %v520
        %v1352 = vunpack.c.l.b16 %v521
        %v1353 = vunpack.c.h.b16 %v521
        %v1354 = vunpack.c.l.b16 %v522
        %v1355 = vunpack.c.h.b16 %v522
        %v1356 = vunpack.c.l.b16 %v523
        %v1357 = vunpack.c.h.b16 %v523
        %v1358 = vunpack.c.l.b16 %v524
        %v1359 = vunpack.c.h.b16 %v524
        %v1360 = vunpack.c.l.b16 %v525
        %v1361 = vunpack.c.h.b16 %v525
        %v1362 = vunpack.c.l.b16 %v526
        %v1363 = vunpack.c.h.b16 %v526
        %v1364 = vunpack.c.l.b16 %v527
        %v1365 = vunpack.c.h.b16 %v527
        %v1366 = vunpack.c.l.b16 %v528
        %v1367 = vunpack.c.h.b16 %v528
        %v1368 = vunpack.c.l.b16 %v529
        %v1369 = vunpack.c.h.b16 %v529
        %v1370 = vunpack.c.l.b16 %v530
        %v1371 = vunpack.c.h.b16 %v530
        %v1372 = vunpack.c.l.b16 %v531
        %v1373 = vunpack.c.h.b16 %v531
        %v1374 = vunpack.c.l.b16 %v532
        %v1375 = vunpack.c.h.b16 %v532
        %v1376 = vunpack.c.l.b16 %v533
        %v1377 = vunpack.c.h.b16 %v533
        %v1378 = vunpack.c.l.b16 %v534
        %v1379 = vunpack.c.h.b16 %v534
        %v1380 = vunpack.c.l.b16 %v535
        %v1381 = vunpack.c.h.b16 %v535
        %v1382 = vunpack.c.l.b16 %v536
        %v1383 = vunpack.c.h.b16 %v536
        %v1384 = vunpack.c.l.b16 %v537
        %v1385 = vunpack.c.h.b16 %v537
        %v1386 = vunpack.c.l.b16 %v538
        %v1387 = vunpack.c.h.b16 %v538
        %v1388 = vunpack.c.l.b16 %v539
        %v1389 = vunpack.c.h.b16 %v539
        %v1390 = vunpack.c.l.b16 %v540
        %v1391 = vunpack.c.h.b16 %v540
        %v1392 = vunpack.c.l.b16 %v541
        %v1393 = vunpack.c.h.b16 %v541
        %v1394 = vunpack.c.l.b16 %v542
        %v1395 = vunpack.c.h.b16 %v542
        %v1396 = vunpack.c.l.b16 %v543
        %v1397 = vunpack.c.h.b16 %v543
        %v1398 = vunpack.c.l.b16 %v544
        %v1399 = vunpack.c.h.b16 %v544
        %v1400 = vunpack.c.l.b16 %v545
        %v1401 = vunpack.c.h.b16 %v545
        %v1402 = vunpack.c.l.b16 %v546
        %v1403 = vunpack.c.h.b16 %v546
        %v1404 = vunpack.c.l.b16 %v547
        %v1405 = vunpack.c.h.b16 %v547
        %v1406 = vunpack.c.l.b16 %v548
        %v1407 = vunpack.c.h.b16 %v548
        %v1408 = vunpack.c.l.b16 %v549
        %v1409 = vunpack.c.h.b16 %v549
        %v1410 = vunpack.c.l.b16 %v550
        %v1411 = vunpack.c.h.b16 %v550
        %v1412 = vunpack.c.l.b16 %v551
        %v1413 = vunpack.c.h.b16 %v551
        %v1414 = vunpack.c.l.b16 %v552
        %v1415 = vunpack.c.h.b16 %v552
        %v1416 = vunpack.c.l.b16 %v553
        %v1417 = vunpack.c.h.b16 %v553
        %v1418 = vunpack.c.l.b16 %v554
        %v1419 = vunpack.c.h.b16 %v554
        %v1420 = vunpack.c.l.b16 %v555
        %v1421 = vunpack.c.h.b16 %v555
        %v1422 = vunpack.c.l.b16 %v556
        %v1423 = vunpack.c.h.b16 %v556
        %v1424 = vunpack.c.l.b16 %v557
        %v1425 = vunpack.c.h.b16 %v557
        %v1426 = vunpack.c.l.b16 %v558
        %v1427 = vunpack.c.h.b16 %v558
        %v1428 = vunpack.c.l.b16 %v559
        %v1429 = vunpack.c.h.b16 %v559
        %v1430 = vunpack.c.l.b16 %v560
        %v1431 = vunpack.c.h.b16 %v560
        %v1432 = vunpack.c.l.b16 %v561
        %v1433 = vunpack.c.h.b16 %v561
        %v1434 = vunpack.c.l.b16 %v562
        %v1435 = vunpack.c.h.b16 %v562
        %v1436 = vunpack.c.l.b16 %v563
        %v1437 = vunpack.c.h.b16 %v563
        %v1438 = vunpack.c.l.b16 %v564
        %v1439 = vunpack.c.h.b16 %v564
        %v1440 = vunpack.c.l.b16 %v565
        %v1441 = vunpack.c.h.b16 %v565
        %v1442 = vunpack.c.l.b16 %v566
        %v1443 = vunpack.c.h.b16 %v566
        %v1444 = vunpack.c.l.b16 %v567
        %v1445 = vunpack.c.h.b16 %v567
        %v1446 = vunpack.c.l.b16 %v568
        %v1447 = vunpack.c.h.b16 %v568
        %v1448 = vunpack.c.l.b16 %v569
        %v1449 = vunpack.c.h.b16 %v569
        %v1450 = vunpack.c.l.b16 %v570
        %v1451 = vunpack.c.h.b16 %v570
        %v1452 = vunpack.c.l.b16 %v571
        %v1453 = vunpack.c.h.b16 %v571
        %v1454 = vunpack.c.l.b16 %v572
        %v1455 = vunpack.c.h.b16 %v572
        %v1456 = vunpack.c.l.b16 %v573
        %v1457 = vunpack.c.h.b16 %v573
        %v1458 = vunpack.c.l.b16 %v574
        %v1459 = vunpack.c.h.b16 %v574
        %v1460 = vunpack.c.l.b16 %v575
        %v1461 = vunpack.c.h.b16 %v575
        %v1462 = vunpack.c.l.b16 %v576
        %v1463 = vunpack.c.h.b16 %v576
        %v1464 = vunpack.c.l.b16 %v577
        %v1465 = vunpack.c.h.b16 %v577
        %v1466 = vunpack.c.l.b16 %v578
        %v1467 = vunpack.c.h.b16 %v578
        %v1468 = vunpack.c.l.b16 %v579
        %v1469 = vunpack.c.h.b16 %v579
        %v1470 = vunpack.c.l.b16 %v580
        %v1471 = vunpack.c.h.b16 %v580
        %v1472 = vunpack.c.l.b16 %v581
        %v1473 = vunpack.c.h.b16 %v581
        %v1474 = vunpack.c.l.b16 %v582
        %v1475 = vunpack.c.h.b16 %v582
        %v1476 = vunpack.c.l.b16 %v583
        %v1477 = vunpack.c.h.b16 %v583
        %v1478 = vunpack.c.l.b16 %v584
        %v1479 = vunpack.c.h.b16 %v584
        %v1480 = vunpack.c.l.b16 %v585
        %v1481 = vunpack.c.h.b16 %v585
        %v1482 = vpack.c.b16 %v972, %v970
        %v1483 = vpack.c.b16 %v973, %v971
        %v1484 = vpack.c.b16 %v976, %v974
        %v1485 = vpack.c.b16 %v977, %v975
        %v1486 = vpack.c.b16 %v980, %v978
        %v1487 = vpack.c.b16 %v981, %v979
        %v1488 = vpack.c.b16 %v984, %v982
        %v1489 = vpack.c.b16 %v985, %v983
        %v1490 = vpack.c.b16 %v988, %v986
        %v1491 = vpack.c.b16 %v989, %v987
        %v1492 = vpack.c.b16 %v992, %v990
        %v1493 = vpack.c.b16 %v993, %v991
        %v1494 = vpack.c.b16 %v996, %v994
        %v1495 = vpack.c.b16 %v997, %v995
        %v1496 = vpack.c.b16 %v1000, %v998
        %v1497 = vpack.c.b16 %v1001, %v999
        %v1498 = vpack.c.b16 %v1004, %v1002
        %v1499 = vpack.c.b16 %v1005, %v1003
        %v1500 = vpack.c.b16 %v1008, %v1006
        %v1501 = vpack.c.b16 %v1009, %v1007
        %v1502 = vpack.c.b16 %v1012, %v1010
        %v1503 = vpack.c.b16 %v1013, %v1011
        %v1504 = vpack.c.b16 %v1016, %v1014
        %v1505 = vpack.c.b16 %v1017, %v1015
        %v1506 = vpack.c.b16 %v1020, %v1018
        %v1507 = vpack.c.b16 %v1021, %v1019
        %v1508 = vpack.c.b16 %v1024, %v1022
        %v1509 = vpack.c.b16 %v1025, %v1023
        %v1510 = vpack.c.b16 %v1028, %v1026
        %v1511 = vpack.c.b16 %v1029, %v1027
        %v1512 = vpack.c.b16 %v1032, %v1030
        %v1513 = vpack.c.b16 %v1033, %v1031
        %v1514 = vpack.c.b16 %v1036, %v1034
        %v1515 = vpack.c.b16 %v1037, %v1035
        %v1516 = vpack.c.b16 %v1040, %v1038
        %v1517 = vpack.c.b16 %v1041, %v1039
        %v1518 = vpack.c.b16 %v1044, %v1042
        %v1519 = vpack.c.b16 %v1045, %v1043
        %v1520 = vpack.c.b16 %v1048, %v1046
        %v1521 = vpack.c.b16 %v1049, %v1047
        %v1522 = vpack.c.b16 %v1052, %v1050
        %v1523 = vpack.c.b16 %v1053, %v1051
        %v1524 = vpack.c.b16 %v1056, %v1054
        %v1525 = vpack.c.b16 %v1057, %v1055
        %v1526 = vpack.c.b16 %v1060, %v1058
        %v1527 = vpack.c.b16 %v1061, %v1059
        %v1528 = vpack.c.b16 %v1064, %v1062
        %v1529 = vpack.c.b16 %v1065, %v1063
        %v1530 = vpack.c.b16 %v1068, %v1066
        %v1531 = vpack.c.b16 %v1069, %v1067
        %v1532 = vpack.c.b16 %v1072, %v1070
        %v1533 = vpack.c.b16 %v1073, %v1071
        %v1534 = vpack.c.b16 %v1076, %v1074
        %v1535 = vpack.c.b16 %v1077, %v1075
        %v1536 = vpack.c.b16 %v1080, %v1078
        %v1537 = vpack.c.b16 %v1081, %v1079
        %v1538 = vpack.c.b16 %v1084, %v1082
        %v1539 = vpack.c.b16 %v1085, %v1083
        %v1540 = vpack.c.b16 %v1088, %v1086
        %v1541 = vpack.c.b16 %v1089, %v1087
        %v1542 = vpack.c.b16 %v1092, %v1090
        %v1543 = vpack.c.b16 %v1093, %v1091
        %v1544 = vpack.c.b16 %v1096, %v1094
        %v1545 = vpack.c.b16 %v1097, %v1095
        %v1546 = vpack.c.b16 %v1100, %v1098
        %v1547 = vpack.c.b16 %v1101, %v1099
        %v1548 = vpack.c.b16 %v1104, %v1102
        %v1549 = vpack.c.b16 %v1105, %v1103
        %v1550 = vpack.c.b16 %v1108, %v1106
        %v1551 = vpack.c.b16 %v1109, %v1107
        %v1552 = vpack.c.b16 %v1112, %v1110
        %v1553 = vpack.c.b16 %v1113, %v1111
        %v1554 = vpack.c.b16 %v1116, %v1114
        %v1555 = vpack.c.b16 %v1117, %v1115
        %v1556 = vpack.c.b16 %v1120, %v1118
        %v1557 = vpack.c.b16 %v1121, %v1119
        %v1558 = vpack.c.b16 %v1124, %v1122
        %v1559 = vpack.c.b16 %v1125, %v1123
        %v1560 = vpack.c.b16 %v1128, %v1126
        %v1561 = vpack.c.b16 %v1129, %v1127
        %v1562 = vpack.c.b16 %v1132, %v1130
        %v1563 = vpack.c.b16 %v1133, %v1131
        %v1564 = vpack.c.b16 %v1136, %v1134
        %v1565 = vpack.c.b16 %v1137, %v1135
        %v1566 = vpack.c.b16 %v1140, %v1138
        %v1567 = vpack.c.b16 %v1141, %v1139
        %v1568 = vpack.c.b16 %v1144, %v1142
        %v1569 = vpack.c.b16 %v1145, %v1143
        %v1570 = vpack.c.b16 %v1148, %v1146
        %v1571 = vpack.c.b16 %v1149, %v1147
        %v1572 = vpack.c.b16 %v1152, %v1150
        %v1573 = vpack.c.b16 %v1153, %v1151
        %v1574 = vpack.c.b16 %v1156, %v1154
        %v1575 = vpack.c.b16 %v1157, %v1155
        %v1576 = vpack.c.b16 %v1160, %v1158
        %v1577 = vpack.c.b16 %v1161, %v1159
        %v1578 = vpack.c.b16 %v1164, %v1162
        %v1579 = vpack.c.b16 %v1165, %v1163
        %v1580 = vpack.c.b16 %v1168, %v1166
        %v1581 = vpack.c.b16 %v1169, %v1167
        %v1582 = vpack.c.b16 %v1172, %v1170
        %v1583 = vpack.c.b16 %v1173, %v1171
        %v1584 = vpack.c.b16 %v1176, %v1174
        %v1585 = vpack.c.b16 %v1177, %v1175
        %v1586 = vpack.c.b16 %v1180, %v1178
        %v1587 = vpack.c.b16 %v1181, %v1179
        %v1588 = vpack.c.b16 %v1184, %v1182
        %v1589 = vpack.c.b16 %v1185, %v1183
        %v1590 = vpack.c.b16 %v1188, %v1186
        %v1591 = vpack.c.b16 %v1189, %v1187
        %v1592 = vpack.c.b16 %v1192, %v1190
        %v1593 = vpack.c.b16 %v1193, %v1191
        %v1594 = vpack.c.b16 %v1196, %v1194
        %v1595 = vpack.c.b16 %v1197, %v1195
        %v1596 = vpack.c.b16 %v1200, %v1198
        %v1597 = vpack.c.b16 %v1201, %v1199
        %v1598 = vpack.c.b16 %v1204, %v1202
        %v1599 = vpack.c.b16 %v1205, %v1203
        %v1600 = vpack.c.b16 %v1208, %v1206
        %v1601 = vpack.c.b16 %v1209, %v1207
        %v1602 = vpack.c.b16 %v1212, %v1210
        %v1603 = vpack.c.b16 %v1213, %v1211
        %v1604 = vpack.c.b16 %v1216, %v1214
        %v1605 = vpack.c.b16 %v1217, %v1215
        %v1606 = vpack.c.b16 %v1220, %v1218
        %v1607 = vpack.c.b16 %v1221, %v1219
        %v1608 = vpack.c.b16 %v1224, %v1222
        %v1609 = vpack.c.b16 %v1225, %v1223
        %v1610 = vpack.c.b16 %v1228, %v1226
        %v1611 = vpack.c.b16 %v1229, %v1227
        %v1612 = vpack.c.b16 %v1232, %v1230
        %v1613 = vpack.c.b16 %v1233, %v1231
        %v1614 = vpack.c.b16 %v1236, %v1234
        %v1615 = vpack.c.b16 %v1237, %v1235
        %v1616 = vpack.c.b16 %v1240, %v1238
        %v1617 = vpack.c.b16 %v1241, %v1239
        %v1618 = vpack.c.b16 %v1244, %v1242
        %v1619 = vpack.c.b16 %v1245, %v1243
        %v1620 = vpack.c.b16 %v1248, %v1246
        %v1621 = vpack.c.b16 %v1249, %v1247
        %v1622 = vpack.c.b16 %v1252, %v1250
        %v1623 = vpack.c.b16 %v1253, %v1251
        %v1624 = vpack.c.b16 %v1256, %v1254
        %v1625 = vpack.c.b16 %v1257, %v1255
        %v1626 = vpack.c.b16 %v1260, %v1258
        %v1627 = vpack.c.b16 %v1261, %v1259
        %v1628 = vpack.c.b16 %v1264, %v1262
        %v1629 = vpack.c.b16 %v1265, %v1263
        %v1630 = vpack.c.b16 %v1268, %v1266
        %v1631 = vpack.c.b16 %v1269, %v1267
        %v1632 = vpack.c.b16 %v1272, %v1270
        %v1633 = vpack.c.b16 %v1273, %v1271
        %v1634 = vpack.c.b16 %v1276, %v1274
        %v1635 = vpack.c.b16 %v1277, %v1275
        %v1636 = vpack.c.b16 %v1280, %v1278
        %v1637 = vpack.c.b16 %v1281, %v1279
        %v1638 = vpack.c.b16 %v1284, %v1282
        %v1639 = vpack.c.b16 %v1285, %v1283
        %v1640 = vpack.c.b16 %v1288, %v1286
        %v1641 = vpack.c.b16 %v1289, %v1287
        %v1642 = vpack.c.b16 %v1292, %v1290
        %v1643 = vpack.c.b16 %v1293, %v1291
        %v1644 = vpack.c.b16 %v1296, %v1294
        %v1645 = vpack.c.b16 %v1297, %v1295
        %v1646 = vpack.c.b16 %v1300, %v1298
        %v1647 = vpack.c.b16 %v1301, %v1299
        %v1648 = vpack.c.b16 %v1304, %v1302
        %v1649 = vpack.c.b16 %v1305, %v1303
        %v1650 = vpack.c.b16 %v1308, %v1306
        %v1651 = vpack.c.b16 %v1309, %v1307
        %v1652 = vpack.c.b16 %v1312, %v1310
        %v1653 = vpack.c.b16 %v1313, %v1311
        %v1654 = vpack.c.b16 %v1316, %v1314
        %v1655 = vpack.c.b16 %v1317, %v1315
        %v1656 = vpack.c.b16 %v1320, %v1318
        %v1657 = vpack.c.b16 %v1321, %v1319
        %v1658 = vpack.c.b16 %v1324, %v1322
        %v1659 = vpack.c.b16 %v1325, %v1323
        %v1660 = vpack.c.b16 %v1328, %v1326
        %v1661 = vpack.c.b16 %v1329, %v1327
        %v1662 = vpack.c.b16 %v1332, %v1330
        %v1663 = vpack.c.b16 %v1333, %v1331
        %v1664 = vpack.c.b16 %v1336, %v1334
        %v1665 = vpack.c.b16 %v1337, %v1335
        %v1666 = vpack.c.b16 %v1340, %v1338
        %v1667 = vpack.c.b16 %v1341, %v1339
        %v1668 = vpack.c.b16 %v1344, %v1342
        %v1669 = vpack.c.b16 %v1345, %v1343
        %v1670 = vpack.c.b16 %v1348, %v1346
        %v1671 = vpack.c.b16 %v1349, %v1347
        %v1672 = vpack.c.b16 %v1352, %v1350
        %v1673 = vpack.c.b16 %v1353, %v1351
        %v1674 = vpack.c.b16 %v1356, %v1354
        %v1675 = vpack.c.b16 %v1357, %v1355
        %v1676 = vpack.c.b16 %v1360, %v1358
        %v1677 = vpack.c.b16 %v1361, %v1359
        %v1678 = vpack.c.b16 %v1364, %v1362
        %v1679 = vpack.c.b16 %v1365, %v1363
        %v1680 = vpack.c.b16 %v1368, %v1366
        %v1681 = vpack.c.b16 %v1369, %v1367
        %v1682 = vpack.c.b16 %v1372, %v1370
        %v1683 = vpack.c.b16 %v1373, %v1371
        %v1684 = vpack.c.b16 %v1376, %v1374
        %v1685 = vpack.c.b16 %v1377, %v1375
        %v1686 = vpack.c.b16 %v1380, %v1378
        %v1687 = vpack.c.b16 %v1381, %v1379
        %v1688 = vpack.c.b16 %v1384, %v1382
        %v1689 = vpack.c.b16 %v1385, %v1383
        %v1690 = vpack.c.b16 %v1388, %v1386
        %v1691 = vpack.c.b16 %v1389, %v1387
        %v1692 = vpack.c.b16 %v1392, %v1390
        %v1693 = vpack.c.b16 %v1393, %v1391
        %v1694 = vpack.c.b16 %v1396, %v1394
        %v1695 = vpack.c.b16 %v1397, %v1395
        %v1696 = vpack.c.b16 %v1400, %v1398
        %v1697 = vpack.c.b16 %v1401, %v1399
        %v1698 = vpack.c.b16 %v1404, %v1402
        %v1699 = vpack.c.b16 %v1405, %v1403
        %v1700 = vpack.c.b16 %v1408, %v1406
        %v1701 = vpack.c.b16 %v1409, %v1407
        %v1702 = vpack.c.b16 %v1412, %v1410
        %v1703 = vpack.c.b16 %v1413, %v1411
        %v1704 = vpack.c.b16 %v1416, %v1414
        %v1705 = vpack.c.b16 %v1417, %v1415
        %v1706 = vpack.c.b16 %v1420, %v1418
        %v1707 = vpack.c.b16 %v1421, %v1419
        %v1708 = vpack.c.b16 %v1424, %v1422
        %v1709 = vpack.c.b16 %v1425, %v1423
        %v1710 = vpack.c.b16 %v1428, %v1426
        %v1711 = vpack.c.b16 %v1429, %v1427
        %v1712 = vpack.c.b16 %v1432, %v1430
        %v1713 = vpack.c.b16 %v1433, %v1431
        %v1714 = vpack.c.b16 %v1436, %v1434
        %v1715 = vpack.c.b16 %v1437, %v1435
        %v1716 = vpack.c.b16 %v1440, %v1438
        %v1717 = vpack.c.b16 %v1441, %v1439
        %v1718 = vpack.c.b16 %v1444, %v1442
        %v1719 = vpack.c.b16 %v1445, %v1443
        %v1720 = vpack.c.b16 %v1448, %v1446
        %v1721 = vpack.c.b16 %v1449, %v1447
        %v1722 = vpack.c.b16 %v1452, %v1450
        %v1723 = vpack.c.b16 %v1453, %v1451
        %v1724 = vpack.c.b16 %v1456, %v1454
        %v1725 = vpack.c.b16 %v1457, %v1455
        %v1726 = vpack.c.b16 %v1460, %v1458
        %v1727 = vpack.c.b16 %v1461, %v1459
        %v1728 = vpack.c.b16 %v1464, %v1462
        %v1729 = vpack.c.b16 %v1465, %v1463
        %v1730 = vpack.c.b16 %v1468, %v1466
        %v1731 = vpack.c.b16 %v1469, %v1467
        %v1732 = vpack.c.b16 %v1472, %v1470
        %v1733 = vpack.c.b16 %v1473, %v1471
        %v1734 = vpack.c.b16 %v1476, %v1474
        %v1735 = vpack.c.b16 %v1477, %v1475
        %v1736 = vpack.c.b16 %v1480, %v1478
        %v1737 = vpack.c.b16 %v1481, %v1479
        %1994 = vmatprep.subr.bf16.mxu0 %v1483
        %1995 = vmatpush1.bf16.msra.mxu0 %v1482
        %1996 = vmatprep.subr.bf16.mxu0 %v1485
        %1997 = vmatpush1.bf16.msra.mxu0 %v1484
        %1998 = vmatprep.subr.bf16.mxu0 %v1487
        %1999 = vmatpush1.bf16.msra.mxu0 %v1486
        %2000 = vmatprep.subr.bf16.mxu0 %v1489
        %2001 = vmatpush1.bf16.msra.mxu0 %v1488
        %2002 = vmatprep.subr.bf16.mxu0 %v1491
        %2003 = vmatpush1.bf16.msra.mxu0 %v1490
        %2004 = vmatprep.subr.bf16.mxu0 %v1493
        %2005 = vmatpush1.bf16.msra.mxu0 %v1492
        %2006 = vmatprep.subr.bf16.mxu0 %v1495
        %2007 = vmatpush1.bf16.msra.mxu0 %v1494
        %2008 = vmatprep.subr.bf16.mxu0 %v1497
        %2009 = vmatpush1.bf16.msra.mxu0 %v1496
        %2010 = vmatprep.subr.bf16.mxu0 %v1499
        %2011 = vmatpush1.bf16.msra.mxu0 %v1498
        %2012 = vmatprep.subr.bf16.mxu0 %v1501
        %2013 = vmatpush1.bf16.msra.mxu0 %v1500
        %2014 = vmatprep.subr.bf16.mxu0 %v1503
        %2015 = vmatpush1.bf16.msra.mxu0 %v1502
        %2016 = vmatprep.subr.bf16.mxu0 %v1505
        %2017 = vmatpush1.bf16.msra.mxu0 %v1504
        %2018 = vmatprep.subr.bf16.mxu0 %v1507
        %2019 = vmatpush1.bf16.msra.mxu0 %v1506
        %2020 = vmatprep.subr.bf16.mxu0 %v1509
        %2021 = vmatpush1.bf16.msra.mxu0 %v1508
        %2022 = vmatprep.subr.bf16.mxu0 %v1511
        %2023 = vmatpush1.bf16.msra.mxu0 %v1510
        %2024 = vmatprep.subr.bf16.mxu0 %v1513
        %2025 = vmatpush1.bf16.msra.mxu0 %v1512
        %2026 = vmatprep.mubr.bf16.mxu0 %v637
        %2027 = vmatmul.mubr.bf16.gmra.mrb[0].mxu0 %v623
        %v2028 = vpop.f32.mrb[0].mxu0
        %v2029 = vadd.f32 %v591, %v2028
        %v2030 = vpop.f32.mrb[0].mxu0
        %v2031 = vadd.f32 %v595, %v2030
        %v2032 = vpop.f32.mrb[0].mxu0
        %v2033 = vpop.f32.mrb[0].mxu0
        %2034 = vdwg.mxu0
        %2035 = vmatprep.subr.bf16.mxu0 %v1515
        %2036 = vmatpush1.bf16.msra.mxu0 %v1514
        %2037 = vmatprep.subr.bf16.mxu0 %v1517
        %2038 = vmatpush1.bf16.msra.mxu0 %v1516
        %2039 = vmatprep.subr.bf16.mxu0 %v1519
        %2040 = vmatpush1.bf16.msra.mxu0 %v1518
        %2041 = vmatprep.subr.bf16.mxu0 %v1521
        %2042 = vmatpush1.bf16.msra.mxu0 %v1520
        %2043 = vmatprep.subr.bf16.mxu0 %v1523
        %2044 = vmatpush1.bf16.msra.mxu0 %v1522
        %2045 = vmatprep.subr.bf16.mxu0 %v1525
        %2046 = vmatpush1.bf16.msra.mxu0 %v1524
        %2047 = vmatprep.subr.bf16.mxu0 %v1527
        %2048 = vmatpush1.bf16.msra.mxu0 %v1526
        %2049 = vmatprep.subr.bf16.mxu0 %v1529
        %2050 = vmatpush1.bf16.msra.mxu0 %v1528
        %2051 = vmatprep.subr.bf16.mxu0 %v1531
        %2052 = vmatpush1.bf16.msra.mxu0 %v1530
        %2053 = vmatprep.subr.bf16.mxu0 %v1533
        %2054 = vmatpush1.bf16.msra.mxu0 %v1532
        %2055 = vmatprep.subr.bf16.mxu0 %v1535
        %2056 = vmatpush1.bf16.msra.mxu0 %v1534
        %2057 = vmatprep.subr.bf16.mxu0 %v1537
        %2058 = vmatpush1.bf16.msra.mxu0 %v1536
        %2059 = vmatprep.subr.bf16.mxu0 %v1539
        %2060 = vmatpush1.bf16.msra.mxu0 %v1538
        %2061 = vmatprep.subr.bf16.mxu0 %v1541
        %2062 = vmatpush1.bf16.msra.mxu0 %v1540
        %2063 = vmatprep.subr.bf16.mxu0 %v1543
        %2064 = vmatpush1.bf16.msra.mxu0 %v1542
        %2065 = vmatprep.subr.bf16.mxu0 %v1545
        %2066 = vmatpush1.bf16.msra.mxu0 %v1544
        %2067 = vmatprep.mubr.bf16.mxu0 %v647
        %2068 = vmatmul.mubr.bf16.gmra.mrb[0].mxu0 %v645
        %v2069 = vpop.f32.mrb[0].mxu0
        %v2070 = vadd.f32 %v2029, %v2069
        %v2071 = vpop.f32.mrb[0].mxu0
        %v2072 = vadd.f32 %v2031, %v2071
        %v2073 = vpop.f32.mrb[0].mxu0
        %v2074 = vpop.f32.mrb[0].mxu0
        %2075 = vdwg.mxu0
        %2076 = vmatprep.subr.bf16.mxu0 %v1547
        %2077 = vmatpush1.bf16.msra.mxu0 %v1546
        %2078 = vmatprep.subr.bf16.mxu0 %v1549
        %2079 = vmatpush1.bf16.msra.mxu0 %v1548
        %2080 = vmatprep.subr.bf16.mxu0 %v1551
        %2081 = vmatpush1.bf16.msra.mxu0 %v1550
        %2082 = vmatprep.subr.bf16.mxu0 %v1553
        %2083 = vmatpush1.bf16.msra.mxu0 %v1552
        %2084 = vmatprep.subr.bf16.mxu0 %v1555
        %2085 = vmatpush1.bf16.msra.mxu0 %v1554
        %2086 = vmatprep.subr.bf16.mxu0 %v1557
        %2087 = vmatpush1.bf16.msra.mxu0 %v1556
        %2088 = vmatprep.subr.bf16.mxu0 %v1559
        %2089 = vmatpush1.bf16.msra.mxu0 %v1558
        %2090 = vmatprep.subr.bf16.mxu0 %v1561
        %2091 = vmatpush1.bf16.msra.mxu0 %v1560
        %2092 = vmatprep.subr.bf16.mxu0 %v1563
        %2093 = vmatpush1.bf16.msra.mxu0 %v1562
        %2094 = vmatprep.subr.bf16.mxu0 %v1565
        %2095 = vmatpush1.bf16.msra.mxu0 %v1564
        %2096 = vmatprep.subr.bf16.mxu0 %v1567
        %2097 = vmatpush1.bf16.msra.mxu0 %v1566
        %2098 = vmatprep.subr.bf16.mxu0 %v1569
        %2099 = vmatpush1.bf16.msra.mxu0 %v1568
        %2100 = vmatprep.subr.bf16.mxu0 %v1571
        %2101 = vmatpush1.bf16.msra.mxu0 %v1570
        %2102 = vmatprep.subr.bf16.mxu0 %v1573
        %2103 = vmatpush1.bf16.msra.mxu0 %v1572
        %2104 = vmatprep.subr.bf16.mxu0 %v1575
        %2105 = vmatpush1.bf16.msra.mxu0 %v1574
        %2106 = vmatprep.subr.bf16.mxu0 %v1577
        %2107 = vmatpush1.bf16.msra.mxu0 %v1576
        %2108 = vmatprep.mubr.bf16.mxu0 %v644
        %2109 = vmatmul.mubr.bf16.gmra.mrb[0].mxu0 %v630
        %v2110 = vpop.f32.mrb[0].mxu0
        %v2111 = vadd.f32 %v2070, %v2110
        %v2112 = vpop.f32.mrb[0].mxu0
        %v2113 = vadd.f32 %v2072, %v2112
        %v2114 = vpop.f32.mrb[0].mxu0
        %v2115 = vpop.f32.mrb[0].mxu0
        %2116 = vdwg.mxu0
        %2117 = vmatprep.subr.bf16.mxu0 %v1579
        %2118 = vmatpush1.bf16.msra.mxu0 %v1578
        %2119 = vmatprep.subr.bf16.mxu0 %v1581
        %2120 = vmatpush1.bf16.msra.mxu0 %v1580
        %2121 = vmatprep.subr.bf16.mxu0 %v1583
        %2122 = vmatpush1.bf16.msra.mxu0 %v1582
        %2123 = vmatprep.subr.bf16.mxu0 %v1585
        %2124 = vmatpush1.bf16.msra.mxu0 %v1584
        %2125 = vmatprep.subr.bf16.mxu0 %v1587
        %2126 = vmatpush1.bf16.msra.mxu0 %v1586
        %2127 = vmatprep.subr.bf16.mxu0 %v1589
        %2128 = vmatpush1.bf16.msra.mxu0 %v1588
        %2129 = vmatprep.subr.bf16.mxu0 %v1591
        %2130 = vmatpush1.bf16.msra.mxu0 %v1590
        %2131 = vmatprep.subr.bf16.mxu0 %v1593
        %2132 = vmatpush1.bf16.msra.mxu0 %v1592
        %2133 = vmatprep.subr.bf16.mxu0 %v1595
        %2134 = vmatpush1.bf16.msra.mxu0 %v1594
        %2135 = vmatprep.subr.bf16.mxu0 %v1597
        %2136 = vmatpush1.bf16.msra.mxu0 %v1596
        %2137 = vmatprep.subr.bf16.mxu0 %v1599
        %2138 = vmatpush1.bf16.msra.mxu0 %v1598
        %2139 = vmatprep.subr.bf16.mxu0 %v1601
        %2140 = vmatpush1.bf16.msra.mxu0 %v1600
        %2141 = vmatprep.subr.bf16.mxu0 %v1603
        %2142 = vmatpush1.bf16.msra.mxu0 %v1602
        %2143 = vmatprep.subr.bf16.mxu0 %v1605
        %2144 = vmatpush1.bf16.msra.mxu0 %v1604
        %2145 = vmatprep.subr.bf16.mxu0 %v1607
        %2146 = vmatpush1.bf16.msra.mxu0 %v1606
        %2147 = vmatprep.subr.bf16.mxu0 %v1609
        %2148 = vmatpush1.bf16.msra.mxu0 %v1608
        %2149 = vmatprep.mubr.bf16.mxu0 %v648
        %2150 = vmatmul.mubr.bf16.gmra.mrb[0].mxu0 %v646
        %v2151 = vpop.f32.mrb[0].mxu0
        %v2152 = vadd.f32 %v2111, %v2151
        %v2153 = vpop.f32.mrb[0].mxu0
        %v2154 = vadd.f32 %v2113, %v2153
        %v2155 = vpop.f32.mrb[0].mxu0
        %v2156 = vpop.f32.mrb[0].mxu0
        %2157 = vdwg.mxu0
        %2158 = vmatprep.subr.bf16.mxu0 %v1611
        %2159 = vmatpush1.bf16.msra.mxu0 %v1610
        %2160 = vmatprep.subr.bf16.mxu0 %v1613
        %2161 = vmatpush1.bf16.msra.mxu0 %v1612
        %2162 = vmatprep.subr.bf16.mxu0 %v1615
        %2163 = vmatpush1.bf16.msra.mxu0 %v1614
        %2164 = vmatprep.subr.bf16.mxu0 %v1617
        %2165 = vmatpush1.bf16.msra.mxu0 %v1616
        %2166 = vmatprep.subr.bf16.mxu0 %v1619
        %2167 = vmatpush1.bf16.msra.mxu0 %v1618
        %2168 = vmatprep.subr.bf16.mxu0 %v1621
        %2169 = vmatpush1.bf16.msra.mxu0 %v1620
        %2170 = vmatprep.subr.bf16.mxu0 %v1623
        %2171 = vmatpush1.bf16.msra.mxu0 %v1622
        %2172 = vmatprep.subr.bf16.mxu0 %v1625
        %2173 = vmatpush1.bf16.msra.mxu0 %v1624
        %2174 = vmatprep.subr.bf16.mxu0 %v1627
        %2175 = vmatpush1.bf16.msra.mxu0 %v1626
        %2176 = vmatprep.subr.bf16.mxu0 %v1629
        %2177 = vmatpush1.bf16.msra.mxu0 %v1628
        %2178 = vmatprep.subr.bf16.mxu0 %v1631
        %2179 = vmatpush1.bf16.msra.mxu0 %v1630
        %2180 = vmatprep.subr.bf16.mxu0 %v1633
        %2181 = vmatpush1.bf16.msra.mxu0 %v1632
        %2182 = vmatprep.subr.bf16.mxu0 %v1635
        %2183 = vmatpush1.bf16.msra.mxu0 %v1634
        %2184 = vmatprep.subr.bf16.mxu0 %v1637
        %2185 = vmatpush1.bf16.msra.mxu0 %v1636
        %2186 = vmatprep.subr.bf16.mxu0 %v1639
        %2187 = vmatpush1.bf16.msra.mxu0 %v1638
        %2188 = vmatprep.subr.bf16.mxu0 %v1641
        %2189 = vmatpush1.bf16.msra.mxu0 %v1640
        %2190 = vmatprep.mubr.bf16.mxu0 %v686
        %2191 = vmatmul.mubr.bf16.gmra.mrb[0].mxu0 %v672
        %v2192 = vpop.f32.mrb[0].mxu0
        %v2193 = vadd.f32 %v2152, %v2192
        %v2194 = vpop.f32.mrb[0].mxu0
        %v2195 = vadd.f32 %v2154, %v2194
        %v2196 = vpop.f32.mrb[0].mxu0
        %v2197 = vpop.f32.mrb[0].mxu0
        %2198 = vdwg.mxu0
        %2199 = vmatprep.subr.bf16.mxu0 %v1643
        %2200 = vmatpush1.bf16.msra.mxu0 %v1642
        %2201 = vmatprep.subr.bf16.mxu0 %v1645
        %2202 = vmatpush1.bf16.msra.mxu0 %v1644
        %2203 = vmatprep.subr.bf16.mxu0 %v1647
        %2204 = vmatpush1.bf16.msra.mxu0 %v1646
        %2205 = vmatprep.subr.bf16.mxu0 %v1649
        %2206 = vmatpush1.bf16.msra.mxu0 %v1648
        %2207 = vmatprep.subr.bf16.mxu0 %v1651
        %2208 = vmatpush1.bf16.msra.mxu0 %v1650
        %2209 = vmatprep.subr.bf16.mxu0 %v1653
        %2210 = vmatpush1.bf16.msra.mxu0 %v1652
        %2211 = vmatprep.subr.bf16.mxu0 %v1655
        %2212 = vmatpush1.bf16.msra.mxu0 %v1654
        %2213 = vmatprep.subr.bf16.mxu0 %v1657
        %2214 = vmatpush1.bf16.msra.mxu0 %v1656
        %2215 = vmatprep.subr.bf16.mxu0 %v1659
        %2216 = vmatpush1.bf16.msra.mxu0 %v1658
        %2217 = vmatprep.subr.bf16.mxu0 %v1661
        %2218 = vmatpush1.bf16.msra.mxu0 %v1660
        %2219 = vmatprep.subr.bf16.mxu0 %v1663
        %2220 = vmatpush1.bf16.msra.mxu0 %v1662
        %2221 = vmatprep.subr.bf16.mxu0 %v1665
        %2222 = vmatpush1.bf16.msra.mxu0 %v1664
        %2223 = vmatprep.subr.bf16.mxu0 %v1667
        %2224 = vmatpush1.bf16.msra.mxu0 %v1666
        %2225 = vmatprep.subr.bf16.mxu0 %v1669
        %2226 = vmatpush1.bf16.msra.mxu0 %v1668
        %2227 = vmatprep.subr.bf16.mxu0 %v1671
        %2228 = vmatpush1.bf16.msra.mxu0 %v1670
        %2229 = vmatprep.subr.bf16.mxu0 %v1673
        %2230 = vmatpush1.bf16.msra.mxu0 %v1672
        %2231 = vmatprep.mubr.bf16.mxu0 %v696
        %2232 = vmatmul.mubr.bf16.gmra.mrb[0].mxu0 %v694
        %v2233 = vpop.f32.mrb[0].mxu0
        %v2234 = vadd.f32 %v2193, %v2233
        %v2235 = vpop.f32.mrb[0].mxu0
        %v2236 = vadd.f32 %v2195, %v2235
        %v2237 = vpop.f32.mrb[0].mxu0
        %v2238 = vpop.f32.mrb[0].mxu0
        %2239 = vdwg.mxu0
        %2240 = vmatprep.subr.bf16.mxu0 %v1675
        %2241 = vmatpush1.bf16.msra.mxu0 %v1674
        %2242 = vmatprep.subr.bf16.mxu0 %v1677
        %2243 = vmatpush1.bf16.msra.mxu0 %v1676
        %2244 = vmatprep.subr.bf16.mxu0 %v1679
        %2245 = vmatpush1.bf16.msra.mxu0 %v1678
        %2246 = vmatprep.subr.bf16.mxu0 %v1681
        %2247 = vmatpush1.bf16.msra.mxu0 %v1680
        %2248 = vmatprep.subr.bf16.mxu0 %v1683
        %2249 = vmatpush1.bf16.msra.mxu0 %v1682
        %2250 = vmatprep.subr.bf16.mxu0 %v1685
        %2251 = vmatpush1.bf16.msra.mxu0 %v1684
        %2252 = vmatprep.subr.bf16.mxu0 %v1687
        %2253 = vmatpush1.bf16.msra.mxu0 %v1686
        %2254 = vmatprep.subr.bf16.mxu0 %v1689
        %2255 = vmatpush1.bf16.msra.mxu0 %v1688
        %2256 = vmatprep.subr.bf16.mxu0 %v1691
        %2257 = vmatpush1.bf16.msra.mxu0 %v1690
        %2258 = vmatprep.subr.bf16.mxu0 %v1693
        %2259 = vmatpush1.bf16.msra.mxu0 %v1692
        %2260 = vmatprep.subr.bf16.mxu0 %v1695
        %2261 = vmatpush1.bf16.msra.mxu0 %v1694
        %2262 = vmatprep.subr.bf16.mxu0 %v1697
        %2263 = vmatpush1.bf16.msra.mxu0 %v1696
        %2264 = vmatprep.subr.bf16.mxu0 %v1699
        %2265 = vmatpush1.bf16.msra.mxu0 %v1698
        %2266 = vmatprep.subr.bf16.mxu0 %v1701
        %2267 = vmatpush1.bf16.msra.mxu0 %v1700
        %2268 = vmatprep.subr.bf16.mxu0 %v1703
        %2269 = vmatpush1.bf16.msra.mxu0 %v1702
        %2270 = vmatprep.subr.bf16.mxu0 %v1705
        %2271 = vmatpush1.bf16.msra.mxu0 %v1704
        %2272 = vmatprep.mubr.bf16.mxu0 %v693
        %2273 = vmatmul.mubr.bf16.gmra.mrb[0].mxu0 %v679
        %v2274 = vpop.f32.mrb[0].mxu0
        %v2275 = vadd.f32 %v2234, %v2274
        %v2276 = vpop.f32.mrb[0].mxu0
        %v2277 = vadd.f32 %v2236, %v2276
        %v2278 = vpop.f32.mrb[0].mxu0
        %v2279 = vpop.f32.mrb[0].mxu0
        %2280 = vdwg.mxu0
        %2281 = vmatprep.subr.bf16.mxu0 %v1707
        %2282 = vmatpush1.bf16.msra.mxu0 %v1706
        %2283 = vmatprep.subr.bf16.mxu0 %v1709
        %2284 = vmatpush1.bf16.msra.mxu0 %v1708
        %2285 = vmatprep.subr.bf16.mxu0 %v1711
        %2286 = vmatpush1.bf16.msra.mxu0 %v1710
        %2287 = vmatprep.subr.bf16.mxu0 %v1713
        %2288 = vmatpush1.bf16.msra.mxu0 %v1712
        %2289 = vmatprep.subr.bf16.mxu0 %v1715
        %2290 = vmatpush1.bf16.msra.mxu0 %v1714
        %2291 = vmatprep.subr.bf16.mxu0 %v1717
        %2292 = vmatpush1.bf16.msra.mxu0 %v1716
        %2293 = vmatprep.subr.bf16.mxu0 %v1719
        %2294 = vmatpush1.bf16.msra.mxu0 %v1718
        %2295 = vmatprep.subr.bf16.mxu0 %v1721
        %2296 = vmatpush1.bf16.msra.mxu0 %v1720
        %2297 = vmatprep.subr.bf16.mxu0 %v1723
        %2298 = vmatpush1.bf16.msra.mxu0 %v1722
        %2299 = vmatprep.subr.bf16.mxu0 %v1725
        %2300 = vmatpush1.bf16.msra.mxu0 %v1724
        %2301 = vmatprep.subr.bf16.mxu0 %v1727
        %2302 = vmatpush1.bf16.msra.mxu0 %v1726
        %2303 = vmatprep.subr.bf16.mxu0 %v1729
        %2304 = vmatpush1.bf16.msra.mxu0 %v1728
        %2305 = vmatprep.subr.bf16.mxu0 %v1731
        %2306 = vmatpush1.bf16.msra.mxu0 %v1730
        %2307 = vmatprep.subr.bf16.mxu0 %v1733
        %2308 = vmatpush1.bf16.msra.mxu0 %v1732
        %2309 = vmatprep.subr.bf16.mxu0 %v1735
        %2310 = vmatpush1.bf16.msra.mxu0 %v1734
        %2311 = vmatprep.subr.bf16.mxu0 %v1737
        %2312 = vmatpush1.bf16.msra.mxu0 %v1736
        %2313 = vmatprep.mubr.bf16.mxu0 %v697
        %2314 = vmatmul.mubr.bf16.gmra.mrb[0].mxu0 %v695
        %v2315 = vpop.f32.mrb[0].mxu0
        %v2316 = vadd.f32 %v2275, %v2315
        %v2317 = vpop.f32.mrb[0].mxu0
        %v2318 = vadd.f32 %v2277, %v2317
        %v2319 = vpop.f32.mrb[0].mxu0
        %v2320 = vpop.f32.mrb[0].mxu0
        %2321 = vdwg.mxu0
        %vm2322 = vcmp.ge.f32.partialorder %v2316, 0.0
        %vm2323 = vcmp.ge.f32.partialorder %v2318, 0.0
        %v2324 = vmul.f32 %v2316, 0.01
        %v2325 = vmul.f32 %v2318, 0.01
        %v2326 = vsel %vm2322, %v2316, %v2324
        %v2327 = vsel %vm2323, %v2318, %v2325
        %v2328 = vld [vmem:[#allocation2] sm:$0x3]
        %v2329 = vpack.c.bf16 %v2326, %v2326
        %v2330 = vpack.c.bf16 %v2327, %v2327
        %v2331 = vld [vmem:[%s283] sm:$0xf]
        %v2332 = vld [vmem:[%s283 + $0x4] sm:$0xf]
        %v2333 = vld [vmem:[%s283 + $0x8] sm:$0xf]
        %v2334 = vld [vmem:[%s283 + $0xc] sm:$0xf]
        %v2335 = vld [vmem:[%s283 + $0x10] sm:$0xf]
        %v2336 = vld [vmem:[%s283 + $0x14] sm:$0xf]
        %v2337 = vld [vmem:[%s283 + $0x18] sm:$0xf]
        %v2338 = vld [vmem:[%s283 + $0x1c] sm:$0xf]
        %v2339 = vld [vmem:[%s283 + $0x20] sm:$0xf]
        %v2340 = vld [vmem:[%s283 + $0x24] sm:$0xf]
        %v2341 = vld [vmem:[%s283 + $0x28] sm:$0xf]
        %v2342 = vld [vmem:[%s283 + $0x2c] sm:$0xf]
        %v2343 = vld [vmem:[%s283 + $0x30] sm:$0xf]
        %v2344 = vld [vmem:[%s283 + $0x34] sm:$0xf]
        %v2345 = vld [vmem:[%s283 + $0x38] sm:$0xf]
        %v2346 = vld [vmem:[%s283 + $0x3c] sm:$0xf]
        %v2347 = vld [vmem:[%s283 + $0x40] sm:$0xf]
        %v2348 = vld [vmem:[%s283 + $0x44] sm:$0xf]
        %v2349 = vld [vmem:[%s283 + $0x48] sm:$0xf]
        %v2350 = vld [vmem:[%s283 + $0x4c] sm:$0xf]
        %v2351 = vld [vmem:[%s283 + $0x50] sm:$0xf]
        %v2352 = vld [vmem:[%s283 + $0x54] sm:$0xf]
        %v2353 = vld [vmem:[%s283 + $0x58] sm:$0xf]
        %v2354 = vld [vmem:[%s283 + $0x5c] sm:$0xf]
        %v2355 = vld [vmem:[%s283 + $0x60] sm:$0xf]
        %v2356 = vld [vmem:[%s283 + $0x64] sm:$0xf]
        %v2357 = vld [vmem:[%s283 + $0x68] sm:$0xf]
        %v2358 = vld [vmem:[%s283 + $0x6c] sm:$0xf]
        %v2359 = vld [vmem:[%s283 + $0x70] sm:$0xf]
        %v2360 = vld [vmem:[%s283 + $0x74] sm:$0xf]
        %v2361 = vld [vmem:[%s283 + $0x78] sm:$0xf]
        %v2362 = vld [vmem:[%s283 + $0x7c] sm:$0xf]
        %v2395 = vunpack.c.l.b16 %v2331
        %v2396 = vunpack.c.l.b16 %v2332
        %v2397 = vunpack.c.l.b16 %v2333
        %v2398 = vunpack.c.l.b16 %v2334
        %v2399 = vunpack.c.l.b16 %v2335
        %v2400 = vunpack.c.l.b16 %v2336
        %v2401 = vunpack.c.l.b16 %v2337
        %v2402 = vunpack.c.l.b16 %v2338
        %v2403 = vunpack.c.l.b16 %v2339
        %v2404 = vunpack.c.l.b16 %v2340
        %v2405 = vunpack.c.l.b16 %v2341
        %v2406 = vunpack.c.l.b16 %v2342
        %v2407 = vunpack.c.l.b16 %v2343
        %v2408 = vunpack.c.l.b16 %v2344
        %v2409 = vunpack.c.l.b16 %v2345
        %v2410 = vunpack.c.l.b16 %v2346
        %v2411 = vunpack.c.l.b16 %v2347
        %v2412 = vunpack.c.l.b16 %v2348
        %v2413 = vunpack.c.l.b16 %v2349
        %v2414 = vunpack.c.l.b16 %v2350
        %v2415 = vunpack.c.l.b16 %v2351
        %v2416 = vunpack.c.l.b16 %v2352
        %v2417 = vunpack.c.l.b16 %v2353
        %v2418 = vunpack.c.l.b16 %v2354
        %v2419 = vunpack.c.l.b16 %v2355
        %v2420 = vunpack.c.l.b16 %v2356
        %v2421 = vunpack.c.l.b16 %v2357
        %v2422 = vunpack.c.l.b16 %v2358
        %v2423 = vunpack.c.l.b16 %v2359
        %v2424 = vunpack.c.l.b16 %v2360
        %v2425 = vunpack.c.l.b16 %v2361
        %v2426 = vunpack.c.l.b16 %v2362
        %v2427 = vpack.c.b16 %v2396, %v2395
        %v2428 = vpack.c.b16 %v2398, %v2397
        %v2429 = vpack.c.b16 %v2400, %v2399
        %v2430 = vpack.c.b16 %v2402, %v2401
        %v2431 = vpack.c.b16 %v2404, %v2403
        %v2432 = vpack.c.b16 %v2406, %v2405
        %v2433 = vpack.c.b16 %v2408, %v2407
        %v2434 = vpack.c.b16 %v2410, %v2409
        %v2435 = vpack.c.b16 %v2412, %v2411
        %v2436 = vpack.c.b16 %v2414, %v2413
        %v2437 = vpack.c.b16 %v2416, %v2415
        %v2438 = vpack.c.b16 %v2418, %v2417
        %v2439 = vpack.c.b16 %v2420, %v2419
        %v2440 = vpack.c.b16 %v2422, %v2421
        %v2441 = vpack.c.b16 %v2424, %v2423
        %v2442 = vpack.c.b16 %v2426, %v2425
        %2459 = vmatprep.subr.bf16.mxu0 0
        %2460 = vmatpush1.bf16.msra.mxu0 %v2427
        %2461 = vmatprep.subr.bf16.mxu0 0
        %2462 = vmatpush1.bf16.msra.mxu0 %v2428
        %2463 = vmatprep.subr.bf16.mxu0 0
        %2464 = vmatpush1.bf16.msra.mxu0 %v2429
        %2465 = vmatprep.subr.bf16.mxu0 0
        %2466 = vmatpush1.bf16.msra.mxu0 %v2430
        %2467 = vmatprep.subr.bf16.mxu0 0
        %2468 = vmatpush1.bf16.msra.mxu0 %v2431
        %2469 = vmatprep.subr.bf16.mxu0 0
        %2470 = vmatpush1.bf16.msra.mxu0 %v2432
        %2471 = vmatprep.subr.bf16.mxu0 0
        %2472 = vmatpush1.bf16.msra.mxu0 %v2433
        %2473 = vmatprep.subr.bf16.mxu0 0
        %2474 = vmatpush1.bf16.msra.mxu0 %v2434
        %2475 = vmatprep.subr.bf16.mxu0 0
        %2476 = vmatpush1.bf16.msra.mxu0 %v2435
        %2477 = vmatprep.subr.bf16.mxu0 0
        %2478 = vmatpush1.bf16.msra.mxu0 %v2436
        %2479 = vmatprep.subr.bf16.mxu0 0
        %2480 = vmatpush1.bf16.msra.mxu0 %v2437
        %2481 = vmatprep.subr.bf16.mxu0 0
        %2482 = vmatpush1.bf16.msra.mxu0 %v2438
        %2483 = vmatprep.subr.bf16.mxu0 0
        %2484 = vmatpush1.bf16.msra.mxu0 %v2439
        %2485 = vmatprep.subr.bf16.mxu0 0
        %2486 = vmatpush1.bf16.msra.mxu0 %v2440
        %2487 = vmatprep.subr.bf16.mxu0 0
        %2488 = vmatpush1.bf16.msra.mxu0 %v2441
        %2489 = vmatprep.subr.bf16.mxu0 0
        %2490 = vmatpush1.bf16.msra.mxu0 %v2442
        %2491 = vmatprep.mubr.bf16.mxu0 %v2330
        %2492 = vmatmul.mubr.bf16.gmra.mrb[0].mxu0 %v2329
        %v2493 = vpop.f32.mrb[0].mxu0
        %v2494 = vadd.f32 0.0, %v2493
        %v2495 = vpop.f32.mrb[0].mxu0
        %v2496 = vpop.f32.mrb[0].mxu0
        %v2497 = vpop.f32.mrb[0].mxu0
        %2498 = vdwg.mxu0
        %v2499 = vadd.f32 %v2328, %v2494
        %2500 = vst [vmem:[#allocation2] sm:$0x3] %v2499
        %p2501 = scmp.eq.s32.totalorder %s24, 3
        // Predicated region
        $region61: #{encoder_forward.5} parent=39 // pred_check
          %p2502 = pneg %p2501
        $region62: #{encoder_forward.5} parent=39 // pred_check_branch
          %2504 = sbr.rel (%p2502) target = $region64
        $region63: #{encoder_forward.5} parent=39 // pred_region
          %v2505 = vld [vmem:[#allocation2] sm:$0x3]
          %v2506 = vld [vmem:[#allocation9] sm:$0x1]
          %v2508 = vlaneseq
          %v2509 = vshrl.u32 %v2508, 7
          %v2510 = vsub.s32 0, %v2509
          %v2511 = vrot.slane %v2506, %v2510
          %v2513 = vadd.f32 %v2505, %v2511
          %2514 = vst [vmem:[#allocation11] sm:$0x3] %v2513
        $region64: #{encoder_forward.5} parent=39 // pred_fallthru
          _
        // Predicated region
        $region65: #{encoder_forward.5} parent=39 // pred_check
          %p2515 = pneg %p157
        $region66: #{encoder_forward.5} parent=39 // pred_check_branch
          %2517 = sbr.rel (%p2515) target = $region68
        $region67: #{encoder_forward.5} parent=39 // pred_region
          %s2519 = ssub.s32 32, 32
          %2520 = vsyncadd [#allocation5], %s2519
          %s2522 = sshll.u32 [#allocation11], 4
          %s2523 = int_to_ptr.vmem [resolvable:$true] %s2522
          %2525 = dma.vmem_to_hbm [thread:$0]  %s2523, 32, %s5, [#allocation5]
        $region68: #{encoder_forward.5} parent=39 // pred_fallthru
          _
        // Predicated region
        $region69: #{encoder_forward.5} parent=39 // pred_check
          %p2526 = pneg %p157
        $region70: #{encoder_forward.5} parent=39 // pred_check_branch
          %2528 = sbr.rel (%p2526) target = $region72
        $region71: #{encoder_forward.5} parent=39 // pred_region
          %2529 = dma.done [#allocation5], 32
        $region72: #{encoder_forward.5} parent=39 // pred_fallthru
          _
      $region40: #{encoder_forward.5} parent=5 // pred_fallthru
        _
      %p2530 = scmp.le.s32.totalorder 2, %s19
      // Predicated region
      $region73: #{encoder_forward.5} parent=5 // pred_check
        %p2531 = pneg %p2530
      $region74: #{encoder_forward.5} parent=5 // pred_check_branch
        %2533 = sbr.rel (%p2531) target = $region76
      $region75: #{encoder_forward.5} parent=5 // pred_region
        %s2534 = ssub.s32 %s19, 2
      $region76: #{encoder_forward.5} parent=5 // pred_fallthru
        _
    $region6: #{encoder_forward.5} parent=1 // loop_footer
      %s23 = sadd.s32 1, %s19
    $region7: #{encoder_forward.5} parent=1 // loop_footer_branch
      %18 = sbr.rel target = $region3
    $region8: #{encoder_forward.5} parent=1 // loop_exit
      _
    %2535 = vsyncpa [#allocation4], 1
    %s2536 = scalar_lea.sflag [#allocation4], 1
    %2537 = vsyncpa %s2536, 1
    %2538 = vsyncpa [#allocation7], 1
    %s2539 = scalar_lea.sflag [#allocation7], 1
    %2540 = vsyncpa %s2539, 1
    %2541 = vsyncpa [#allocation10], 1
    %2542 = vsyncpa [#allocation5], 1
    %s2543 = scalar_lea.sflag [#allocation5], 1
    %2544 = vsyncpa %s2543, 1

</llo_original>
